<compile_context>
chip_gen: v6e
topology: v6e:2x2x1
jax: 0.10.0
libtpu: 0.0.40
codegen_flags: <defaults>
</compile_context>

<pallas_src>
import functools
import math

import jax
import jax.numpy as jnp
from jax import lax
from jax.experimental import pallas as pl
from jax.experimental.pallas import tpu as pltpu

# ----------------------------- config (tiny ViT) -----------------------------
BATCH = 2
IN_CHANS = 3
IMG = 16
PATCH = 8
EMBED = 32
HEADS = 4
HEAD_DIM = EMBED // HEADS
DEPTH = 2
MLP_HIDDEN = 4 * EMBED
LN_EPS = 1e-6
DTYPE = jnp.float32


# ----------------------------- fused Pallas kernel ---------------------------
def _vit_encoder_kernel(patches_ref, patch_w_ref, add_ref,
                        ln1g_ref, ln1b_ref, qkvw_ref, qkvb_ref,
                        projw_ref, projb_ref, ln2g_ref, ln2b_ref,
                        fc1w_ref, fc1b_ref, fc2w_ref, fc2b_ref,
                        ng_ref, nb_ref, o_ref,
                        *, depth, heads, head_dim, embed):
    f32 = jnp.float32
    inv_sqrt2 = jnp.float32(1.0 / math.sqrt(2.0))
    scale = jnp.float32(1.0 / math.sqrt(head_dim))

    def layernorm(x, g, b):
        mu = jnp.mean(x, axis=-1, keepdims=True)
        xc = x - mu
        var = jnp.mean(xc * xc, axis=-1, keepdims=True)
        return xc * lax.rsqrt(var + LN_EPS) * g + b

    # --- prologue: patch embedding + cls token + pos embed for this batch ---
    # patches_ref[0] is [T, C*P*P] with a zero row at the cls position, so the
    # single matmul covers every token row; add_ref already holds
    # (cls_token + pos[0]) for row 0 and (patch_b + pos[i]) for the rest.
    x = jnp.dot(patches_ref[0].astype(f32), patch_w_ref[...].astype(f32),
                preferred_element_type=f32) + add_ref[...]          # [T, E]

    # --- transformer blocks (unrolled; weights stacked on a leading DEPTH axis) ---
    for d in range(depth):
        # attention sub-block: x = x + proj(attn(LN1(x)))
        h = layernorm(x, ln1g_ref[d], ln1b_ref[d])
        qkv = jnp.dot(h, qkvw_ref[d], preferred_element_type=f32) + qkvb_ref[d]
        head_outs = []
        for hh in range(heads):
            q = qkv[:, hh * head_dim:(hh + 1) * head_dim]
            k = qkv[:, embed + hh * head_dim:embed + (hh + 1) * head_dim]
            v = qkv[:, 2 * embed + hh * head_dim:2 * embed + (hh + 1) * head_dim]
            # scores: [T, T] = q @ k^T (contract last dims, no explicit transpose)
            s = lax.dot_general(q, k, (((1,), (1,)), ((), ())),
                                preferred_element_type=f32) * scale
            s = s - jnp.max(s, axis=-1, keepdims=True)
            p = jnp.exp(s)
            p = p * pl.reciprocal(jnp.sum(p, axis=-1, keepdims=True), approx=True)
            head_outs.append(jnp.dot(p, v, preferred_element_type=f32))
        a = jnp.concatenate(head_outs, axis=-1)                      # [T, E]
        a = jnp.dot(a, projw_ref[d], preferred_element_type=f32) + projb_ref[d]
        x = x + a

        # MLP sub-block: x = x + fc2(GELU(fc1(LN2(x))))
        h = layernorm(x, ln2g_ref[d], ln2b_ref[d])
        h = jnp.dot(h, fc1w_ref[d], preferred_element_type=f32) + fc1b_ref[d]
        h = 0.5 * h * (1.0 + lax.erf(h * inv_sqrt2))                 # exact GELU
        h = jnp.dot(h, fc2w_ref[d], preferred_element_type=f32) + fc2b_ref[d]
        x = x + h

    # final norm -> exactly what the forward hook on `norm` captures/returns
    x = layernorm(x, ng_ref[...], nb_ref[...])
    o_ref[0] = x.astype(o_ref.dtype)


# ----------------------------- parameter init --------------------------------
def init_params(key):
    n_patches = (IMG // PATCH) ** 2
    n_tokens = n_patches + 1

    def nrm(k, shape, std=0.02):
        return (std * jax.random.normal(k, shape)).astype(DTYPE)

    keys = jax.random.split(key, 4 + DEPTH)
    blk_keys = [jax.random.split(keys[4 + d], 4) for d in range(DEPTH)]

    params = {
        # patch-embed conv [D, C, P, P] stored pre-flattened as [C*P*P, D]
        "patch_w": nrm(keys[0], (IN_CHANS * PATCH * PATCH, EMBED)),
        "patch_b": jnp.zeros((EMBED,), DTYPE),
        "cls_token": nrm(keys[1], (1, 1, EMBED)),
        "pos_embed": nrm(keys[2], (1, n_tokens, EMBED)),
        "norm_g": jnp.ones((1, EMBED), DTYPE),
        "norm_b": jnp.zeros((1, EMBED), DTYPE),
        # per-block weights stacked along a leading DEPTH axis
        "ln1_g": jnp.ones((DEPTH, 1, EMBED), DTYPE),
        "ln1_b": jnp.zeros((DEPTH, 1, EMBED), DTYPE),
        "qkv_w": jnp.stack([nrm(blk_keys[d][0], (EMBED, 3 * EMBED))
                            for d in range(DEPTH)]),
        "qkv_b": jnp.zeros((DEPTH, 1, 3 * EMBED), DTYPE),
        "proj_w": jnp.stack([nrm(blk_keys[d][1], (EMBED, EMBED))
                             for d in range(DEPTH)]),
        "proj_b": jnp.zeros((DEPTH, 1, EMBED), DTYPE),
        "ln2_g": jnp.ones((DEPTH, 1, EMBED), DTYPE),
        "ln2_b": jnp.zeros((DEPTH, 1, EMBED), DTYPE),
        "fc1_w": jnp.stack([nrm(blk_keys[d][2], (EMBED, MLP_HIDDEN))
                            for d in range(DEPTH)]),
        "fc1_b": jnp.zeros((DEPTH, 1, MLP_HIDDEN), DTYPE),
        "fc2_w": jnp.stack([nrm(blk_keys[d][3], (MLP_HIDDEN, EMBED))
                            for d in range(DEPTH)]),
        "fc2_b": jnp.zeros((DEPTH, 1, EMBED), DTYPE),
    }
    return params


# ----------------------------- forward ---------------------------------------
def vit_encoder_forward(x, params):
    """x: [B, C, H, W] (NCHW) -> features [B, T, D] (output of final LayerNorm)."""
    B, C, H, W = x.shape
    P = PATCH
    nH, nW = H // P, W // P
    n_patches = nH * nW
    T = n_patches + 1
    CPP = C * P * P

    # im2col (cheap XLA glue) with a zero "cls placeholder" row per batch so the
    # kernel's single patch-embed matmul covers all T token rows.
    patches = x.reshape(B, C, nH, P, nW, P).transpose(0, 2, 4, 1, 3, 5)
    patches = patches.reshape(B, n_patches, CPP)
    patches_ext = jnp.concatenate(
        [jnp.zeros((B, 1, CPP), x.dtype), patches], axis=1)          # [B, T, CPP]

    # additive prologue term (pure function of params, batch-independent):
    #   row 0: cls_token + pos[0];   row i>=1: patch_b + pos[i]
    pos = params["pos_embed"].reshape(T, EMBED)
    cls = params["cls_token"].reshape(1, EMBED)
    pb = jnp.broadcast_to(params["patch_b"][None, :], (n_patches, EMBED))
    add_term = pos + jnp.concatenate([cls, pb], axis=0)              # [T, EMBED]

    kernel = functools.partial(_vit_encoder_kernel, depth=DEPTH, heads=HEADS,
                               head_dim=HEAD_DIM, embed=EMBED)

    def full(shape):
        return pl.BlockSpec(shape, lambda b, _s=shape: (0,) * len(_s))

    out = pl.pallas_call(
        kernel,
        out_shape=jax.ShapeDtypeStruct((B, T, EMBED), x.dtype),
        grid=(B,),
        in_specs=[
            pl.BlockSpec((1, T, CPP), lambda b: (b, 0, 0)),          # patches
            full((CPP, EMBED)),                                      # patch_w
            full((T, EMBED)),                                        # add_term
            full((DEPTH, 1, EMBED)), full((DEPTH, 1, EMBED)),        # ln1 g/b
            full((DEPTH, EMBED, 3 * EMBED)), full((DEPTH, 1, 3 * EMBED)),  # qkv
            full((DEPTH, EMBED, EMBED)), full((DEPTH, 1, EMBED)),    # proj
            full((DEPTH, 1, EMBED)), full((DEPTH, 1, EMBED)),        # ln2 g/b
            full((DEPTH, EMBED, MLP_HIDDEN)), full((DEPTH, 1, MLP_HIDDEN)),  # fc1
            full((DEPTH, MLP_HIDDEN, EMBED)), full((DEPTH, 1, EMBED)),       # fc2
            full((1, EMBED)), full((1, EMBED)),                      # final norm g/b
        ],
        out_specs=pl.BlockSpec((1, T, EMBED), lambda b: (b, 0, 0)),
        compiler_params=pltpu.CompilerParams(
            dimension_semantics=("parallel",)),                      # 2 TCs on v7x
    )(patches_ext, params["patch_w"], add_term,
      params["ln1_g"], params["ln1_b"],
      params["qkv_w"], params["qkv_b"],
      params["proj_w"], params["proj_b"],
      params["ln2_g"], params["ln2_b"],
      params["fc1_w"], params["fc1_b"],
      params["fc2_w"], params["fc2_b"],
      params["norm_g"], params["norm_b"])
    return out


# ----------------------------- main -------------------------------------------
if __name__ == "__main__":
    key = jax.random.PRNGKey(0)
    k_params, k_x = jax.random.split(key)
    params = init_params(k_params)
    x = jax.random.normal(k_x, (BATCH, IN_CHANS, IMG, IMG), dtype=DTYPE)

    feats = jax.jit(vit_encoder_forward)(x, params)
    feats = jax.block_until_ready(feats)

    n_tokens = (IMG // PATCH) ** 2 + 1
    assert feats.shape == (BATCH, n_tokens, EMBED), feats.shape
    assert bool(jnp.all(jnp.isfinite(feats)))
    print("KERNEL_OK")
</pallas_src>

<mosaic_0001>
module attributes {stable_mosaic.version = 11 : i64} {
  func.func @_vit_encoder_kernel(%arg0: i32, %arg1: memref<1x5x192xf32, #tpu.memory_space<vmem>>, %arg2: memref<192x32xf32, #tpu.memory_space<vmem>>, %arg3: memref<5x32xf32, #tpu.memory_space<vmem>>, %arg4: memref<2x1x32xf32, #tpu.memory_space<vmem>>, %arg5: memref<2x1x32xf32, #tpu.memory_space<vmem>>, %arg6: memref<2x32x96xf32, #tpu.memory_space<vmem>>, %arg7: memref<2x1x96xf32, #tpu.memory_space<vmem>>, %arg8: memref<2x32x32xf32, #tpu.memory_space<vmem>>, %arg9: memref<2x1x32xf32, #tpu.memory_space<vmem>>, %arg10: memref<2x1x32xf32, #tpu.memory_space<vmem>>, %arg11: memref<2x1x32xf32, #tpu.memory_space<vmem>>, %arg12: memref<2x32x128xf32, #tpu.memory_space<vmem>>, %arg13: memref<2x1x128xf32, #tpu.memory_space<vmem>>, %arg14: memref<2x128x32xf32, #tpu.memory_space<vmem>>, %arg15: memref<2x1x32xf32, #tpu.memory_space<vmem>>, %arg16: memref<1x32xf32, #tpu.memory_space<vmem>>, %arg17: memref<1x32xf32, #tpu.memory_space<vmem>>, %arg18: memref<1x5x32xf32, #tpu.memory_space<vmem>>) attributes {dimension_semantics = [#tpu.dimension_semantics<parallel>], iteration_bounds = array<i64: 2>, scalar_prefetch = 0 : i64, scratch_operands = 0 : i64, tpu.core_type = #tpu.core_type<tc>, window_params = [{transform_indices = @transform_0, window_bounds = array<i64: 1, 5, 192>}, {pipeline_mode = #tpu.pipeline_mode<synchronous>, transform_indices = @transform_1, window_bounds = array<i64: 192, 32>}, {pipeline_mode = #tpu.pipeline_mode<synchronous>, transform_indices = @transform_2, window_bounds = array<i64: 5, 32>}, {pipeline_mode = #tpu.pipeline_mode<synchronous>, transform_indices = @transform_3, window_bounds = array<i64: 2, 1, 32>}, {pipeline_mode = #tpu.pipeline_mode<synchronous>, transform_indices = @transform_4, window_bounds = array<i64: 2, 1, 32>}, {pipeline_mode = #tpu.pipeline_mode<synchronous>, transform_indices = @transform_5, window_bounds = array<i64: 2, 32, 96>}, {pipeline_mode = #tpu.pipeline_mode<synchronous>, transform_indices = @transform_6, window_bounds = array<i64: 2, 1, 96>}, {pipeline_mode = #tpu.pipeline_mode<synchronous>, transform_indices = @transform_7, window_bounds = array<i64: 2, 32, 32>}, {pipeline_mode = #tpu.pipeline_mode<synchronous>, transform_indices = @transform_8, window_bounds = array<i64: 2, 1, 32>}, {pipeline_mode = #tpu.pipeline_mode<synchronous>, transform_indices = @transform_9, window_bounds = array<i64: 2, 1, 32>}, {pipeline_mode = #tpu.pipeline_mode<synchronous>, transform_indices = @transform_10, window_bounds = array<i64: 2, 1, 32>}, {pipeline_mode = #tpu.pipeline_mode<synchronous>, transform_indices = @transform_11, window_bounds = array<i64: 2, 32, 128>}, {pipeline_mode = #tpu.pipeline_mode<synchronous>, transform_indices = @transform_12, window_bounds = array<i64: 2, 1, 128>}, {pipeline_mode = #tpu.pipeline_mode<synchronous>, transform_indices = @transform_13, window_bounds = array<i64: 2, 128, 32>}, {pipeline_mode = #tpu.pipeline_mode<synchronous>, transform_indices = @transform_14, window_bounds = array<i64: 2, 1, 32>}, {pipeline_mode = #tpu.pipeline_mode<synchronous>, transform_indices = @transform_15, window_bounds = array<i64: 1, 32>}, {pipeline_mode = #tpu.pipeline_mode<synchronous>, transform_indices = @transform_16, window_bounds = array<i64: 1, 32>}, {transform_indices = @transform_17, window_bounds = array<i64: 1, 5, 32>}]} {
    %c0 = arith.constant 0 : index
    %c0_0 = arith.constant 0 : index
    %c0_1 = arith.constant 0 : index
    %0 = vector.load %arg1[%c0, %c0_0, %c0_1] : memref<1x5x192xf32, #tpu.memory_space<vmem>>, vector<1x5x192xf32>
    %1 = vector.shape_cast %0 : vector<1x5x192xf32> to vector<5x192xf32>
    %c0_2 = arith.constant 0 : index
    %c0_3 = arith.constant 0 : index
    %2 = vector.load %arg2[%c0_2, %c0_3] : memref<192x32xf32, #tpu.memory_space<vmem>>, vector<192x32xf32>
    %cst = arith.constant dense<0.000000e+00> : vector<5x32xf32>
    %3 = tpu.matmul %1, %2, %cst {dimension_numbers = #tpu.dot_dimension_numbers<[1], [0], [0], [1], [0, 0, 1, 1], [], []>} : vector<5x192xf32>, vector<192x32xf32>, vector<5x32xf32> -> vector<5x32xf32>
    %c0_4 = arith.constant 0 : index
    %c0_5 = arith.constant 0 : index
    %4 = vector.load %arg3[%c0_4, %c0_5] : memref<5x32xf32, #tpu.memory_space<vmem>>, vector<5x32xf32>
    %5 = arith.addf %3, %4 : vector<5x32xf32>
    %c0_6 = arith.constant 0 : index
    %c0_7 = arith.constant 0 : index
    %c0_8 = arith.constant 0 : index
    %6 = vector.load %arg4[%c0_6, %c0_7, %c0_8] : memref<2x1x32xf32, #tpu.memory_space<vmem>>, vector<1x1x32xf32>
    %7 = vector.shape_cast %6 : vector<1x1x32xf32> to vector<1x32xf32>
    %c0_9 = arith.constant 0 : index
    %c0_10 = arith.constant 0 : index
    %c0_11 = arith.constant 0 : index
    %8 = vector.load %arg5[%c0_9, %c0_10, %c0_11] : memref<2x1x32xf32, #tpu.memory_space<vmem>>, vector<1x1x32xf32>
    %9 = vector.shape_cast %8 : vector<1x1x32xf32> to vector<1x32xf32>
    %cst_12 = arith.constant dense<0.000000e+00> : vector<5xf32>
    %10 = vector.multi_reduction <add>, %5, %cst_12 [1] : vector<5x32xf32> to vector<5xf32>
    %11 = vector.shape_cast %10 : vector<5xf32> to vector<5x1xf32>
    %cst_13 = arith.constant 3.200000e+01 : f32
    %12 = vector.broadcast %cst_13 : f32 to vector<5x1xf32>
    %13 = arith.divf %11, %12 : vector<5x1xf32>
    %14 = vector.broadcast %13 : vector<5x1xf32> to vector<5x32xf32>
    %15 = arith.subf %5, %14 : vector<5x32xf32>
    %16 = arith.mulf %15, %15 : vector<5x32xf32>
    %cst_14 = arith.constant dense<0.000000e+00> : vector<5xf32>
    %17 = vector.multi_reduction <add>, %16, %cst_14 [1] : vector<5x32xf32> to vector<5xf32>
    %18 = vector.shape_cast %17 : vector<5xf32> to vector<5x1xf32>
    %cst_15 = arith.constant 3.200000e+01 : f32
    %19 = vector.broadcast %cst_15 : f32 to vector<5x1xf32>
    %20 = arith.divf %18, %19 : vector<5x1xf32>
    %cst_16 = arith.constant 9.99999997E-7 : f32
    %21 = vector.broadcast %cst_16 : f32 to vector<5x1xf32>
    %22 = arith.addf %20, %21 : vector<5x1xf32>
    %23 = math.rsqrt %22 : vector<5x1xf32>
    %24 = vector.broadcast %23 : vector<5x1xf32> to vector<5x32xf32>
    %25 = arith.mulf %15, %24 : vector<5x32xf32>
    %26 = vector.broadcast %7 : vector<1x32xf32> to vector<5x32xf32>
    %27 = arith.mulf %25, %26 : vector<5x32xf32>
    %28 = vector.broadcast %9 : vector<1x32xf32> to vector<5x32xf32>
    %29 = arith.addf %27, %28 : vector<5x32xf32>
    %c0_17 = arith.constant 0 : index
    %c0_18 = arith.constant 0 : index
    %c0_19 = arith.constant 0 : index
    %30 = vector.load %arg6[%c0_17, %c0_18, %c0_19] : memref<2x32x96xf32, #tpu.memory_space<vmem>>, vector<1x32x96xf32>
    %31 = vector.shape_cast %30 : vector<1x32x96xf32> to vector<32x96xf32>
    %cst_20 = arith.constant dense<0.000000e+00> : vector<5x96xf32>
    %32 = tpu.matmul %29, %31, %cst_20 {dimension_numbers = #tpu.dot_dimension_numbers<[1], [0], [0], [1], [0, 0, 1, 1], [], []>} : vector<5x32xf32>, vector<32x96xf32>, vector<5x96xf32> -> vector<5x96xf32>
    %c0_21 = arith.constant 0 : index
    %c0_22 = arith.constant 0 : index
    %c0_23 = arith.constant 0 : index
    %33 = vector.load %arg7[%c0_21, %c0_22, %c0_23] : memref<2x1x96xf32, #tpu.memory_space<vmem>>, vector<1x1x96xf32>
    %34 = vector.shape_cast %33 : vector<1x1x96xf32> to vector<1x96xf32>
    %35 = vector.broadcast %34 : vector<1x96xf32> to vector<5x96xf32>
    %36 = arith.addf %32, %35 : vector<5x96xf32>
    %37 = vector.extract_strided_slice %36 {offsets = [0, 0], sizes = [5, 8], strides = [1, 1]} : vector<5x96xf32> to vector<5x8xf32>
    %38 = vector.extract_strided_slice %36 {offsets = [0, 32], sizes = [5, 8], strides = [1, 1]} : vector<5x96xf32> to vector<5x8xf32>
    %39 = vector.extract_strided_slice %36 {offsets = [0, 64], sizes = [5, 8], strides = [1, 1]} : vector<5x96xf32> to vector<5x8xf32>
    %cst_24 = arith.constant dense<0.000000e+00> : vector<5x5xf32>
    %40 = tpu.matmul %37, %38, %cst_24 {dimension_numbers = #tpu.dot_dimension_numbers<[1], [1], [0], [0], [0, 0, 1, 0], [], []>} : vector<5x8xf32>, vector<5x8xf32>, vector<5x5xf32> -> vector<5x5xf32>
    %cst_25 = arith.constant 0.353553385 : f32
    %41 = vector.broadcast %cst_25 : f32 to vector<5x5xf32>
    %42 = arith.mulf %40, %41 : vector<5x5xf32>
    %cst_26 = arith.constant dense<0xFF800000> : vector<5xf32>
    %43 = vector.multi_reduction <maximumf>, %42, %cst_26 [1] : vector<5x5xf32> to vector<5xf32>
    %44 = vector.shape_cast %43 : vector<5xf32> to vector<5x1xf32>
    %45 = vector.broadcast %44 : vector<5x1xf32> to vector<5x5xf32>
    %46 = arith.subf %42, %45 : vector<5x5xf32>
    %47 = math.exp %46 : vector<5x5xf32>
    %cst_27 = arith.constant dense<0.000000e+00> : vector<5xf32>
    %48 = vector.multi_reduction <add>, %47, %cst_27 [1] : vector<5x5xf32> to vector<5xf32>
    %49 = vector.shape_cast %48 : vector<5xf32> to vector<5x1xf32>
    %50 = tpu.reciprocal %49 {approx = true} : vector<5x1xf32> -> vector<5x1xf32>
    %51 = vector.broadcast %50 : vector<5x1xf32> to vector<5x5xf32>
    %52 = arith.mulf %47, %51 : vector<5x5xf32>
    %cst_28 = arith.constant dense<0.000000e+00> : vector<5x8xf32>
    %53 = tpu.matmul %52, %39, %cst_28 {dimension_numbers = #tpu.dot_dimension_numbers<[1], [0], [0], [1], [0, 0, 1, 1], [], []>} : vector<5x5xf32>, vector<5x8xf32>, vector<5x8xf32> -> vector<5x8xf32>
    %54 = vector.extract_strided_slice %36 {offsets = [0, 8], sizes = [5, 8], strides = [1, 1]} : vector<5x96xf32> to vector<5x8xf32>
    %55 = vector.extract_strided_slice %36 {offsets = [0, 40], sizes = [5, 8], strides = [1, 1]} : vector<5x96xf32> to vector<5x8xf32>
    %56 = vector.extract_strided_slice %36 {offsets = [0, 72], sizes = [5, 8], strides = [1, 1]} : vector<5x96xf32> to vector<5x8xf32>
    %cst_29 = arith.constant dense<0.000000e+00> : vector<5x5xf32>
    %57 = tpu.matmul %54, %55, %cst_29 {dimension_numbers = #tpu.dot_dimension_numbers<[1], [1], [0], [0], [0, 0, 1, 0], [], []>} : vector<5x8xf32>, vector<5x8xf32>, vector<5x5xf32> -> vector<5x5xf32>
    %cst_30 = arith.constant 0.353553385 : f32
    %58 = vector.broadcast %cst_30 : f32 to vector<5x5xf32>
    %59 = arith.mulf %57, %58 : vector<5x5xf32>
    %cst_31 = arith.constant dense<0xFF800000> : vector<5xf32>
    %60 = vector.multi_reduction <maximumf>, %59, %cst_31 [1] : vector<5x5xf32> to vector<5xf32>
    %61 = vector.shape_cast %60 : vector<5xf32> to vector<5x1xf32>
    %62 = vector.broadcast %61 : vector<5x1xf32> to vector<5x5xf32>
    %63 = arith.subf %59, %62 : vector<5x5xf32>
    %64 = math.exp %63 : vector<5x5xf32>
    %cst_32 = arith.constant dense<0.000000e+00> : vector<5xf32>
    %65 = vector.multi_reduction <add>, %64, %cst_32 [1] : vector<5x5xf32> to vector<5xf32>
    %66 = vector.shape_cast %65 : vector<5xf32> to vector<5x1xf32>
    %67 = tpu.reciprocal %66 {approx = true} : vector<5x1xf32> -> vector<5x1xf32>
    %68 = vector.broadcast %67 : vector<5x1xf32> to vector<5x5xf32>
    %69 = arith.mulf %64, %68 : vector<5x5xf32>
    %cst_33 = arith.constant dense<0.000000e+00> : vector<5x8xf32>
    %70 = tpu.matmul %69, %56, %cst_33 {dimension_numbers = #tpu.dot_dimension_numbers<[1], [0], [0], [1], [0, 0, 1, 1], [], []>} : vector<5x5xf32>, vector<5x8xf32>, vector<5x8xf32> -> vector<5x8xf32>
    %71 = vector.extract_strided_slice %36 {offsets = [0, 16], sizes = [5, 8], strides = [1, 1]} : vector<5x96xf32> to vector<5x8xf32>
    %72 = vector.extract_strided_slice %36 {offsets = [0, 48], sizes = [5, 8], strides = [1, 1]} : vector<5x96xf32> to vector<5x8xf32>
    %73 = vector.extract_strided_slice %36 {offsets = [0, 80], sizes = [5, 8], strides = [1, 1]} : vector<5x96xf32> to vector<5x8xf32>
    %cst_34 = arith.constant dense<0.000000e+00> : vector<5x5xf32>
    %74 = tpu.matmul %71, %72, %cst_34 {dimension_numbers = #tpu.dot_dimension_numbers<[1], [1], [0], [0], [0, 0, 1, 0], [], []>} : vector<5x8xf32>, vector<5x8xf32>, vector<5x5xf32> -> vector<5x5xf32>
    %cst_35 = arith.constant 0.353553385 : f32
    %75 = vector.broadcast %cst_35 : f32 to vector<5x5xf32>
    %76 = arith.mulf %74, %75 : vector<5x5xf32>
    %cst_36 = arith.constant dense<0xFF800000> : vector<5xf32>
    %77 = vector.multi_reduction <maximumf>, %76, %cst_36 [1] : vector<5x5xf32> to vector<5xf32>
    %78 = vector.shape_cast %77 : vector<5xf32> to vector<5x1xf32>
    %79 = vector.broadcast %78 : vector<5x1xf32> to vector<5x5xf32>
    %80 = arith.subf %76, %79 : vector<5x5xf32>
    %81 = math.exp %80 : vector<5x5xf32>
    %cst_37 = arith.constant dense<0.000000e+00> : vector<5xf32>
    %82 = vector.multi_reduction <add>, %81, %cst_37 [1] : vector<5x5xf32> to vector<5xf32>
    %83 = vector.shape_cast %82 : vector<5xf32> to vector<5x1xf32>
    %84 = tpu.reciprocal %83 {approx = true} : vector<5x1xf32> -> vector<5x1xf32>
    %85 = vector.broadcast %84 : vector<5x1xf32> to vector<5x5xf32>
    %86 = arith.mulf %81, %85 : vector<5x5xf32>
    %cst_38 = arith.constant dense<0.000000e+00> : vector<5x8xf32>
    %87 = tpu.matmul %86, %73, %cst_38 {dimension_numbers = #tpu.dot_dimension_numbers<[1], [0], [0], [1], [0, 0, 1, 1], [], []>} : vector<5x5xf32>, vector<5x8xf32>, vector<5x8xf32> -> vector<5x8xf32>
    %88 = vector.extract_strided_slice %36 {offsets = [0, 24], sizes = [5, 8], strides = [1, 1]} : vector<5x96xf32> to vector<5x8xf32>
    %89 = vector.extract_strided_slice %36 {offsets = [0, 56], sizes = [5, 8], strides = [1, 1]} : vector<5x96xf32> to vector<5x8xf32>
    %90 = vector.extract_strided_slice %36 {offsets = [0, 88], sizes = [5, 8], strides = [1, 1]} : vector<5x96xf32> to vector<5x8xf32>
    %cst_39 = arith.constant dense<0.000000e+00> : vector<5x5xf32>
    %91 = tpu.matmul %88, %89, %cst_39 {dimension_numbers = #tpu.dot_dimension_numbers<[1], [1], [0], [0], [0, 0, 1, 0], [], []>} : vector<5x8xf32>, vector<5x8xf32>, vector<5x5xf32> -> vector<5x5xf32>
    %cst_40 = arith.constant 0.353553385 : f32
    %92 = vector.broadcast %cst_40 : f32 to vector<5x5xf32>
    %93 = arith.mulf %91, %92 : vector<5x5xf32>
    %cst_41 = arith.constant dense<0xFF800000> : vector<5xf32>
    %94 = vector.multi_reduction <maximumf>, %93, %cst_41 [1] : vector<5x5xf32> to vector<5xf32>
    %95 = vector.shape_cast %94 : vector<5xf32> to vector<5x1xf32>
    %96 = vector.broadcast %95 : vector<5x1xf32> to vector<5x5xf32>
    %97 = arith.subf %93, %96 : vector<5x5xf32>
    %98 = math.exp %97 : vector<5x5xf32>
    %cst_42 = arith.constant dense<0.000000e+00> : vector<5xf32>
    %99 = vector.multi_reduction <add>, %98, %cst_42 [1] : vector<5x5xf32> to vector<5xf32>
    %100 = vector.shape_cast %99 : vector<5xf32> to vector<5x1xf32>
    %101 = tpu.reciprocal %100 {approx = true} : vector<5x1xf32> -> vector<5x1xf32>
    %102 = vector.broadcast %101 : vector<5x1xf32> to vector<5x5xf32>
    %103 = arith.mulf %98, %102 : vector<5x5xf32>
    %cst_43 = arith.constant dense<0.000000e+00> : vector<5x8xf32>
    %104 = tpu.matmul %103, %90, %cst_43 {dimension_numbers = #tpu.dot_dimension_numbers<[1], [0], [0], [1], [0, 0, 1, 1], [], []>} : vector<5x5xf32>, vector<5x8xf32>, vector<5x8xf32> -> vector<5x8xf32>
    %105 = tpu.concatenate %53, %70, %87, %104 in 1 : vector<5x8xf32>, vector<5x8xf32>, vector<5x8xf32>, vector<5x8xf32> -> vector<5x32xf32>
    %c0_44 = arith.constant 0 : index
    %c0_45 = arith.constant 0 : index
    %c0_46 = arith.constant 0 : index
    %106 = vector.load %arg8[%c0_44, %c0_45, %c0_46] : memref<2x32x32xf32, #tpu.memory_space<vmem>>, vector<1x32x32xf32>
    %107 = vector.shape_cast %106 : vector<1x32x32xf32> to vector<32x32xf32>
    %cst_47 = arith.constant dense<0.000000e+00> : vector<5x32xf32>
    %108 = tpu.matmul %105, %107, %cst_47 {dimension_numbers = #tpu.dot_dimension_numbers<[1], [0], [0], [1], [0, 0, 1, 1], [], []>} : vector<5x32xf32>, vector<32x32xf32>, vector<5x32xf32> -> vector<5x32xf32>
    %c0_48 = arith.constant 0 : index
    %c0_49 = arith.constant 0 : index
    %c0_50 = arith.constant 0 : index
    %109 = vector.load %arg9[%c0_48, %c0_49, %c0_50] : memref<2x1x32xf32, #tpu.memory_space<vmem>>, vector<1x1x32xf32>
    %110 = vector.shape_cast %109 : vector<1x1x32xf32> to vector<1x32xf32>
    %111 = vector.broadcast %110 : vector<1x32xf32> to vector<5x32xf32>
    %112 = arith.addf %108, %111 : vector<5x32xf32>
    %113 = arith.addf %5, %112 : vector<5x32xf32>
    %c0_51 = arith.constant 0 : index
    %c0_52 = arith.constant 0 : index
    %c0_53 = arith.constant 0 : index
    %114 = vector.load %arg10[%c0_51, %c0_52, %c0_53] : memref<2x1x32xf32, #tpu.memory_space<vmem>>, vector<1x1x32xf32>
    %115 = vector.shape_cast %114 : vector<1x1x32xf32> to vector<1x32xf32>
    %c0_54 = arith.constant 0 : index
    %c0_55 = arith.constant 0 : index
    %c0_56 = arith.constant 0 : index
    %116 = vector.load %arg11[%c0_54, %c0_55, %c0_56] : memref<2x1x32xf32, #tpu.memory_space<vmem>>, vector<1x1x32xf32>
    %117 = vector.shape_cast %116 : vector<1x1x32xf32> to vector<1x32xf32>
    %cst_57 = arith.constant dense<0.000000e+00> : vector<5xf32>
    %118 = vector.multi_reduction <add>, %113, %cst_57 [1] : vector<5x32xf32> to vector<5xf32>
    %119 = vector.shape_cast %118 : vector<5xf32> to vector<5x1xf32>
    %cst_58 = arith.constant 3.200000e+01 : f32
    %120 = vector.broadcast %cst_58 : f32 to vector<5x1xf32>
    %121 = arith.divf %119, %120 : vector<5x1xf32>
    %122 = vector.broadcast %121 : vector<5x1xf32> to vector<5x32xf32>
    %123 = arith.subf %113, %122 : vector<5x32xf32>
    %124 = arith.mulf %123, %123 : vector<5x32xf32>
    %cst_59 = arith.constant dense<0.000000e+00> : vector<5xf32>
    %125 = vector.multi_reduction <add>, %124, %cst_59 [1] : vector<5x32xf32> to vector<5xf32>
    %126 = vector.shape_cast %125 : vector<5xf32> to vector<5x1xf32>
    %cst_60 = arith.constant 3.200000e+01 : f32
    %127 = vector.broadcast %cst_60 : f32 to vector<5x1xf32>
    %128 = arith.divf %126, %127 : vector<5x1xf32>
    %cst_61 = arith.constant 9.99999997E-7 : f32
    %129 = vector.broadcast %cst_61 : f32 to vector<5x1xf32>
    %130 = arith.addf %128, %129 : vector<5x1xf32>
    %131 = math.rsqrt %130 : vector<5x1xf32>
    %132 = vector.broadcast %131 : vector<5x1xf32> to vector<5x32xf32>
    %133 = arith.mulf %123, %132 : vector<5x32xf32>
    %134 = vector.broadcast %115 : vector<1x32xf32> to vector<5x32xf32>
    %135 = arith.mulf %133, %134 : vector<5x32xf32>
    %136 = vector.broadcast %117 : vector<1x32xf32> to vector<5x32xf32>
    %137 = arith.addf %135, %136 : vector<5x32xf32>
    %c0_62 = arith.constant 0 : index
    %c0_63 = arith.constant 0 : index
    %c0_64 = arith.constant 0 : index
    %138 = vector.load %arg12[%c0_62, %c0_63, %c0_64] : memref<2x32x128xf32, #tpu.memory_space<vmem>>, vector<1x32x128xf32>
    %139 = vector.shape_cast %138 : vector<1x32x128xf32> to vector<32x128xf32>
    %cst_65 = arith.constant dense<0.000000e+00> : vector<5x128xf32>
    %140 = tpu.matmul %137, %139, %cst_65 {dimension_numbers = #tpu.dot_dimension_numbers<[1], [0], [0], [1], [0, 0, 1, 1], [], []>} : vector<5x32xf32>, vector<32x128xf32>, vector<5x128xf32> -> vector<5x128xf32>
    %c0_66 = arith.constant 0 : index
    %c0_67 = arith.constant 0 : index
    %c0_68 = arith.constant 0 : index
    %141 = vector.load %arg13[%c0_66, %c0_67, %c0_68] : memref<2x1x128xf32, #tpu.memory_space<vmem>>, vector<1x1x128xf32>
    %142 = vector.shape_cast %141 : vector<1x1x128xf32> to vector<1x128xf32>
    %143 = vector.broadcast %142 : vector<1x128xf32> to vector<5x128xf32>
    %144 = arith.addf %140, %143 : vector<5x128xf32>
    %cst_69 = arith.constant 5.000000e-01 : f32
    %145 = vector.broadcast %cst_69 : f32 to vector<5x128xf32>
    %146 = arith.mulf %145, %144 : vector<5x128xf32>
    %cst_70 = arith.constant 0.707106769 : f32
    %147 = vector.broadcast %cst_70 : f32 to vector<5x128xf32>
    %148 = arith.mulf %144, %147 : vector<5x128xf32>
    %149 = math.erf %148 : vector<5x128xf32>
    %cst_71 = arith.constant 1.000000e+00 : f32
    %150 = vector.broadcast %cst_71 : f32 to vector<5x128xf32>
    %151 = arith.addf %150, %149 : vector<5x128xf32>
    %152 = arith.mulf %146, %151 : vector<5x128xf32>
    %c0_72 = arith.constant 0 : index
    %c0_73 = arith.constant 0 : index
    %c0_74 = arith.constant 0 : index
    %153 = vector.load %arg14[%c0_72, %c0_73, %c0_74] : memref<2x128x32xf32, #tpu.memory_space<vmem>>, vector<1x128x32xf32>
    %154 = vector.shape_cast %153 : vector<1x128x32xf32> to vector<128x32xf32>
    %cst_75 = arith.constant dense<0.000000e+00> : vector<5x32xf32>
    %155 = tpu.matmul %152, %154, %cst_75 {dimension_numbers = #tpu.dot_dimension_numbers<[1], [0], [0], [1], [0, 0, 1, 1], [], []>} : vector<5x128xf32>, vector<128x32xf32>, vector<5x32xf32> -> vector<5x32xf32>
    %c0_76 = arith.constant 0 : index
    %c0_77 = arith.constant 0 : index
    %c0_78 = arith.constant 0 : index
    %156 = vector.load %arg15[%c0_76, %c0_77, %c0_78] : memref<2x1x32xf32, #tpu.memory_space<vmem>>, vector<1x1x32xf32>
    %157 = vector.shape_cast %156 : vector<1x1x32xf32> to vector<1x32xf32>
    %158 = vector.broadcast %157 : vector<1x32xf32> to vector<5x32xf32>
    %159 = arith.addf %155, %158 : vector<5x32xf32>
    %160 = arith.addf %113, %159 : vector<5x32xf32>
    %c1 = arith.constant 1 : index
    %c0_79 = arith.constant 0 : index
    %c0_80 = arith.constant 0 : index
    %161 = vector.load %arg4[%c1, %c0_79, %c0_80] : memref<2x1x32xf32, #tpu.memory_space<vmem>>, vector<1x1x32xf32>
    %162 = vector.shape_cast %161 : vector<1x1x32xf32> to vector<1x32xf32>
    %c1_81 = arith.constant 1 : index
    %c0_82 = arith.constant 0 : index
    %c0_83 = arith.constant 0 : index
    %163 = vector.load %arg5[%c1_81, %c0_82, %c0_83] : memref<2x1x32xf32, #tpu.memory_space<vmem>>, vector<1x1x32xf32>
    %164 = vector.shape_cast %163 : vector<1x1x32xf32> to vector<1x32xf32>
    %cst_84 = arith.constant dense<0.000000e+00> : vector<5xf32>
    %165 = vector.multi_reduction <add>, %160, %cst_84 [1] : vector<5x32xf32> to vector<5xf32>
    %166 = vector.shape_cast %165 : vector<5xf32> to vector<5x1xf32>
    %cst_85 = arith.constant 3.200000e+01 : f32
    %167 = vector.broadcast %cst_85 : f32 to vector<5x1xf32>
    %168 = arith.divf %166, %167 : vector<5x1xf32>
    %169 = vector.broadcast %168 : vector<5x1xf32> to vector<5x32xf32>
    %170 = arith.subf %160, %169 : vector<5x32xf32>
    %171 = arith.mulf %170, %170 : vector<5x32xf32>
    %cst_86 = arith.constant dense<0.000000e+00> : vector<5xf32>
    %172 = vector.multi_reduction <add>, %171, %cst_86 [1] : vector<5x32xf32> to vector<5xf32>
    %173 = vector.shape_cast %172 : vector<5xf32> to vector<5x1xf32>
    %cst_87 = arith.constant 3.200000e+01 : f32
    %174 = vector.broadcast %cst_87 : f32 to vector<5x1xf32>
    %175 = arith.divf %173, %174 : vector<5x1xf32>
    %cst_88 = arith.constant 9.99999997E-7 : f32
    %176 = vector.broadcast %cst_88 : f32 to vector<5x1xf32>
    %177 = arith.addf %175, %176 : vector<5x1xf32>
    %178 = math.rsqrt %177 : vector<5x1xf32>
    %179 = vector.broadcast %178 : vector<5x1xf32> to vector<5x32xf32>
    %180 = arith.mulf %170, %179 : vector<5x32xf32>
    %181 = vector.broadcast %162 : vector<1x32xf32> to vector<5x32xf32>
    %182 = arith.mulf %180, %181 : vector<5x32xf32>
    %183 = vector.broadcast %164 : vector<1x32xf32> to vector<5x32xf32>
    %184 = arith.addf %182, %183 : vector<5x32xf32>
    %c1_89 = arith.constant 1 : index
    %c0_90 = arith.constant 0 : index
    %c0_91 = arith.constant 0 : index
    %185 = vector.load %arg6[%c1_89, %c0_90, %c0_91] : memref<2x32x96xf32, #tpu.memory_space<vmem>>, vector<1x32x96xf32>
    %186 = vector.shape_cast %185 : vector<1x32x96xf32> to vector<32x96xf32>
    %cst_92 = arith.constant dense<0.000000e+00> : vector<5x96xf32>
    %187 = tpu.matmul %184, %186, %cst_92 {dimension_numbers = #tpu.dot_dimension_numbers<[1], [0], [0], [1], [0, 0, 1, 1], [], []>} : vector<5x32xf32>, vector<32x96xf32>, vector<5x96xf32> -> vector<5x96xf32>
    %c1_93 = arith.constant 1 : index
    %c0_94 = arith.constant 0 : index
    %c0_95 = arith.constant 0 : index
    %188 = vector.load %arg7[%c1_93, %c0_94, %c0_95] : memref<2x1x96xf32, #tpu.memory_space<vmem>>, vector<1x1x96xf32>
    %189 = vector.shape_cast %188 : vector<1x1x96xf32> to vector<1x96xf32>
    %190 = vector.broadcast %189 : vector<1x96xf32> to vector<5x96xf32>
    %191 = arith.addf %187, %190 : vector<5x96xf32>
    %192 = vector.extract_strided_slice %191 {offsets = [0, 0], sizes = [5, 8], strides = [1, 1]} : vector<5x96xf32> to vector<5x8xf32>
    %193 = vector.extract_strided_slice %191 {offsets = [0, 32], sizes = [5, 8], strides = [1, 1]} : vector<5x96xf32> to vector<5x8xf32>
    %194 = vector.extract_strided_slice %191 {offsets = [0, 64], sizes = [5, 8], strides = [1, 1]} : vector<5x96xf32> to vector<5x8xf32>
    %cst_96 = arith.constant dense<0.000000e+00> : vector<5x5xf32>
    %195 = tpu.matmul %192, %193, %cst_96 {dimension_numbers = #tpu.dot_dimension_numbers<[1], [1], [0], [0], [0, 0, 1, 0], [], []>} : vector<5x8xf32>, vector<5x8xf32>, vector<5x5xf32> -> vector<5x5xf32>
    %cst_97 = arith.constant 0.353553385 : f32
    %196 = vector.broadcast %cst_97 : f32 to vector<5x5xf32>
    %197 = arith.mulf %195, %196 : vector<5x5xf32>
    %cst_98 = arith.constant dense<0xFF800000> : vector<5xf32>
    %198 = vector.multi_reduction <maximumf>, %197, %cst_98 [1] : vector<5x5xf32> to vector<5xf32>
    %199 = vector.shape_cast %198 : vector<5xf32> to vector<5x1xf32>
    %200 = vector.broadcast %199 : vector<5x1xf32> to vector<5x5xf32>
    %201 = arith.subf %197, %200 : vector<5x5xf32>
    %202 = math.exp %201 : vector<5x5xf32>
    %cst_99 = arith.constant dense<0.000000e+00> : vector<5xf32>
    %203 = vector.multi_reduction <add>, %202, %cst_99 [1] : vector<5x5xf32> to vector<5xf32>
    %204 = vector.shape_cast %203 : vector<5xf32> to vector<5x1xf32>
    %205 = tpu.reciprocal %204 {approx = true} : vector<5x1xf32> -> vector<5x1xf32>
    %206 = vector.broadcast %205 : vector<5x1xf32> to vector<5x5xf32>
    %207 = arith.mulf %202, %206 : vector<5x5xf32>
    %cst_100 = arith.constant dense<0.000000e+00> : vector<5x8xf32>
    %208 = tpu.matmul %207, %194, %cst_100 {dimension_numbers = #tpu.dot_dimension_numbers<[1], [0], [0], [1], [0, 0, 1, 1], [], []>} : vector<5x5xf32>, vector<5x8xf32>, vector<5x8xf32> -> vector<5x8xf32>
    %209 = vector.extract_strided_slice %191 {offsets = [0, 8], sizes = [5, 8], strides = [1, 1]} : vector<5x96xf32> to vector<5x8xf32>
    %210 = vector.extract_strided_slice %191 {offsets = [0, 40], sizes = [5, 8], strides = [1, 1]} : vector<5x96xf32> to vector<5x8xf32>
    %211 = vector.extract_strided_slice %191 {offsets = [0, 72], sizes = [5, 8], strides = [1, 1]} : vector<5x96xf32> to vector<5x8xf32>
    %cst_101 = arith.constant dense<0.000000e+00> : vector<5x5xf32>
    %212 = tpu.matmul %209, %210, %cst_101 {dimension_numbers = #tpu.dot_dimension_numbers<[1], [1], [0], [0], [0, 0, 1, 0], [], []>} : vector<5x8xf32>, vector<5x8xf32>, vector<5x5xf32> -> vector<5x5xf32>
    %cst_102 = arith.constant 0.353553385 : f32
    %213 = vector.broadcast %cst_102 : f32 to vector<5x5xf32>
    %214 = arith.mulf %212, %213 : vector<5x5xf32>
    %cst_103 = arith.constant dense<0xFF800000> : vector<5xf32>
    %215 = vector.multi_reduction <maximumf>, %214, %cst_103 [1] : vector<5x5xf32> to vector<5xf32>
    %216 = vector.shape_cast %215 : vector<5xf32> to vector<5x1xf32>
    %217 = vector.broadcast %216 : vector<5x1xf32> to vector<5x5xf32>
    %218 = arith.subf %214, %217 : vector<5x5xf32>
    %219 = math.exp %218 : vector<5x5xf32>
    %cst_104 = arith.constant dense<0.000000e+00> : vector<5xf32>
    %220 = vector.multi_reduction <add>, %219, %cst_104 [1] : vector<5x5xf32> to vector<5xf32>
    %221 = vector.shape_cast %220 : vector<5xf32> to vector<5x1xf32>
    %222 = tpu.reciprocal %221 {approx = true} : vector<5x1xf32> -> vector<5x1xf32>
    %223 = vector.broadcast %222 : vector<5x1xf32> to vector<5x5xf32>
    %224 = arith.mulf %219, %223 : vector<5x5xf32>
    %cst_105 = arith.constant dense<0.000000e+00> : vector<5x8xf32>
    %225 = tpu.matmul %224, %211, %cst_105 {dimension_numbers = #tpu.dot_dimension_numbers<[1], [0], [0], [1], [0, 0, 1, 1], [], []>} : vector<5x5xf32>, vector<5x8xf32>, vector<5x8xf32> -> vector<5x8xf32>
    %226 = vector.extract_strided_slice %191 {offsets = [0, 16], sizes = [5, 8], strides = [1, 1]} : vector<5x96xf32> to vector<5x8xf32>
    %227 = vector.extract_strided_slice %191 {offsets = [0, 48], sizes = [5, 8], strides = [1, 1]} : vector<5x96xf32> to vector<5x8xf32>
    %228 = vector.extract_strided_slice %191 {offsets = [0, 80], sizes = [5, 8], strides = [1, 1]} : vector<5x96xf32> to vector<5x8xf32>
    %cst_106 = arith.constant dense<0.000000e+00> : vector<5x5xf32>
    %229 = tpu.matmul %226, %227, %cst_106 {dimension_numbers = #tpu.dot_dimension_numbers<[1], [1], [0], [0], [0, 0, 1, 0], [], []>} : vector<5x8xf32>, vector<5x8xf32>, vector<5x5xf32> -> vector<5x5xf32>
    %cst_107 = arith.constant 0.353553385 : f32
    %230 = vector.broadcast %cst_107 : f32 to vector<5x5xf32>
    %231 = arith.mulf %229, %230 : vector<5x5xf32>
    %cst_108 = arith.constant dense<0xFF800000> : vector<5xf32>
    %232 = vector.multi_reduction <maximumf>, %231, %cst_108 [1] : vector<5x5xf32> to vector<5xf32>
    %233 = vector.shape_cast %232 : vector<5xf32> to vector<5x1xf32>
    %234 = vector.broadcast %233 : vector<5x1xf32> to vector<5x5xf32>
    %235 = arith.subf %231, %234 : vector<5x5xf32>
    %236 = math.exp %235 : vector<5x5xf32>
    %cst_109 = arith.constant dense<0.000000e+00> : vector<5xf32>
    %237 = vector.multi_reduction <add>, %236, %cst_109 [1] : vector<5x5xf32> to vector<5xf32>
    %238 = vector.shape_cast %237 : vector<5xf32> to vector<5x1xf32>
    %239 = tpu.reciprocal %238 {approx = true} : vector<5x1xf32> -> vector<5x1xf32>
    %240 = vector.broadcast %239 : vector<5x1xf32> to vector<5x5xf32>
    %241 = arith.mulf %236, %240 : vector<5x5xf32>
    %cst_110 = arith.constant dense<0.000000e+00> : vector<5x8xf32>
    %242 = tpu.matmul %241, %228, %cst_110 {dimension_numbers = #tpu.dot_dimension_numbers<[1], [0], [0], [1], [0, 0, 1, 1], [], []>} : vector<5x5xf32>, vector<5x8xf32>, vector<5x8xf32> -> vector<5x8xf32>
    %243 = vector.extract_strided_slice %191 {offsets = [0, 24], sizes = [5, 8], strides = [1, 1]} : vector<5x96xf32> to vector<5x8xf32>
    %244 = vector.extract_strided_slice %191 {offsets = [0, 56], sizes = [5, 8], strides = [1, 1]} : vector<5x96xf32> to vector<5x8xf32>
    %245 = vector.extract_strided_slice %191 {offsets = [0, 88], sizes = [5, 8], strides = [1, 1]} : vector<5x96xf32> to vector<5x8xf32>
    %cst_111 = arith.constant dense<0.000000e+00> : vector<5x5xf32>
    %246 = tpu.matmul %243, %244, %cst_111 {dimension_numbers = #tpu.dot_dimension_numbers<[1], [1], [0], [0], [0, 0, 1, 0], [], []>} : vector<5x8xf32>, vector<5x8xf32>, vector<5x5xf32> -> vector<5x5xf32>
    %cst_112 = arith.constant 0.353553385 : f32
    %247 = vector.broadcast %cst_112 : f32 to vector<5x5xf32>
    %248 = arith.mulf %246, %247 : vector<5x5xf32>
    %cst_113 = arith.constant dense<0xFF800000> : vector<5xf32>
    %249 = vector.multi_reduction <maximumf>, %248, %cst_113 [1] : vector<5x5xf32> to vector<5xf32>
    %250 = vector.shape_cast %249 : vector<5xf32> to vector<5x1xf32>
    %251 = vector.broadcast %250 : vector<5x1xf32> to vector<5x5xf32>
    %252 = arith.subf %248, %251 : vector<5x5xf32>
    %253 = math.exp %252 : vector<5x5xf32>
    %cst_114 = arith.constant dense<0.000000e+00> : vector<5xf32>
    %254 = vector.multi_reduction <add>, %253, %cst_114 [1] : vector<5x5xf32> to vector<5xf32>
    %255 = vector.shape_cast %254 : vector<5xf32> to vector<5x1xf32>
    %256 = tpu.reciprocal %255 {approx = true} : vector<5x1xf32> -> vector<5x1xf32>
    %257 = vector.broadcast %256 : vector<5x1xf32> to vector<5x5xf32>
    %258 = arith.mulf %253, %257 : vector<5x5xf32>
    %cst_115 = arith.constant dense<0.000000e+00> : vector<5x8xf32>
    %259 = tpu.matmul %258, %245, %cst_115 {dimension_numbers = #tpu.dot_dimension_numbers<[1], [0], [0], [1], [0, 0, 1, 1], [], []>} : vector<5x5xf32>, vector<5x8xf32>, vector<5x8xf32> -> vector<5x8xf32>
    %260 = tpu.concatenate %208, %225, %242, %259 in 1 : vector<5x8xf32>, vector<5x8xf32>, vector<5x8xf32>, vector<5x8xf32> -> vector<5x32xf32>
    %c1_116 = arith.constant 1 : index
    %c0_117 = arith.constant 0 : index
    %c0_118 = arith.constant 0 : index
    %261 = vector.load %arg8[%c1_116, %c0_117, %c0_118] : memref<2x32x32xf32, #tpu.memory_space<vmem>>, vector<1x32x32xf32>
    %262 = vector.shape_cast %261 : vector<1x32x32xf32> to vector<32x32xf32>
    %cst_119 = arith.constant dense<0.000000e+00> : vector<5x32xf32>
    %263 = tpu.matmul %260, %262, %cst_119 {dimension_numbers = #tpu.dot_dimension_numbers<[1], [0], [0], [1], [0, 0, 1, 1], [], []>} : vector<5x32xf32>, vector<32x32xf32>, vector<5x32xf32> -> vector<5x32xf32>
    %c1_120 = arith.constant 1 : index
    %c0_121 = arith.constant 0 : index
    %c0_122 = arith.constant 0 : index
    %264 = vector.load %arg9[%c1_120, %c0_121, %c0_122] : memref<2x1x32xf32, #tpu.memory_space<vmem>>, vector<1x1x32xf32>
    %265 = vector.shape_cast %264 : vector<1x1x32xf32> to vector<1x32xf32>
    %266 = vector.broadcast %265 : vector<1x32xf32> to vector<5x32xf32>
    %267 = arith.addf %263, %266 : vector<5x32xf32>
    %268 = arith.addf %160, %267 : vector<5x32xf32>
    %c1_123 = arith.constant 1 : index
    %c0_124 = arith.constant 0 : index
    %c0_125 = arith.constant 0 : index
    %269 = vector.load %arg10[%c1_123, %c0_124, %c0_125] : memref<2x1x32xf32, #tpu.memory_space<vmem>>, vector<1x1x32xf32>
    %270 = vector.shape_cast %269 : vector<1x1x32xf32> to vector<1x32xf32>
    %c1_126 = arith.constant 1 : index
    %c0_127 = arith.constant 0 : index
    %c0_128 = arith.constant 0 : index
    %271 = vector.load %arg11[%c1_126, %c0_127, %c0_128] : memref<2x1x32xf32, #tpu.memory_space<vmem>>, vector<1x1x32xf32>
    %272 = vector.shape_cast %271 : vector<1x1x32xf32> to vector<1x32xf32>
    %cst_129 = arith.constant dense<0.000000e+00> : vector<5xf32>
    %273 = vector.multi_reduction <add>, %268, %cst_129 [1] : vector<5x32xf32> to vector<5xf32>
    %274 = vector.shape_cast %273 : vector<5xf32> to vector<5x1xf32>
    %cst_130 = arith.constant 3.200000e+01 : f32
    %275 = vector.broadcast %cst_130 : f32 to vector<5x1xf32>
    %276 = arith.divf %274, %275 : vector<5x1xf32>
    %277 = vector.broadcast %276 : vector<5x1xf32> to vector<5x32xf32>
    %278 = arith.subf %268, %277 : vector<5x32xf32>
    %279 = arith.mulf %278, %278 : vector<5x32xf32>
    %cst_131 = arith.constant dense<0.000000e+00> : vector<5xf32>
    %280 = vector.multi_reduction <add>, %279, %cst_131 [1] : vector<5x32xf32> to vector<5xf32>
    %281 = vector.shape_cast %280 : vector<5xf32> to vector<5x1xf32>
    %cst_132 = arith.constant 3.200000e+01 : f32
    %282 = vector.broadcast %cst_132 : f32 to vector<5x1xf32>
    %283 = arith.divf %281, %282 : vector<5x1xf32>
    %cst_133 = arith.constant 9.99999997E-7 : f32
    %284 = vector.broadcast %cst_133 : f32 to vector<5x1xf32>
    %285 = arith.addf %283, %284 : vector<5x1xf32>
    %286 = math.rsqrt %285 : vector<5x1xf32>
    %287 = vector.broadcast %286 : vector<5x1xf32> to vector<5x32xf32>
    %288 = arith.mulf %278, %287 : vector<5x32xf32>
    %289 = vector.broadcast %270 : vector<1x32xf32> to vector<5x32xf32>
    %290 = arith.mulf %288, %289 : vector<5x32xf32>
    %291 = vector.broadcast %272 : vector<1x32xf32> to vector<5x32xf32>
    %292 = arith.addf %290, %291 : vector<5x32xf32>
    %c1_134 = arith.constant 1 : index
    %c0_135 = arith.constant 0 : index
    %c0_136 = arith.constant 0 : index
    %293 = vector.load %arg12[%c1_134, %c0_135, %c0_136] : memref<2x32x128xf32, #tpu.memory_space<vmem>>, vector<1x32x128xf32>
    %294 = vector.shape_cast %293 : vector<1x32x128xf32> to vector<32x128xf32>
    %cst_137 = arith.constant dense<0.000000e+00> : vector<5x128xf32>
    %295 = tpu.matmul %292, %294, %cst_137 {dimension_numbers = #tpu.dot_dimension_numbers<[1], [0], [0], [1], [0, 0, 1, 1], [], []>} : vector<5x32xf32>, vector<32x128xf32>, vector<5x128xf32> -> vector<5x128xf32>
    %c1_138 = arith.constant 1 : index
    %c0_139 = arith.constant 0 : index
    %c0_140 = arith.constant 0 : index
    %296 = vector.load %arg13[%c1_138, %c0_139, %c0_140] : memref<2x1x128xf32, #tpu.memory_space<vmem>>, vector<1x1x128xf32>
    %297 = vector.shape_cast %296 : vector<1x1x128xf32> to vector<1x128xf32>
    %298 = vector.broadcast %297 : vector<1x128xf32> to vector<5x128xf32>
    %299 = arith.addf %295, %298 : vector<5x128xf32>
    %cst_141 = arith.constant 5.000000e-01 : f32
    %300 = vector.broadcast %cst_141 : f32 to vector<5x128xf32>
    %301 = arith.mulf %300, %299 : vector<5x128xf32>
    %cst_142 = arith.constant 0.707106769 : f32
    %302 = vector.broadcast %cst_142 : f32 to vector<5x128xf32>
    %303 = arith.mulf %299, %302 : vector<5x128xf32>
    %304 = math.erf %303 : vector<5x128xf32>
    %cst_143 = arith.constant 1.000000e+00 : f32
    %305 = vector.broadcast %cst_143 : f32 to vector<5x128xf32>
    %306 = arith.addf %305, %304 : vector<5x128xf32>
    %307 = arith.mulf %301, %306 : vector<5x128xf32>
    %c1_144 = arith.constant 1 : index
    %c0_145 = arith.constant 0 : index
    %c0_146 = arith.constant 0 : index
    %308 = vector.load %arg14[%c1_144, %c0_145, %c0_146] : memref<2x128x32xf32, #tpu.memory_space<vmem>>, vector<1x128x32xf32>
    %309 = vector.shape_cast %308 : vector<1x128x32xf32> to vector<128x32xf32>
    %cst_147 = arith.constant dense<0.000000e+00> : vector<5x32xf32>
    %310 = tpu.matmul %307, %309, %cst_147 {dimension_numbers = #tpu.dot_dimension_numbers<[1], [0], [0], [1], [0, 0, 1, 1], [], []>} : vector<5x128xf32>, vector<128x32xf32>, vector<5x32xf32> -> vector<5x32xf32>
    %c1_148 = arith.constant 1 : index
    %c0_149 = arith.constant 0 : index
    %c0_150 = arith.constant 0 : index
    %311 = vector.load %arg15[%c1_148, %c0_149, %c0_150] : memref<2x1x32xf32, #tpu.memory_space<vmem>>, vector<1x1x32xf32>
    %312 = vector.shape_cast %311 : vector<1x1x32xf32> to vector<1x32xf32>
    %313 = vector.broadcast %312 : vector<1x32xf32> to vector<5x32xf32>
    %314 = arith.addf %310, %313 : vector<5x32xf32>
    %315 = arith.addf %268, %314 : vector<5x32xf32>
    %c0_151 = arith.constant 0 : index
    %c0_152 = arith.constant 0 : index
    %316 = vector.load %arg16[%c0_151, %c0_152] : memref<1x32xf32, #tpu.memory_space<vmem>>, vector<1x32xf32>
    %c0_153 = arith.constant 0 : index
    %c0_154 = arith.constant 0 : index
    %317 = vector.load %arg17[%c0_153, %c0_154] : memref<1x32xf32, #tpu.memory_space<vmem>>, vector<1x32xf32>
    %cst_155 = arith.constant dense<0.000000e+00> : vector<5xf32>
    %318 = vector.multi_reduction <add>, %315, %cst_155 [1] : vector<5x32xf32> to vector<5xf32>
    %319 = vector.shape_cast %318 : vector<5xf32> to vector<5x1xf32>
    %cst_156 = arith.constant 3.200000e+01 : f32
    %320 = vector.broadcast %cst_156 : f32 to vector<5x1xf32>
    %321 = arith.divf %319, %320 : vector<5x1xf32>
    %322 = vector.broadcast %321 : vector<5x1xf32> to vector<5x32xf32>
    %323 = arith.subf %315, %322 : vector<5x32xf32>
    %324 = arith.mulf %323, %323 : vector<5x32xf32>
    %cst_157 = arith.constant dense<0.000000e+00> : vector<5xf32>
    %325 = vector.multi_reduction <add>, %324, %cst_157 [1] : vector<5x32xf32> to vector<5xf32>
    %326 = vector.shape_cast %325 : vector<5xf32> to vector<5x1xf32>
    %cst_158 = arith.constant 3.200000e+01 : f32
    %327 = vector.broadcast %cst_158 : f32 to vector<5x1xf32>
    %328 = arith.divf %326, %327 : vector<5x1xf32>
    %cst_159 = arith.constant 9.99999997E-7 : f32
    %329 = vector.broadcast %cst_159 : f32 to vector<5x1xf32>
    %330 = arith.addf %328, %329 : vector<5x1xf32>
    %331 = math.rsqrt %330 : vector<5x1xf32>
    %332 = vector.broadcast %331 : vector<5x1xf32> to vector<5x32xf32>
    %333 = arith.mulf %323, %332 : vector<5x32xf32>
    %334 = vector.broadcast %316 : vector<1x32xf32> to vector<5x32xf32>
    %335 = arith.mulf %333, %334 : vector<5x32xf32>
    %336 = vector.broadcast %317 : vector<1x32xf32> to vector<5x32xf32>
    %337 = arith.addf %335, %336 : vector<5x32xf32>
    %c0_160 = arith.constant 0 : index
    %c0_161 = arith.constant 0 : index
    %c0_162 = arith.constant 0 : index
    %338 = vector.load %arg18[%c0_160, %c0_161, %c0_162] : memref<1x5x32xf32, #tpu.memory_space<vmem>>, vector<1x5x32xf32>
    %339 = vector.shape_cast %338 : vector<1x5x32xf32> to vector<5x32xf32>
    %340 = vector.shape_cast %337 : vector<5x32xf32> to vector<1x5x32xf32>
    tpu.vector_store %arg18[%c0_160, %c0_161, %c0_162], %340 {strides = array<i32>} : memref<1x5x32xf32, #tpu.memory_space<vmem>>, vector<1x5x32xf32>,
    return
  }
  func.func @transform_0(%arg0: i32) -> (i32, i32, i32) {
    %c0_i32 = arith.constant 0 : i32
    %c0_i32_0 = arith.constant 0 : i32
    %c0_i32_1 = arith.constant 0 : i32
    return %arg0, %c0_i32, %c0_i32_0 : i32, i32, i32
  }
  func.func @transform_1(%arg0: i32) -> (i32, i32) {
    %c0_i32 = arith.constant 0 : i32
    %c0_i32_0 = arith.constant 0 : i32
    %c0_i32_1 = arith.constant 0 : i32
    return %c0_i32, %c0_i32_0 : i32, i32
  }
  func.func @transform_2(%arg0: i32) -> (i32, i32) {
    %c0_i32 = arith.constant 0 : i32
    %c0_i32_0 = arith.constant 0 : i32
    %c0_i32_1 = arith.constant 0 : i32
    return %c0_i32, %c0_i32_0 : i32, i32
  }
  func.func @transform_3(%arg0: i32) -> (i32, i32, i32) {
    %c0_i32 = arith.constant 0 : i32
    %c0_i32_0 = arith.constant 0 : i32
    %c0_i32_1 = arith.constant 0 : i32
    %c0_i32_2 = arith.constant 0 : i32
    return %c0_i32, %c0_i32_0, %c0_i32_1 : i32, i32, i32
  }
  func.func @transform_4(%arg0: i32) -> (i32, i32, i32) {
    %c0_i32 = arith.constant 0 : i32
    %c0_i32_0 = arith.constant 0 : i32
    %c0_i32_1 = arith.constant 0 : i32
    %c0_i32_2 = arith.constant 0 : i32
    return %c0_i32, %c0_i32_0, %c0_i32_1 : i32, i32, i32
  }
  func.func @transform_5(%arg0: i32) -> (i32, i32, i32) {
    %c0_i32 = arith.constant 0 : i32
    %c0_i32_0 = arith.constant 0 : i32
    %c0_i32_1 = arith.constant 0 : i32
    %c0_i32_2 = arith.constant 0 : i32
    return %c0_i32, %c0_i32_0, %c0_i32_1 : i32, i32, i32
  }
  func.func @transform_6(%arg0: i32) -> (i32, i32, i32) {
    %c0_i32 = arith.constant 0 : i32
    %c0_i32_0 = arith.constant 0 : i32
    %c0_i32_1 = arith.constant 0 : i32
    %c0_i32_2 = arith.constant 0 : i32
    return %c0_i32, %c0_i32_0, %c0_i32_1 : i32, i32, i32
  }
  func.func @transform_7(%arg0: i32) -> (i32, i32, i32) {
    %c0_i32 = arith.constant 0 : i32
    %c0_i32_0 = arith.constant 0 : i32
    %c0_i32_1 = arith.constant 0 : i32
    %c0_i32_2 = arith.constant 0 : i32
    return %c0_i32, %c0_i32_0, %c0_i32_1 : i32, i32, i32
  }
  func.func @transform_8(%arg0: i32) -> (i32, i32, i32) {
    %c0_i32 = arith.constant 0 : i32
    %c0_i32_0 = arith.constant 0 : i32
    %c0_i32_1 = arith.constant 0 : i32
    %c0_i32_2 = arith.constant 0 : i32
    return %c0_i32, %c0_i32_0, %c0_i32_1 : i32, i32, i32
  }
  func.func @transform_9(%arg0: i32) -> (i32, i32, i32) {
    %c0_i32 = arith.constant 0 : i32
    %c0_i32_0 = arith.constant 0 : i32
    %c0_i32_1 = arith.constant 0 : i32
    %c0_i32_2 = arith.constant 0 : i32
    return %c0_i32, %c0_i32_0, %c0_i32_1 : i32, i32, i32
  }
  func.func @transform_10(%arg0: i32) -> (i32, i32, i32) {
    %c0_i32 = arith.constant 0 : i32
    %c0_i32_0 = arith.constant 0 : i32
    %c0_i32_1 = arith.constant 0 : i32
    %c0_i32_2 = arith.constant 0 : i32
    return %c0_i32, %c0_i32_0, %c0_i32_1 : i32, i32, i32
  }
  func.func @transform_11(%arg0: i32) -> (i32, i32, i32) {
    %c0_i32 = arith.constant 0 : i32
    %c0_i32_0 = arith.constant 0 : i32
    %c0_i32_1 = arith.constant 0 : i32
    %c0_i32_2 = arith.constant 0 : i32
    return %c0_i32, %c0_i32_0, %c0_i32_1 : i32, i32, i32
  }
  func.func @transform_12(%arg0: i32) -> (i32, i32, i32) {
    %c0_i32 = arith.constant 0 : i32
    %c0_i32_0 = arith.constant 0 : i32
    %c0_i32_1 = arith.constant 0 : i32
    %c0_i32_2 = arith.constant 0 : i32
    return %c0_i32, %c0_i32_0, %c0_i32_1 : i32, i32, i32
  }
  func.func @transform_13(%arg0: i32) -> (i32, i32, i32) {
    %c0_i32 = arith.constant 0 : i32
    %c0_i32_0 = arith.constant 0 : i32
    %c0_i32_1 = arith.constant 0 : i32
    %c0_i32_2 = arith.constant 0 : i32
    return %c0_i32, %c0_i32_0, %c0_i32_1 : i32, i32, i32
  }
  func.func @transform_14(%arg0: i32) -> (i32, i32, i32) {
    %c0_i32 = arith.constant 0 : i32
    %c0_i32_0 = arith.constant 0 : i32
    %c0_i32_1 = arith.constant 0 : i32
    %c0_i32_2 = arith.constant 0 : i32
    return %c0_i32, %c0_i32_0, %c0_i32_1 : i32, i32, i32
  }
  func.func @transform_15(%arg0: i32) -> (i32, i32) {
    %c0_i32 = arith.constant 0 : i32
    %c0_i32_0 = arith.constant 0 : i32
    %c0_i32_1 = arith.constant 0 : i32
    return %c0_i32, %c0_i32_0 : i32, i32
  }
  func.func @transform_16(%arg0: i32) -> (i32, i32) {
    %c0_i32 = arith.constant 0 : i32
    %c0_i32_0 = arith.constant 0 : i32
    %c0_i32_1 = arith.constant 0 : i32
    return %c0_i32, %c0_i32_0 : i32, i32
  }
  func.func @transform_17(%arg0: i32) -> (i32, i32, i32) {
    %c0_i32 = arith.constant 0 : i32
    %c0_i32_0 = arith.constant 0 : i32
    %c0_i32_1 = arith.constant 0 : i32
    return %arg0, %c0_i32, %c0_i32_0 : i32, i32, i32
  }
}

</mosaic_0001>

<llo_original>
// kernel: vit_encoder_forward.1
$region0: #{vit_encoder_forward.1}
  #allocation0 [shape = 'u32[]', space=smem, size = 0x4, offset = 0x4, fixed_abs, tag = 'smem constant byte address 0x4 - core index']
  #allocation1 [shape = 'u32[144,128]{1,0:T(1,128)}', space=vmem, size = 0x12000, scoped, tag = 'internal scratch']
  %s0 = inlined_call_operand.vmem [shape: f32[2,5,192], index: 0, kind: input, shape index: {}]
  %s1 = inlined_call_operand.vmem [shape: f32[192,32], index: 1, kind: input, shape index: {}]
  %s2 = inlined_call_operand.vmem [shape: f32[5,32], index: 2, kind: input, shape index: {}]
  %s3 = inlined_call_operand.vmem [shape: f32[2,1,32], index: 3, kind: input, shape index: {}]
  %s4 = inlined_call_operand.vmem [shape: f32[2,1,32], index: 4, kind: input, shape index: {}]
  %s5 = inlined_call_operand.vmem [shape: f32[2,32,96], index: 5, kind: input, shape index: {}]
  %s6 = inlined_call_operand.vmem [shape: f32[2,1,96], index: 6, kind: input, shape index: {}]
  %s7 = inlined_call_operand.vmem [shape: f32[2,32,32], index: 7, kind: input, shape index: {}]
  %s8 = inlined_call_operand.vmem [shape: f32[2,1,32], index: 8, kind: input, shape index: {}]
  %s9 = inlined_call_operand.vmem [shape: f32[2,1,32], index: 9, kind: input, shape index: {}]
  %s10 = inlined_call_operand.vmem [shape: f32[2,1,32], index: 10, kind: input, shape index: {}]
  %s11 = inlined_call_operand.vmem [shape: f32[2,32,128], index: 11, kind: input, shape index: {}]
  %s12 = inlined_call_operand.vmem [shape: f32[2,1,128], index: 12, kind: input, shape index: {}]
  %s13 = inlined_call_operand.vmem [shape: f32[2,128,32], index: 13, kind: input, shape index: {}]
  %s14 = inlined_call_operand.vmem [shape: f32[2,1,32], index: 14, kind: input, shape index: {}]
  %s15 = inlined_call_operand.vmem [shape: f32[1,32], index: 15, kind: input, shape index: {}]
  %s16 = inlined_call_operand.vmem [shape: f32[1,32], index: 16, kind: input, shape index: {}]
  %s17 = inlined_call_operand.vmem [shape: f32[2,5,32], index: 17, kind: output, shape index: {}]
  %s18 = sld [smem:[#allocation0]]
  $region101: #{vit_encoder_forward.1} parent=0
    _
  %s20 = ssub.s32 1, %s18
  %s21 = scalar_select 0, %s20, %s18
  loop: start=0, step=1, limit=4
  $region2: #{vit_encoder_forward.1} parent=0 // loop_pre_header
    _
  $region3: #{vit_encoder_forward.1} parent=0 // loop_header
    %s23 = sphi 0, %s27
    %p24 = scmp.ge.s32.totalorder %s23, 4
    %s33 = sphi 0, %s35
    %s36 = sphi 0, %s33
    %s37 = sphi 0, %s36
    %s53 = sphi 0, %s37
    %s57 = sphi 0, %s57
    %s59 = sphi 0, %s57
    %s60 = sphi 0, %s59
    %s74 = sphi 0, %s60
    %s78 = sphi 0, %s78
    %s80 = sphi 0, %s78
    %s81 = sphi 0, %s80
    %s95 = sphi 0, %s81
    %s99 = sphi 0, %s99
    %s101 = sphi 0, %s99
    %s102 = sphi 0, %s101
    %s116 = sphi 0, %s102
    %s120 = sphi 0, %s120
    %s122 = sphi 0, %s120
    %s123 = sphi 0, %s122
    %s137 = sphi 0, %s123
    %s141 = sphi 0, %s141
    %s143 = sphi 0, %s141
    %s144 = sphi 0, %s143
    %s158 = sphi 0, %s144
    %s162 = sphi 0, %s162
    %s164 = sphi 0, %s162
    %s165 = sphi 0, %s164
    %s179 = sphi 0, %s165
    %s183 = sphi 0, %s183
    %s185 = sphi 0, %s183
    %s186 = sphi 0, %s185
    %s200 = sphi 0, %s186
    %s204 = sphi 0, %s204
    %s206 = sphi 0, %s204
    %s207 = sphi 0, %s206
    %s221 = sphi 0, %s207
    %s225 = sphi 0, %s225
    %s227 = sphi 0, %s225
    %s228 = sphi 0, %s227
    %s242 = sphi 0, %s228
    %s246 = sphi 0, %s246
    %s248 = sphi 0, %s246
    %s249 = sphi 0, %s248
    %s263 = sphi 0, %s249
    %s267 = sphi 0, %s267
    %s269 = sphi 0, %s267
    %s270 = sphi 0, %s269
    %s284 = sphi 0, %s270
    %s288 = sphi 0, %s288
    %s290 = sphi 0, %s288
    %s291 = sphi 0, %s290
    %s305 = sphi 0, %s291
    %s309 = sphi 0, %s309
    %s311 = sphi 0, %s309
    %s312 = sphi 0, %s311
    %s326 = sphi 0, %s312
    %s330 = sphi 0, %s330
    %s332 = sphi 0, %s330
    %s333 = sphi 0, %s332
    %s347 = sphi 0, %s333
    %s351 = sphi 0, %s351
    %s353 = sphi 0, %s351
    %s354 = sphi 0, %s353
    %s368 = sphi 0, %s354
    %s372 = sphi 0, %s372
    %s374 = sphi 0, %s372
    %s375 = sphi 0, %s374
    %s389 = sphi 0, %s375
    %s395 = sphi 0, %s397
    %s398 = sphi 0, %s395
    %s399 = sphi 0, %s398
    %s415 = sphi 0, %s399
  $region4: #{vit_encoder_forward.1} parent=0 // loop_header_branch
    %26 = sbr.rel (%p24) target = $region8
  $region5: #{vit_encoder_forward.1} parent=0 // loop_body
    %s28 = ssub.s32 %s23, 1
    %s29 = ssub.s32 %s23, 2
    %s30 = sadd.s32 %s23, 1
    %s31 = ssub.s32 %s23, %s30
    %p32 = scmp.eq.s32.totalorder %s31, 0
    %s34 = sadd.s32 %s33, 1
    %s35 = scalar_select %p32, %s33, %s34
    %p38 = pneg %p32
    %p39 = scmp.eq.s32.totalorder %s23, 1
    %p40 = por %p38, %p39
    %p41 = scmp.ne.s32.totalorder %s33, %s36
    %p42 = scmp.eq.s32.totalorder %s23, 0
    %p43 = por %p41, %p42
    %p44 = scmp.ne.s32.totalorder %s33, %s36
    %p45 = scmp.eq.s32.totalorder %s28, 1
    %p46 = por %p44, %p45
    %p47 = scmp.ne.s32.totalorder %s36, %s37
    %p48 = scmp.eq.s32.totalorder %s28, 0
    %p49 = por %p47, %p48
    %p50 = scmp.ne.s32.totalorder %s36, %s37
    %p51 = scmp.eq.s32.totalorder %s29, 1
    %p52 = por %p50, %p51
    %p54 = scmp.ne.s32.totalorder %s37, %s53
    %p55 = scmp.eq.s32.totalorder %s29, 0
    %p56 = por %p54, %p55
    %s58 = sadd.s32 %s57, 1
    %p61 = scmp.eq.s32.totalorder %s23, 1
    %p62 = scmp.ne.s32.totalorder %s57, %s59
    %p63 = scmp.eq.s32.totalorder %s23, 0
    %p64 = por %p62, %p63
    %p65 = scmp.ne.s32.totalorder %s57, %s59
    %p66 = scmp.eq.s32.totalorder %s28, 1
    %p67 = por %p65, %p66
    %p68 = scmp.ne.s32.totalorder %s59, %s60
    %p69 = scmp.eq.s32.totalorder %s28, 0
    %p70 = por %p68, %p69
    %p71 = scmp.ne.s32.totalorder %s59, %s60
    %p72 = scmp.eq.s32.totalorder %s29, 1
    %p73 = por %p71, %p72
    %p75 = scmp.ne.s32.totalorder %s60, %s74
    %p76 = scmp.eq.s32.totalorder %s29, 0
    %p77 = por %p75, %p76
    %s79 = sadd.s32 %s78, 1
    %p82 = scmp.eq.s32.totalorder %s23, 1
    %p83 = scmp.ne.s32.totalorder %s78, %s80
    %p84 = scmp.eq.s32.totalorder %s23, 0
    %p85 = por %p83, %p84
    %p86 = scmp.ne.s32.totalorder %s78, %s80
    %p87 = scmp.eq.s32.totalorder %s28, 1
    %p88 = por %p86, %p87
    %p89 = scmp.ne.s32.totalorder %s80, %s81
    %p90 = scmp.eq.s32.totalorder %s28, 0
    %p91 = por %p89, %p90
    %p92 = scmp.ne.s32.totalorder %s80, %s81
    %p93 = scmp.eq.s32.totalorder %s29, 1
    %p94 = por %p92, %p93
    %p96 = scmp.ne.s32.totalorder %s81, %s95
    %p97 = scmp.eq.s32.totalorder %s29, 0
    %p98 = por %p96, %p97
    %s100 = sadd.s32 %s99, 1
    %p103 = scmp.eq.s32.totalorder %s23, 1
    %p104 = scmp.ne.s32.totalorder %s99, %s101
    %p105 = scmp.eq.s32.totalorder %s23, 0
    %p106 = por %p104, %p105
    %p107 = scmp.ne.s32.totalorder %s99, %s101
    %p108 = scmp.eq.s32.totalorder %s28, 1
    %p109 = por %p107, %p108
    %p110 = scmp.ne.s32.totalorder %s101, %s102
    %p111 = scmp.eq.s32.totalorder %s28, 0
    %p112 = por %p110, %p111
    %p113 = scmp.ne.s32.totalorder %s101, %s102
    %p114 = scmp.eq.s32.totalorder %s29, 1
    %p115 = por %p113, %p114
    %p117 = scmp.ne.s32.totalorder %s102, %s116
    %p118 = scmp.eq.s32.totalorder %s29, 0
    %p119 = por %p117, %p118
    %s121 = sadd.s32 %s120, 1
    %p124 = scmp.eq.s32.totalorder %s23, 1
    %p125 = scmp.ne.s32.totalorder %s120, %s122
    %p126 = scmp.eq.s32.totalorder %s23, 0
    %p127 = por %p125, %p126
    %p128 = scmp.ne.s32.totalorder %s120, %s122
    %p129 = scmp.eq.s32.totalorder %s28, 1
    %p130 = por %p128, %p129
    %p131 = scmp.ne.s32.totalorder %s122, %s123
    %p132 = scmp.eq.s32.totalorder %s28, 0
    %p133 = por %p131, %p132
    %p134 = scmp.ne.s32.totalorder %s122, %s123
    %p135 = scmp.eq.s32.totalorder %s29, 1
    %p136 = por %p134, %p135
    %p138 = scmp.ne.s32.totalorder %s123, %s137
    %p139 = scmp.eq.s32.totalorder %s29, 0
    %p140 = por %p138, %p139
    %s142 = sadd.s32 %s141, 1
    %p145 = scmp.eq.s32.totalorder %s23, 1
    %p146 = scmp.ne.s32.totalorder %s141, %s143
    %p147 = scmp.eq.s32.totalorder %s23, 0
    %p148 = por %p146, %p147
    %p149 = scmp.ne.s32.totalorder %s141, %s143
    %p150 = scmp.eq.s32.totalorder %s28, 1
    %p151 = por %p149, %p150
    %p152 = scmp.ne.s32.totalorder %s143, %s144
    %p153 = scmp.eq.s32.totalorder %s28, 0
    %p154 = por %p152, %p153
    %p155 = scmp.ne.s32.totalorder %s143, %s144
    %p156 = scmp.eq.s32.totalorder %s29, 1
    %p157 = por %p155, %p156
    %p159 = scmp.ne.s32.totalorder %s144, %s158
    %p160 = scmp.eq.s32.totalorder %s29, 0
    %p161 = por %p159, %p160
    %s163 = sadd.s32 %s162, 1
    %p166 = scmp.eq.s32.totalorder %s23, 1
    %p167 = scmp.ne.s32.totalorder %s162, %s164
    %p168 = scmp.eq.s32.totalorder %s23, 0
    %p169 = por %p167, %p168
    %p170 = scmp.ne.s32.totalorder %s162, %s164
    %p171 = scmp.eq.s32.totalorder %s28, 1
    %p172 = por %p170, %p171
    %p173 = scmp.ne.s32.totalorder %s164, %s165
    %p174 = scmp.eq.s32.totalorder %s28, 0
    %p175 = por %p173, %p174
    %p176 = scmp.ne.s32.totalorder %s164, %s165
    %p177 = scmp.eq.s32.totalorder %s29, 1
    %p178 = por %p176, %p177
    %p180 = scmp.ne.s32.totalorder %s165, %s179
    %p181 = scmp.eq.s32.totalorder %s29, 0
    %p182 = por %p180, %p181
    %s184 = sadd.s32 %s183, 1
    %p187 = scmp.eq.s32.totalorder %s23, 1
    %p188 = scmp.ne.s32.totalorder %s183, %s185
    %p189 = scmp.eq.s32.totalorder %s23, 0
    %p190 = por %p188, %p189
    %p191 = scmp.ne.s32.totalorder %s183, %s185
    %p192 = scmp.eq.s32.totalorder %s28, 1
    %p193 = por %p191, %p192
    %p194 = scmp.ne.s32.totalorder %s185, %s186
    %p195 = scmp.eq.s32.totalorder %s28, 0
    %p196 = por %p194, %p195
    %p197 = scmp.ne.s32.totalorder %s185, %s186
    %p198 = scmp.eq.s32.totalorder %s29, 1
    %p199 = por %p197, %p198
    %p201 = scmp.ne.s32.totalorder %s186, %s200
    %p202 = scmp.eq.s32.totalorder %s29, 0
    %p203 = por %p201, %p202
    %s205 = sadd.s32 %s204, 1
    %p208 = scmp.eq.s32.totalorder %s23, 1
    %p209 = scmp.ne.s32.totalorder %s204, %s206
    %p210 = scmp.eq.s32.totalorder %s23, 0
    %p211 = por %p209, %p210
    %p212 = scmp.ne.s32.totalorder %s204, %s206
    %p213 = scmp.eq.s32.totalorder %s28, 1
    %p214 = por %p212, %p213
    %p215 = scmp.ne.s32.totalorder %s206, %s207
    %p216 = scmp.eq.s32.totalorder %s28, 0
    %p217 = por %p215, %p216
    %p218 = scmp.ne.s32.totalorder %s206, %s207
    %p219 = scmp.eq.s32.totalorder %s29, 1
    %p220 = por %p218, %p219
    %p222 = scmp.ne.s32.totalorder %s207, %s221
    %p223 = scmp.eq.s32.totalorder %s29, 0
    %p224 = por %p222, %p223
    %s226 = sadd.s32 %s225, 1
    %p229 = scmp.eq.s32.totalorder %s23, 1
    %p230 = scmp.ne.s32.totalorder %s225, %s227
    %p231 = scmp.eq.s32.totalorder %s23, 0
    %p232 = por %p230, %p231
    %p233 = scmp.ne.s32.totalorder %s225, %s227
    %p234 = scmp.eq.s32.totalorder %s28, 1
    %p235 = por %p233, %p234
    %p236 = scmp.ne.s32.totalorder %s227, %s228
    %p237 = scmp.eq.s32.totalorder %s28, 0
    %p238 = por %p236, %p237
    %p239 = scmp.ne.s32.totalorder %s227, %s228
    %p240 = scmp.eq.s32.totalorder %s29, 1
    %p241 = por %p239, %p240
    %p243 = scmp.ne.s32.totalorder %s228, %s242
    %p244 = scmp.eq.s32.totalorder %s29, 0
    %p245 = por %p243, %p244
    %s247 = sadd.s32 %s246, 1
    %p250 = scmp.eq.s32.totalorder %s23, 1
    %p251 = scmp.ne.s32.totalorder %s246, %s248
    %p252 = scmp.eq.s32.totalorder %s23, 0
    %p253 = por %p251, %p252
    %p254 = scmp.ne.s32.totalorder %s246, %s248
    %p255 = scmp.eq.s32.totalorder %s28, 1
    %p256 = por %p254, %p255
    %p257 = scmp.ne.s32.totalorder %s248, %s249
    %p258 = scmp.eq.s32.totalorder %s28, 0
    %p259 = por %p257, %p258
    %p260 = scmp.ne.s32.totalorder %s248, %s249
    %p261 = scmp.eq.s32.totalorder %s29, 1
    %p262 = por %p260, %p261
    %p264 = scmp.ne.s32.totalorder %s249, %s263
    %p265 = scmp.eq.s32.totalorder %s29, 0
    %p266 = por %p264, %p265
    %s268 = sadd.s32 %s267, 1
    %p271 = scmp.eq.s32.totalorder %s23, 1
    %p272 = scmp.ne.s32.totalorder %s267, %s269
    %p273 = scmp.eq.s32.totalorder %s23, 0
    %p274 = por %p272, %p273
    %p275 = scmp.ne.s32.totalorder %s267, %s269
    %p276 = scmp.eq.s32.totalorder %s28, 1
    %p277 = por %p275, %p276
    %p278 = scmp.ne.s32.totalorder %s269, %s270
    %p279 = scmp.eq.s32.totalorder %s28, 0
    %p280 = por %p278, %p279
    %p281 = scmp.ne.s32.totalorder %s269, %s270
    %p282 = scmp.eq.s32.totalorder %s29, 1
    %p283 = por %p281, %p282
    %p285 = scmp.ne.s32.totalorder %s270, %s284
    %p286 = scmp.eq.s32.totalorder %s29, 0
    %p287 = por %p285, %p286
    %s289 = sadd.s32 %s288, 1
    %p292 = scmp.eq.s32.totalorder %s23, 1
    %p293 = scmp.ne.s32.totalorder %s288, %s290
    %p294 = scmp.eq.s32.totalorder %s23, 0
    %p295 = por %p293, %p294
    %p296 = scmp.ne.s32.totalorder %s288, %s290
    %p297 = scmp.eq.s32.totalorder %s28, 1
    %p298 = por %p296, %p297
    %p299 = scmp.ne.s32.totalorder %s290, %s291
    %p300 = scmp.eq.s32.totalorder %s28, 0
    %p301 = por %p299, %p300
    %p302 = scmp.ne.s32.totalorder %s290, %s291
    %p303 = scmp.eq.s32.totalorder %s29, 1
    %p304 = por %p302, %p303
    %p306 = scmp.ne.s32.totalorder %s291, %s305
    %p307 = scmp.eq.s32.totalorder %s29, 0
    %p308 = por %p306, %p307
    %s310 = sadd.s32 %s309, 1
    %p313 = scmp.eq.s32.totalorder %s23, 1
    %p314 = scmp.ne.s32.totalorder %s309, %s311
    %p315 = scmp.eq.s32.totalorder %s23, 0
    %p316 = por %p314, %p315
    %p317 = scmp.ne.s32.totalorder %s309, %s311
    %p318 = scmp.eq.s32.totalorder %s28, 1
    %p319 = por %p317, %p318
    %p320 = scmp.ne.s32.totalorder %s311, %s312
    %p321 = scmp.eq.s32.totalorder %s28, 0
    %p322 = por %p320, %p321
    %p323 = scmp.ne.s32.totalorder %s311, %s312
    %p324 = scmp.eq.s32.totalorder %s29, 1
    %p325 = por %p323, %p324
    %p327 = scmp.ne.s32.totalorder %s312, %s326
    %p328 = scmp.eq.s32.totalorder %s29, 0
    %p329 = por %p327, %p328
    %s331 = sadd.s32 %s330, 1
    %p334 = scmp.eq.s32.totalorder %s23, 1
    %p335 = scmp.ne.s32.totalorder %s330, %s332
    %p336 = scmp.eq.s32.totalorder %s23, 0
    %p337 = por %p335, %p336
    %p338 = scmp.ne.s32.totalorder %s330, %s332
    %p339 = scmp.eq.s32.totalorder %s28, 1
    %p340 = por %p338, %p339
    %p341 = scmp.ne.s32.totalorder %s332, %s333
    %p342 = scmp.eq.s32.totalorder %s28, 0
    %p343 = por %p341, %p342
    %p344 = scmp.ne.s32.totalorder %s332, %s333
    %p345 = scmp.eq.s32.totalorder %s29, 1
    %p346 = por %p344, %p345
    %p348 = scmp.ne.s32.totalorder %s333, %s347
    %p349 = scmp.eq.s32.totalorder %s29, 0
    %p350 = por %p348, %p349
    %s352 = sadd.s32 %s351, 1
    %p355 = scmp.eq.s32.totalorder %s23, 1
    %p356 = scmp.ne.s32.totalorder %s351, %s353
    %p357 = scmp.eq.s32.totalorder %s23, 0
    %p358 = por %p356, %p357
    %p359 = scmp.ne.s32.totalorder %s351, %s353
    %p360 = scmp.eq.s32.totalorder %s28, 1
    %p361 = por %p359, %p360
    %p362 = scmp.ne.s32.totalorder %s353, %s354
    %p363 = scmp.eq.s32.totalorder %s28, 0
    %p364 = por %p362, %p363
    %p365 = scmp.ne.s32.totalorder %s353, %s354
    %p366 = scmp.eq.s32.totalorder %s29, 1
    %p367 = por %p365, %p366
    %p369 = scmp.ne.s32.totalorder %s354, %s368
    %p370 = scmp.eq.s32.totalorder %s29, 0
    %p371 = por %p369, %p370
    %s373 = sadd.s32 %s372, 1
    %p376 = scmp.eq.s32.totalorder %s23, 1
    %p377 = scmp.ne.s32.totalorder %s372, %s374
    %p378 = scmp.eq.s32.totalorder %s23, 0
    %p379 = por %p377, %p378
    %p380 = scmp.ne.s32.totalorder %s372, %s374
    %p381 = scmp.eq.s32.totalorder %s28, 1
    %p382 = por %p380, %p381
    %p383 = scmp.ne.s32.totalorder %s374, %s375
    %p384 = scmp.eq.s32.totalorder %s28, 0
    %p385 = por %p383, %p384
    %p386 = scmp.ne.s32.totalorder %s374, %s375
    %p387 = scmp.eq.s32.totalorder %s29, 1
    %p388 = por %p386, %p387
    %p390 = scmp.ne.s32.totalorder %s375, %s389
    %p391 = scmp.eq.s32.totalorder %s29, 0
    %p392 = por %p390, %p391
    %s393 = ssub.s32 %s23, %s30
    %p394 = scmp.eq.s32.totalorder %s393, 0
    %s396 = sadd.s32 %s395, 1
    %s397 = scalar_select %p394, %s395, %s396
    %p400 = pneg %p394
    %p401 = scmp.eq.s32.totalorder %s23, 1
    %p402 = por %p400, %p401
    %p403 = scmp.ne.s32.totalorder %s395, %s398
    %p404 = scmp.eq.s32.totalorder %s23, 0
    %p405 = por %p403, %p404
    %p406 = scmp.ne.s32.totalorder %s395, %s398
    %p407 = scmp.eq.s32.totalorder %s28, 1
    %p408 = por %p406, %p407
    %p409 = scmp.ne.s32.totalorder %s398, %s399
    %p410 = scmp.eq.s32.totalorder %s28, 0
    %p411 = por %p409, %p410
    %p412 = scmp.ne.s32.totalorder %s398, %s399
    %p413 = scmp.eq.s32.totalorder %s29, 1
    %p414 = por %p412, %p413
    %p416 = scmp.ne.s32.totalorder %s399, %s415
    %p417 = scmp.eq.s32.totalorder %s29, 0
    %p418 = por %p416, %p417
    %p419 = scmp.le.s32.totalorder 1, %s23
    %p420 = scmp.lt.s32.totalorder %s23, 3
    %p421 = pnand %p419, %p420
    %p422 = pneg %p421
    // Predicated region
    $region9: #{vit_encoder_forward.1} parent=5 // pred_check
      _
    $region10: #{vit_encoder_forward.1} parent=5 // pred_check_branch
      %424 = sbr.rel (%p421) target = $region12
    $region11: #{vit_encoder_forward.1} parent=5 // pred_region
      %s425 = ssub.s32 %s23, 1
      // Predicated region
      $region13: #{vit_encoder_forward.1} parent=11 // pred_check
        %p426 = pneg %p70
      $region14: #{vit_encoder_forward.1} parent=11 // pred_check_branch
        %428 = sbr.rel (%p426) target = $region16
      $region15: #{vit_encoder_forward.1} parent=11 // pred_region
        _
      $region16: #{vit_encoder_forward.1} parent=11 // pred_fallthru
        _
      // Predicated region
      $region17: #{vit_encoder_forward.1} parent=11 // pred_check
        %p429 = pneg %p91
      $region18: #{vit_encoder_forward.1} parent=11 // pred_check_branch
        %431 = sbr.rel (%p429) target = $region20
      $region19: #{vit_encoder_forward.1} parent=11 // pred_region
        _
      $region20: #{vit_encoder_forward.1} parent=11 // pred_fallthru
        _
      // Predicated region
      $region21: #{vit_encoder_forward.1} parent=11 // pred_check
        %p432 = pneg %p112
      $region22: #{vit_encoder_forward.1} parent=11 // pred_check_branch
        %434 = sbr.rel (%p432) target = $region24
      $region23: #{vit_encoder_forward.1} parent=11 // pred_region
        _
      $region24: #{vit_encoder_forward.1} parent=11 // pred_fallthru
        _
      // Predicated region
      $region25: #{vit_encoder_forward.1} parent=11 // pred_check
        %p435 = pneg %p133
      $region26: #{vit_encoder_forward.1} parent=11 // pred_check_branch
        %437 = sbr.rel (%p435) target = $region28
      $region27: #{vit_encoder_forward.1} parent=11 // pred_region
        _
      $region28: #{vit_encoder_forward.1} parent=11 // pred_fallthru
        _
      // Predicated region
      $region29: #{vit_encoder_forward.1} parent=11 // pred_check
        %p438 = pneg %p154
      $region30: #{vit_encoder_forward.1} parent=11 // pred_check_branch
        %440 = sbr.rel (%p438) target = $region32
      $region31: #{vit_encoder_forward.1} parent=11 // pred_region
        _
      $region32: #{vit_encoder_forward.1} parent=11 // pred_fallthru
        _
      // Predicated region
      $region33: #{vit_encoder_forward.1} parent=11 // pred_check
        %p441 = pneg %p175
      $region34: #{vit_encoder_forward.1} parent=11 // pred_check_branch
        %443 = sbr.rel (%p441) target = $region36
      $region35: #{vit_encoder_forward.1} parent=11 // pred_region
        _
      $region36: #{vit_encoder_forward.1} parent=11 // pred_fallthru
        _
      // Predicated region
      $region37: #{vit_encoder_forward.1} parent=11 // pred_check
        %p444 = pneg %p196
      $region38: #{vit_encoder_forward.1} parent=11 // pred_check_branch
        %446 = sbr.rel (%p444) target = $region40
      $region39: #{vit_encoder_forward.1} parent=11 // pred_region
        _
      $region40: #{vit_encoder_forward.1} parent=11 // pred_fallthru
        _
      // Predicated region
      $region41: #{vit_encoder_forward.1} parent=11 // pred_check
        %p447 = pneg %p217
      $region42: #{vit_encoder_forward.1} parent=11 // pred_check_branch
        %449 = sbr.rel (%p447) target = $region44
      $region43: #{vit_encoder_forward.1} parent=11 // pred_region
        _
      $region44: #{vit_encoder_forward.1} parent=11 // pred_fallthru
        _
      // Predicated region
      $region45: #{vit_encoder_forward.1} parent=11 // pred_check
        %p450 = pneg %p238
      $region46: #{vit_encoder_forward.1} parent=11 // pred_check_branch
        %452 = sbr.rel (%p450) target = $region48
      $region47: #{vit_encoder_forward.1} parent=11 // pred_region
        _
      $region48: #{vit_encoder_forward.1} parent=11 // pred_fallthru
        _
      // Predicated region
      $region49: #{vit_encoder_forward.1} parent=11 // pred_check
        %p453 = pneg %p259
      $region50: #{vit_encoder_forward.1} parent=11 // pred_check_branch
        %455 = sbr.rel (%p453) target = $region52
      $region51: #{vit_encoder_forward.1} parent=11 // pred_region
        _
      $region52: #{vit_encoder_forward.1} parent=11 // pred_fallthru
        _
      // Predicated region
      $region53: #{vit_encoder_forward.1} parent=11 // pred_check
        %p456 = pneg %p280
      $region54: #{vit_encoder_forward.1} parent=11 // pred_check_branch
        %458 = sbr.rel (%p456) target = $region56
      $region55: #{vit_encoder_forward.1} parent=11 // pred_region
        _
      $region56: #{vit_encoder_forward.1} parent=11 // pred_fallthru
        _
      // Predicated region
      $region57: #{vit_encoder_forward.1} parent=11 // pred_check
        %p459 = pneg %p301
      $region58: #{vit_encoder_forward.1} parent=11 // pred_check_branch
        %461 = sbr.rel (%p459) target = $region60
      $region59: #{vit_encoder_forward.1} parent=11 // pred_region
        _
      $region60: #{vit_encoder_forward.1} parent=11 // pred_fallthru
        _
      // Predicated region
      $region61: #{vit_encoder_forward.1} parent=11 // pred_check
        %p462 = pneg %p322
      $region62: #{vit_encoder_forward.1} parent=11 // pred_check_branch
        %464 = sbr.rel (%p462) target = $region64
      $region63: #{vit_encoder_forward.1} parent=11 // pred_region
        _
      $region64: #{vit_encoder_forward.1} parent=11 // pred_fallthru
        _
      // Predicated region
      $region65: #{vit_encoder_forward.1} parent=11 // pred_check
        %p465 = pneg %p343
      $region66: #{vit_encoder_forward.1} parent=11 // pred_check_branch
        %467 = sbr.rel (%p465) target = $region68
      $region67: #{vit_encoder_forward.1} parent=11 // pred_region
        _
      $region68: #{vit_encoder_forward.1} parent=11 // pred_fallthru
        _
      // Predicated region
      $region69: #{vit_encoder_forward.1} parent=11 // pred_check
        %p468 = pneg %p364
      $region70: #{vit_encoder_forward.1} parent=11 // pred_check_branch
        %470 = sbr.rel (%p468) target = $region72
      $region71: #{vit_encoder_forward.1} parent=11 // pred_region
        _
      $region72: #{vit_encoder_forward.1} parent=11 // pred_fallthru
        _
      // Predicated region
      $region73: #{vit_encoder_forward.1} parent=11 // pred_check
        %p471 = pneg %p385
      $region74: #{vit_encoder_forward.1} parent=11 // pred_check_branch
        %473 = sbr.rel (%p471) target = $region76
      $region75: #{vit_encoder_forward.1} parent=11 // pred_region
        _
      $region76: #{vit_encoder_forward.1} parent=11 // pred_fallthru
        _
    $region12: #{vit_encoder_forward.1} parent=5 // pred_fallthru
      _
    %p474 = scmp.lt.s32.totalorder %s23, 2
    // Predicated region
    $region77: #{vit_encoder_forward.1} parent=5 // pred_check
      %p475 = pneg %p474
    $region78: #{vit_encoder_forward.1} parent=5 // pred_check_branch
      %477 = sbr.rel (%p475) target = $region80
    $region79: #{vit_encoder_forward.1} parent=5 // pred_region
      // Predicated region
      $region81: #{vit_encoder_forward.1} parent=79 // pred_check
        %p478 = pneg %p43
      $region82: #{vit_encoder_forward.1} parent=79 // pred_check_branch
        %480 = sbr.rel (%p478) target = $region84
      $region83: #{vit_encoder_forward.1} parent=79 // pred_region
        %p481 = scmp.lt.s32.totalorder %s23, 1
        %s482 = scalar_select %p481, %s23, 1
        %s483 = smul.addr %s482, 2
        %s484 = smul.addr %s483, 8
        %s485 = scalar_lea.vmem %s0, %s484
      $region84: #{vit_encoder_forward.1} parent=79 // pred_fallthru
        _
    $region80: #{vit_encoder_forward.1} parent=5 // pred_fallthru
      _
    %p486 = scmp.le.s32.totalorder 1, %s23
    %p487 = scmp.lt.s32.totalorder %s23, 3
    %p488 = pnand %p486, %p487
    %p489 = pneg %p488
    // Predicated region
    $region85: #{vit_encoder_forward.1} parent=5 // pred_check
      _
    $region86: #{vit_encoder_forward.1} parent=5 // pred_check_branch
      %491 = sbr.rel (%p488) target = $region88
    $region87: #{vit_encoder_forward.1} parent=5 // pred_region
      %s492 = ssub.s32 %s23, 1
      %p493 = scmp.lt.s32.totalorder %s28, 1
      %s494 = scalar_select %p493, %s28, 1
      %s495 = smul.addr %s494, 2
      %s496 = smul.addr %s495, 8
      %s497 = scalar_lea.vmem %s0, %s496
      %p498 = pneg %p49
      %p499 = pneg %p46
      %p500 = pneg %p70
      %p501 = pneg %p67
      %p502 = pneg %p91
      %p503 = pneg %p88
      %p504 = pneg %p112
      %p505 = pneg %p109
      %p506 = pneg %p133
      %p507 = pneg %p130
      %p508 = pneg %p154
      %p509 = pneg %p151
      %p510 = pneg %p175
      %p511 = pneg %p172
      %p512 = pneg %p196
      %p513 = pneg %p193
      %p514 = pneg %p217
      %p515 = pneg %p214
      %p516 = pneg %p238
      %p517 = pneg %p235
      %p518 = pneg %p259
      %p519 = pneg %p256
      %p520 = pneg %p280
      %p521 = pneg %p277
      %p522 = pneg %p301
      %p523 = pneg %p298
      %p524 = pneg %p322
      %p525 = pneg %p319
      %p526 = pneg %p343
      %p527 = pneg %p340
      %p528 = pneg %p364
      %p529 = pneg %p361
      %p530 = pneg %p385
      %p531 = pneg %p382
      %p532 = pneg %p411
      %p533 = pneg %p408
      %p534 = scmp.lt.s32.totalorder %s28, 1
      %s535 = scalar_select %p534, %s28, 1
      %s536 = smul.addr %s535, 8
      %s537 = scalar_lea.vmem %s17, %s536
      %p538 = scmp.lt.s32.totalorder %s28, 1
      %s539 = scalar_select %p538, %s28, 1
      %s540 = smul.addr %s539, 2
      %s541 = smul.addr %s540, 8
      %s542 = scalar_lea.vmem %s0, %s541
      %p543 = scmp.lt.s32.totalorder %s28, 1
      %s544 = scalar_select %p543, %s28, 1
      %s545 = smul.addr %s544, 8
      %s546 = scalar_lea.vmem %s17, %s545
      %v547 = vld [vmem:[%s542] sm:$0x1f]
      %v548 = vld [vmem:[%s542 + $0x8] sm:$0x1f]
      %v549 = vld [vmem:[%s1] sm:$0xff]
      %v550 = vld [vmem:[%s1 + $0x8] sm:$0xff]
      %v551 = vld [vmem:[%s1 + $0x10] sm:$0xff]
      %v552 = vld [vmem:[%s1 + $0x18] sm:$0xff]
      %v553 = vld [vmem:[%s1 + $0x20] sm:$0xff]
      %v554 = vld [vmem:[%s1 + $0x28] sm:$0xff]
      %v555 = vld [vmem:[%s1 + $0x30] sm:$0xff]
      %v556 = vld [vmem:[%s1 + $0x38] sm:$0xff]
      %v557 = vld [vmem:[%s1 + $0x40] sm:$0xff]
      %v558 = vld [vmem:[%s1 + $0x48] sm:$0xff]
      %v559 = vld [vmem:[%s1 + $0x50] sm:$0xff]
      %v560 = vld [vmem:[%s1 + $0x58] sm:$0xff]
      %v561 = vld [vmem:[%s1 + $0x60] sm:$0xff]
      %v562 = vld [vmem:[%s1 + $0x68] sm:$0xff]
      %v563 = vld [vmem:[%s1 + $0x70] sm:$0xff]
      %v564 = vld [vmem:[%s1 + $0x78] sm:$0xff]
      %v565 = vld [vmem:[%s1 + $0x80] sm:$0xff]
      %v566 = vld [vmem:[%s1 + $0x88] sm:$0xff]
      %v567 = vld [vmem:[%s1 + $0x90] sm:$0xff]
      %v568 = vld [vmem:[%s1 + $0x98] sm:$0xff]
      %v569 = vld [vmem:[%s1 + $0xa0] sm:$0xff]
      %v570 = vld [vmem:[%s1 + $0xa8] sm:$0xff]
      %v571 = vld [vmem:[%s1 + $0xb0] sm:$0xff]
      %v572 = vld [vmem:[%s1 + $0xb8] sm:$0xff]
      %v573 = vld [vmem:[%s2] sm:$0x1f]
      %vm574 = vcmask 523264
      %v576 = vsel %vm574, %v548, 0
      %578 = vmatprep.subr.mxu0 0.0
      %579 = vmatpush1.msra.mxu0 %v564
      %580 = vmatprep.subr.mxu0 0.0
      %581 = vmatpush1.msra.mxu0 %v563
      %582 = vmatprep.subr.mxu0 0.0
      %583 = vmatpush1.msra.mxu0 %v562
      %584 = vmatprep.subr.mxu0 0.0
      %585 = vmatpush1.msra.mxu0 %v561
      %586 = vmatprep.subr.mxu0 0.0
      %587 = vmatpush1.msra.mxu0 %v560
      %588 = vmatprep.subr.mxu0 0.0
      %589 = vmatpush1.msra.mxu0 %v559
      %590 = vmatprep.subr.mxu0 0.0
      %591 = vmatpush1.msra.mxu0 %v558
      %592 = vmatprep.subr.mxu0 0.0
      %593 = vmatpush1.msra.mxu0 %v557
      %594 = vmatprep.subr.mxu0 0.0
      %595 = vmatpush1.msra.mxu0 %v556
      %596 = vmatprep.subr.mxu0 0.0
      %597 = vmatpush1.msra.mxu0 %v555
      %598 = vmatprep.subr.mxu0 0.0
      %599 = vmatpush1.msra.mxu0 %v554
      %600 = vmatprep.subr.mxu0 0.0
      %601 = vmatpush1.msra.mxu0 %v553
      %602 = vmatprep.subr.mxu0 0.0
      %603 = vmatpush1.msra.mxu0 %v552
      %604 = vmatprep.subr.mxu0 0.0
      %605 = vmatpush1.msra.mxu0 %v551
      %606 = vmatprep.subr.mxu0 0.0
      %607 = vmatpush1.msra.mxu0 %v550
      %608 = vmatprep.subr.mxu0 0.0
      %609 = vmatpush1.msra.mxu0 %v549
      %610 = vmatprep.subr.mxu0 0.0
      %611 = vmatpush2.msra.mxu0 0.0
      %612 = vmatprep.subr.mxu0 0.0
      %613 = vmatpush2.msra.mxu0 0.0
      %614 = vmatprep.subr.mxu0 0.0
      %615 = vmatpush2.msra.mxu0 0.0
      %616 = vmatprep.subr.mxu0 0.0
      %617 = vmatpush2.msra.mxu0 0.0
      %618 = vmatprep.subr.mxu0 0.0
      %619 = vmatpush2.msra.mxu0 0.0
      %620 = vmatprep.subr.mxu0 0.0
      %621 = vmatpush2.msra.mxu0 0.0
      %622 = vmatprep.subr.mxu0 0.0
      %623 = vmatpush2.msra.mxu0 0.0
      %624 = vmatprep.subr.mxu0 0.0
      %625 = vmatpush2.msra.mxu0 0.0
      %626 = vmatprep.subr.mxu0 0.0
      %627 = vmatpush2.msra.mxu0 %v572
      %628 = vmatprep.subr.mxu0 0.0
      %629 = vmatpush2.msra.mxu0 %v571
      %630 = vmatprep.subr.mxu0 0.0
      %631 = vmatpush2.msra.mxu0 %v570
      %632 = vmatprep.subr.mxu0 0.0
      %633 = vmatpush2.msra.mxu0 %v569
      %634 = vmatprep.subr.mxu0 0.0
      %635 = vmatpush2.msra.mxu0 %v568
      %636 = vmatprep.subr.mxu0 0.0
      %637 = vmatpush2.msra.mxu0 %v567
      %638 = vmatprep.subr.mxu0 0.0
      %639 = vmatpush2.msra.mxu0 %v566
      %640 = vmatprep.subr.mxu0 0.0
      %641 = vmatpush2.msra.mxu0 %v565
      %642 = vmatprep.mubr.f32.mxu0 %v576
      %643 = vmatmul.mubr.f32.gmra.mxu0 %v547
      %v644 = vpop.f32.mrf.mxu0
      %v645 = vadd.f32 %v573, %v644
      %v646 = vpop.f32.mrf.mxu0
      %647 = vdwg.mxu0
      %v648 = vld [vmem:[%s3] sm:$0x1]
      %v649 = vld [vmem:[%s4] sm:$0x1]
      %vm650 = vcmask 258048
      %v651 = vsel %vm650, %v645, 0.0
      %652 = vadd.xlane.f32.xlu0 %v651
      %v653 = vpop.xlane.xlu0 %652
      %v654 = vrcp.pop 32.0
      %v655 = vmul.f32 %v653, %v654
      %v656 = vsub.f32 %v645, %v655
      %v657 = vmul.f32 %v656, %v656
      %v658 = vsel %vm650, %v657, 0.0
      %659 = vadd.xlane.f32.xlu0 %v658
      %v660 = vpop.xlane.xlu0 %659
      %v661 = vmul.f32 %v660, %v654
      %v662 = vadd.f32 %v661, 1e-06
      %v663 = vrsqrt.pop %v662
      %v664 = vmul.f32 %v656, %v663
      %v666 = vlaneseq
      %v667 = vshrl.u32 %v666, 7
      %v668 = vsub.s32 0, %v667
      %v669 = vrot.slane %v648, %v668
      %v671 = vmul.f32 %v664, %v669
      %v673 = vlaneseq
      %v674 = vshrl.u32 %v673, 7
      %v675 = vsub.s32 0, %v674
      %v676 = vrot.slane %v649, %v675
      %v678 = vadd.f32 %v671, %v676
      %v679 = vld [vmem:[%s5] sm:$0xff]
      %v680 = vld [vmem:[%s5 + $0x8] sm:$0xff]
      %v681 = vld [vmem:[%s5 + $0x10] sm:$0xff]
      %v682 = vld [vmem:[%s5 + $0x18] sm:$0xff]
      %v683 = vld [vmem:[%s6] sm:$0x1]
      %v685 = vlaneseq
      %v686 = vshrl.u32 %v685, 7
      %v687 = vsub.s32 0, %v686
      %v688 = vrot.slane %v683, %v687
      %vm690 = vcmask 261120
      %v692 = vsel %vm690, %v678, 0
      %694 = vmatprep.subr.mxu0 0.0
      %695 = vmatpush1.msra.mxu0 0.0
      %696 = vmatprep.subr.mxu0 0.0
      %697 = vmatpush1.msra.mxu0 0.0
      %698 = vmatprep.subr.mxu0 0.0
      %699 = vmatpush1.msra.mxu0 0.0
      %700 = vmatprep.subr.mxu0 0.0
      %701 = vmatpush1.msra.mxu0 0.0
      %702 = vmatprep.subr.mxu0 0.0
      %703 = vmatpush1.msra.mxu0 0.0
      %704 = vmatprep.subr.mxu0 0.0
      %705 = vmatpush1.msra.mxu0 0.0
      %706 = vmatprep.subr.mxu0 0.0
      %707 = vmatpush1.msra.mxu0 0.0
      %708 = vmatprep.subr.mxu0 0.0
      %709 = vmatpush1.msra.mxu0 0.0
      %710 = vmatprep.subr.mxu0 0.0
      %711 = vmatpush1.msra.mxu0 0.0
      %712 = vmatprep.subr.mxu0 0.0
      %713 = vmatpush1.msra.mxu0 0.0
      %714 = vmatprep.subr.mxu0 0.0
      %715 = vmatpush1.msra.mxu0 0.0
      %716 = vmatprep.subr.mxu0 0.0
      %717 = vmatpush1.msra.mxu0 0.0
      %718 = vmatprep.subr.mxu0 0.0
      %719 = vmatpush1.msra.mxu0 %v682
      %720 = vmatprep.subr.mxu0 0.0
      %721 = vmatpush1.msra.mxu0 %v681
      %722 = vmatprep.subr.mxu0 0.0
      %723 = vmatpush1.msra.mxu0 %v680
      %724 = vmatprep.subr.mxu0 0.0
      %725 = vmatpush1.msra.mxu0 %v679
      %726 = vmatprep.subr.mxu0 0.0
      %727 = vmatpush2.msra.mxu0 0.0
      %728 = vmatprep.subr.mxu0 0.0
      %729 = vmatpush2.msra.mxu0 0.0
      %730 = vmatprep.subr.mxu0 0.0
      %731 = vmatpush2.msra.mxu0 0.0
      %732 = vmatprep.subr.mxu0 0.0
      %733 = vmatpush2.msra.mxu0 0.0
      %734 = vmatprep.subr.mxu0 0.0
      %735 = vmatpush2.msra.mxu0 0.0
      %736 = vmatprep.subr.mxu0 0.0
      %737 = vmatpush2.msra.mxu0 0.0
      %738 = vmatprep.subr.mxu0 0.0
      %739 = vmatpush2.msra.mxu0 0.0
      %740 = vmatprep.subr.mxu0 0.0
      %741 = vmatpush2.msra.mxu0 0.0
      %742 = vmatprep.subr.mxu0 0.0
      %743 = vmatpush2.msra.mxu0 0.0
      %744 = vmatprep.subr.mxu0 0.0
      %745 = vmatpush2.msra.mxu0 0.0
      %746 = vmatprep.subr.mxu0 0.0
      %747 = vmatpush2.msra.mxu0 0.0
      %748 = vmatprep.subr.mxu0 0.0
      %749 = vmatpush2.msra.mxu0 0.0
      %750 = vmatprep.subr.mxu0 0.0
      %751 = vmatpush2.msra.mxu0 0.0
      %752 = vmatprep.subr.mxu0 0.0
      %753 = vmatpush2.msra.mxu0 0.0
      %754 = vmatprep.subr.mxu0 0.0
      %755 = vmatpush2.msra.mxu0 0.0
      %756 = vmatprep.subr.mxu0 0.0
      %757 = vmatpush2.msra.mxu0 0.0
      %758 = vmatprep.mubr.f32.mxu0 0.0
      %759 = vmatmul.mubr.f32.gmra.mxu0 %v692
      %v760 = vpop.f32.mrf.mxu0
      %v761 = vadd.f32 %v688, %v760
      %v762 = vpop.f32.mrf.mxu0
      %763 = vdwg.mxu0
      %765 = vrot.lane.b32.xlu0 %v761, 96
      %v766 = vpop.permute.xlu0 %765
      %vm767 = vcmask 64512
      %v768 = vsel %vm767, %v761, 0
      %v770 = vsel %vm767, %v766, 0
      %772 = vmatprep.subr.mxu0 0.0
      %773 = vmatpush1.xpose.msra.mxu0 0.0
      %774 = vmatprep.subr.mxu0 0.0
      %775 = vmatpush1.xpose.msra.mxu0 0.0
      %776 = vmatprep.subr.mxu0 0.0
      %777 = vmatpush1.xpose.msra.mxu0 0.0
      %778 = vmatprep.subr.mxu0 0.0
      %779 = vmatpush1.xpose.msra.mxu0 0.0
      %780 = vmatprep.subr.mxu0 0.0
      %781 = vmatpush1.xpose.msra.mxu0 0.0
      %782 = vmatprep.subr.mxu0 0.0
      %783 = vmatpush1.xpose.msra.mxu0 0.0
      %784 = vmatprep.subr.mxu0 0.0
      %785 = vmatpush1.xpose.msra.mxu0 0.0
      %786 = vmatprep.subr.mxu0 0.0
      %787 = vmatpush1.xpose.msra.mxu0 0.0
      %788 = vmatprep.subr.mxu0 0.0
      %789 = vmatpush1.xpose.msra.mxu0 0.0
      %790 = vmatprep.subr.mxu0 0.0
      %791 = vmatpush1.xpose.msra.mxu0 0.0
      %792 = vmatprep.subr.mxu0 0.0
      %793 = vmatpush1.xpose.msra.mxu0 0.0
      %794 = vmatprep.subr.mxu0 0.0
      %795 = vmatpush1.xpose.msra.mxu0 0.0
      %796 = vmatprep.subr.mxu0 0.0
      %797 = vmatpush1.xpose.msra.mxu0 0.0
      %798 = vmatprep.subr.mxu0 0.0
      %799 = vmatpush1.xpose.msra.mxu0 0.0
      %800 = vmatprep.subr.mxu0 0.0
      %801 = vmatpush1.xpose.msra.mxu0 0.0
      %802 = vmatprep.subr.mxu0 0.0
      %803 = vmatpush1.xpose.msra.mxu0 %v770
      %804 = vmatprep.subr.mxu0 0.0
      %805 = vmatpush2.xpose.msra.mxu0 0.0
      %806 = vmatprep.subr.mxu0 0.0
      %807 = vmatpush2.xpose.msra.mxu0 0.0
      %808 = vmatprep.subr.mxu0 0.0
      %809 = vmatpush2.xpose.msra.mxu0 0.0
      %810 = vmatprep.subr.mxu0 0.0
      %811 = vmatpush2.xpose.msra.mxu0 0.0
      %812 = vmatprep.subr.mxu0 0.0
      %813 = vmatpush2.xpose.msra.mxu0 0.0
      %814 = vmatprep.subr.mxu0 0.0
      %815 = vmatpush2.xpose.msra.mxu0 0.0
      %816 = vmatprep.subr.mxu0 0.0
      %817 = vmatpush2.xpose.msra.mxu0 0.0
      %818 = vmatprep.subr.mxu0 0.0
      %819 = vmatpush2.xpose.msra.mxu0 0.0
      %820 = vmatprep.subr.mxu0 0.0
      %821 = vmatpush2.xpose.msra.mxu0 0.0
      %822 = vmatprep.subr.mxu0 0.0
      %823 = vmatpush2.xpose.msra.mxu0 0.0
      %824 = vmatprep.subr.mxu0 0.0
      %825 = vmatpush2.xpose.msra.mxu0 0.0
      %826 = vmatprep.subr.mxu0 0.0
      %827 = vmatpush2.xpose.msra.mxu0 0.0
      %828 = vmatprep.subr.mxu0 0.0
      %829 = vmatpush2.xpose.msra.mxu0 0.0
      %830 = vmatprep.subr.mxu0 0.0
      %831 = vmatpush2.xpose.msra.mxu0 0.0
      %832 = vmatprep.subr.mxu0 0.0
      %833 = vmatpush2.xpose.msra.mxu0 0.0
      %834 = vmatprep.subr.mxu0 0.0
      %835 = vmatpush2.xpose.msra.mxu0 0.0
      %836 = vmatprep.mubr.f32.mxu0 0.0
      %837 = vmatmul.mubr.f32.gmra.mxu0 %v768
      %v838 = vpop.f32.mrf.mxu0
      %v839 = vadd.f32 0.0, %v838
      %v840 = vpop.f32.mrf.mxu0
      %841 = vdwg.mxu0
      %v842 = vmul.f32 %v839, 0.35355338
      %vm843 = vcmask 36864
      %v844 = vsel %vm843, %v842, -inf
      %845 = vmax.xlane.f32.xlu0 %v844
      %v846 = vpop.xlane.xlu0 %845
      %v847 = vsub.f32 %v842, %v846
      %v848 = vmul.f32 %v847, 1.442695
      %v849 = vpow.pop %v848
      %v850 = vsel %vm843, %v849, 0.0
      %851 = vadd.xlane.f32.xlu0 %v850
      %v852 = vpop.xlane.xlu0 %851
      %v853 = vrcp.pop %v852
      %v854 = vmul.f32 %v849, %v853
      %855 = vrot.lane.b32.xlu0 %v761, 64
      %v856 = vpop.permute.xlu0 %855
      %vm857 = vcmask 39936
      %v859 = vsel %vm857, %v854, 0
      %vm861 = vcmask 1044480
      %v862 = vsel %vm861, %v856, 0
      %864 = vmatprep.subr.mxu0 0.0
      %865 = vmatpush1.msra.mxu0 0.0
      %866 = vmatprep.subr.mxu0 0.0
      %867 = vmatpush1.msra.mxu0 0.0
      %868 = vmatprep.subr.mxu0 0.0
      %869 = vmatpush1.msra.mxu0 0.0
      %870 = vmatprep.subr.mxu0 0.0
      %871 = vmatpush1.msra.mxu0 0.0
      %872 = vmatprep.subr.mxu0 0.0
      %873 = vmatpush1.msra.mxu0 0.0
      %874 = vmatprep.subr.mxu0 0.0
      %875 = vmatpush1.msra.mxu0 0.0
      %876 = vmatprep.subr.mxu0 0.0
      %877 = vmatpush1.msra.mxu0 0.0
      %878 = vmatprep.subr.mxu0 0.0
      %879 = vmatpush1.msra.mxu0 0.0
      %880 = vmatprep.subr.mxu0 0.0
      %881 = vmatpush1.msra.mxu0 0.0
      %882 = vmatprep.subr.mxu0 0.0
      %883 = vmatpush1.msra.mxu0 0.0
      %884 = vmatprep.subr.mxu0 0.0
      %885 = vmatpush1.msra.mxu0 0.0
      %886 = vmatprep.subr.mxu0 0.0
      %887 = vmatpush1.msra.mxu0 0.0
      %888 = vmatprep.subr.mxu0 0.0
      %889 = vmatpush1.msra.mxu0 0.0
      %890 = vmatprep.subr.mxu0 0.0
      %891 = vmatpush1.msra.mxu0 0.0
      %892 = vmatprep.subr.mxu0 0.0
      %893 = vmatpush1.msra.mxu0 0.0
      %894 = vmatprep.subr.mxu0 0.0
      %895 = vmatpush1.msra.mxu0 %v862
      %896 = vmatprep.subr.mxu0 0.0
      %897 = vmatpush2.msra.mxu0 0.0
      %898 = vmatprep.subr.mxu0 0.0
      %899 = vmatpush2.msra.mxu0 0.0
      %900 = vmatprep.subr.mxu0 0.0
      %901 = vmatpush2.msra.mxu0 0.0
      %902 = vmatprep.subr.mxu0 0.0
      %903 = vmatpush2.msra.mxu0 0.0
      %904 = vmatprep.subr.mxu0 0.0
      %905 = vmatpush2.msra.mxu0 0.0
      %906 = vmatprep.subr.mxu0 0.0
      %907 = vmatpush2.msra.mxu0 0.0
      %908 = vmatprep.subr.mxu0 0.0
      %909 = vmatpush2.msra.mxu0 0.0
      %910 = vmatprep.subr.mxu0 0.0
      %911 = vmatpush2.msra.mxu0 0.0
      %912 = vmatprep.subr.mxu0 0.0
      %913 = vmatpush2.msra.mxu0 0.0
      %914 = vmatprep.subr.mxu0 0.0
      %915 = vmatpush2.msra.mxu0 0.0
      %916 = vmatprep.subr.mxu0 0.0
      %917 = vmatpush2.msra.mxu0 0.0
      %918 = vmatprep.subr.mxu0 0.0
      %919 = vmatpush2.msra.mxu0 0.0
      %920 = vmatprep.subr.mxu0 0.0
      %921 = vmatpush2.msra.mxu0 0.0
      %922 = vmatprep.subr.mxu0 0.0
      %923 = vmatpush2.msra.mxu0 0.0
      %924 = vmatprep.subr.mxu0 0.0
      %925 = vmatpush2.msra.mxu0 0.0
      %926 = vmatprep.subr.mxu0 0.0
      %927 = vmatpush2.msra.mxu0 0.0
      %928 = vmatprep.mubr.f32.mxu0 0.0
      %929 = vmatmul.mubr.f32.gmra.mxu0 %v859
      %v930 = vpop.f32.mrf.mxu0
      %v931 = vadd.f32 0.0, %v930
      %v932 = vpop.f32.mrf.mxu0
      %933 = vdwg.mxu0
      %934 = vrot.lane.b32.xlu0 %v761, 120
      %v935 = vpop.permute.xlu0 %934
      %936 = vrot.lane.b32.xlu0 %v761, 88
      %v937 = vpop.permute.xlu0 %936
      %v938 = vsel %vm767, %v935, 0
      %v940 = vsel %vm767, %v937, 0
      %942 = vmatprep.subr.mxu0 0.0
      %943 = vmatpush1.xpose.msra.mxu0 0.0
      %944 = vmatprep.subr.mxu0 0.0
      %945 = vmatpush1.xpose.msra.mxu0 0.0
      %946 = vmatprep.subr.mxu0 0.0
      %947 = vmatpush1.xpose.msra.mxu0 0.0
      %948 = vmatprep.subr.mxu0 0.0
      %949 = vmatpush1.xpose.msra.mxu0 0.0
      %950 = vmatprep.subr.mxu0 0.0
      %951 = vmatpush1.xpose.msra.mxu0 0.0
      %952 = vmatprep.subr.mxu0 0.0
      %953 = vmatpush1.xpose.msra.mxu0 0.0
      %954 = vmatprep.subr.mxu0 0.0
      %955 = vmatpush1.xpose.msra.mxu0 0.0
      %956 = vmatprep.subr.mxu0 0.0
      %957 = vmatpush1.xpose.msra.mxu0 0.0
      %958 = vmatprep.subr.mxu0 0.0
      %959 = vmatpush1.xpose.msra.mxu0 0.0
      %960 = vmatprep.subr.mxu0 0.0
      %961 = vmatpush1.xpose.msra.mxu0 0.0
      %962 = vmatprep.subr.mxu0 0.0
      %963 = vmatpush1.xpose.msra.mxu0 0.0
      %964 = vmatprep.subr.mxu0 0.0
      %965 = vmatpush1.xpose.msra.mxu0 0.0
      %966 = vmatprep.subr.mxu0 0.0
      %967 = vmatpush1.xpose.msra.mxu0 0.0
      %968 = vmatprep.subr.mxu0 0.0
      %969 = vmatpush1.xpose.msra.mxu0 0.0
      %970 = vmatprep.subr.mxu0 0.0
      %971 = vmatpush1.xpose.msra.mxu0 0.0
      %972 = vmatprep.subr.mxu0 0.0
      %973 = vmatpush1.xpose.msra.mxu0 %v940
      %974 = vmatprep.subr.mxu0 0.0
      %975 = vmatpush2.xpose.msra.mxu0 0.0
      %976 = vmatprep.subr.mxu0 0.0
      %977 = vmatpush2.xpose.msra.mxu0 0.0
      %978 = vmatprep.subr.mxu0 0.0
      %979 = vmatpush2.xpose.msra.mxu0 0.0
      %980 = vmatprep.subr.mxu0 0.0
      %981 = vmatpush2.xpose.msra.mxu0 0.0
      %982 = vmatprep.subr.mxu0 0.0
      %983 = vmatpush2.xpose.msra.mxu0 0.0
      %984 = vmatprep.subr.mxu0 0.0
      %985 = vmatpush2.xpose.msra.mxu0 0.0
      %986 = vmatprep.subr.mxu0 0.0
      %987 = vmatpush2.xpose.msra.mxu0 0.0
      %988 = vmatprep.subr.mxu0 0.0
      %989 = vmatpush2.xpose.msra.mxu0 0.0
      %990 = vmatprep.subr.mxu0 0.0
      %991 = vmatpush2.xpose.msra.mxu0 0.0
      %992 = vmatprep.subr.mxu0 0.0
      %993 = vmatpush2.xpose.msra.mxu0 0.0
      %994 = vmatprep.subr.mxu0 0.0
      %995 = vmatpush2.xpose.msra.mxu0 0.0
      %996 = vmatprep.subr.mxu0 0.0
      %997 = vmatpush2.xpose.msra.mxu0 0.0
      %998 = vmatprep.subr.mxu0 0.0
      %999 = vmatpush2.xpose.msra.mxu0 0.0
      %1000 = vmatprep.subr.mxu0 0.0
      %1001 = vmatpush2.xpose.msra.mxu0 0.0
      %1002 = vmatprep.subr.mxu0 0.0
      %1003 = vmatpush2.xpose.msra.mxu0 0.0
      %1004 = vmatprep.subr.mxu0 0.0
      %1005 = vmatpush2.xpose.msra.mxu0 0.0
      %1006 = vmatprep.mubr.f32.mxu0 0.0
      %1007 = vmatmul.mubr.f32.gmra.mxu0 %v938
      %v1008 = vpop.f32.mrf.mxu0
      %v1009 = vadd.f32 0.0, %v1008
      %v1010 = vpop.f32.mrf.mxu0
      %1011 = vdwg.mxu0
      %v1012 = vmul.f32 %v1009, 0.35355338
      %v1013 = vsel %vm843, %v1012, -inf
      %1014 = vmax.xlane.f32.xlu0 %v1013
      %v1015 = vpop.xlane.xlu0 %1014
      %v1016 = vsub.f32 %v1012, %v1015
      %v1017 = vmul.f32 %v1016, 1.442695
      %v1018 = vpow.pop %v1017
      %v1019 = vsel %vm843, %v1018, 0.0
      %1020 = vadd.xlane.f32.xlu0 %v1019
      %v1021 = vpop.xlane.xlu0 %1020
      %v1022 = vrcp.pop %v1021
      %v1023 = vmul.f32 %v1018, %v1022
      %1024 = vrot.lane.b32.xlu0 %v761, 56
      %v1025 = vpop.permute.xlu0 %1024
      %v1027 = vsel %vm857, %v1023, 0
      %v1029 = vsel %vm861, %v1025, 0
      %1031 = vmatprep.subr.mxu0 0.0
      %1032 = vmatpush1.msra.mxu0 0.0
      %1033 = vmatprep.subr.mxu0 0.0
      %1034 = vmatpush1.msra.mxu0 0.0
      %1035 = vmatprep.subr.mxu0 0.0
      %1036 = vmatpush1.msra.mxu0 0.0
      %1037 = vmatprep.subr.mxu0 0.0
      %1038 = vmatpush1.msra.mxu0 0.0
      %1039 = vmatprep.subr.mxu0 0.0
      %1040 = vmatpush1.msra.mxu0 0.0
      %1041 = vmatprep.subr.mxu0 0.0
      %1042 = vmatpush1.msra.mxu0 0.0
      %1043 = vmatprep.subr.mxu0 0.0
      %1044 = vmatpush1.msra.mxu0 0.0
      %1045 = vmatprep.subr.mxu0 0.0
      %1046 = vmatpush1.msra.mxu0 0.0
      %1047 = vmatprep.subr.mxu0 0.0
      %1048 = vmatpush1.msra.mxu0 0.0
      %1049 = vmatprep.subr.mxu0 0.0
      %1050 = vmatpush1.msra.mxu0 0.0
      %1051 = vmatprep.subr.mxu0 0.0
      %1052 = vmatpush1.msra.mxu0 0.0
      %1053 = vmatprep.subr.mxu0 0.0
      %1054 = vmatpush1.msra.mxu0 0.0
      %1055 = vmatprep.subr.mxu0 0.0
      %1056 = vmatpush1.msra.mxu0 0.0
      %1057 = vmatprep.subr.mxu0 0.0
      %1058 = vmatpush1.msra.mxu0 0.0
      %1059 = vmatprep.subr.mxu0 0.0
      %1060 = vmatpush1.msra.mxu0 0.0
      %1061 = vmatprep.subr.mxu0 0.0
      %1062 = vmatpush1.msra.mxu0 %v1029
      %1063 = vmatprep.subr.mxu0 0.0
      %1064 = vmatpush2.msra.mxu0 0.0
      %1065 = vmatprep.subr.mxu0 0.0
      %1066 = vmatpush2.msra.mxu0 0.0
      %1067 = vmatprep.subr.mxu0 0.0
      %1068 = vmatpush2.msra.mxu0 0.0
      %1069 = vmatprep.subr.mxu0 0.0
      %1070 = vmatpush2.msra.mxu0 0.0
      %1071 = vmatprep.subr.mxu0 0.0
      %1072 = vmatpush2.msra.mxu0 0.0
      %1073 = vmatprep.subr.mxu0 0.0
      %1074 = vmatpush2.msra.mxu0 0.0
      %1075 = vmatprep.subr.mxu0 0.0
      %1076 = vmatpush2.msra.mxu0 0.0
      %1077 = vmatprep.subr.mxu0 0.0
      %1078 = vmatpush2.msra.mxu0 0.0
      %1079 = vmatprep.subr.mxu0 0.0
      %1080 = vmatpush2.msra.mxu0 0.0
      %1081 = vmatprep.subr.mxu0 0.0
      %1082 = vmatpush2.msra.mxu0 0.0
      %1083 = vmatprep.subr.mxu0 0.0
      %1084 = vmatpush2.msra.mxu0 0.0
      %1085 = vmatprep.subr.mxu0 0.0
      %1086 = vmatpush2.msra.mxu0 0.0
      %1087 = vmatprep.subr.mxu0 0.0
      %1088 = vmatpush2.msra.mxu0 0.0
      %1089 = vmatprep.subr.mxu0 0.0
      %1090 = vmatpush2.msra.mxu0 0.0
      %1091 = vmatprep.subr.mxu0 0.0
      %1092 = vmatpush2.msra.mxu0 0.0
      %1093 = vmatprep.subr.mxu0 0.0
      %1094 = vmatpush2.msra.mxu0 0.0
      %1095 = vmatprep.mubr.f32.mxu0 0.0
      %1096 = vmatmul.mubr.f32.gmra.mxu0 %v1027
      %v1097 = vpop.f32.mrf.mxu0
      %v1098 = vadd.f32 0.0, %v1097
      %v1099 = vpop.f32.mrf.mxu0
      %1100 = vdwg.mxu0
      %1101 = vrot.lane.b32.xlu0 %v761, 112
      %v1102 = vpop.permute.xlu0 %1101
      %1103 = vrot.lane.b32.xlu0 %v761, 80
      %v1104 = vpop.permute.xlu0 %1103
      %v1105 = vsel %vm767, %v1102, 0
      %v1107 = vsel %vm767, %v1104, 0
      %1109 = vmatprep.subr.mxu0 0.0
      %1110 = vmatpush1.xpose.msra.mxu0 0.0
      %1111 = vmatprep.subr.mxu0 0.0
      %1112 = vmatpush1.xpose.msra.mxu0 0.0
      %1113 = vmatprep.subr.mxu0 0.0
      %1114 = vmatpush1.xpose.msra.mxu0 0.0
      %1115 = vmatprep.subr.mxu0 0.0
      %1116 = vmatpush1.xpose.msra.mxu0 0.0
      %1117 = vmatprep.subr.mxu0 0.0
      %1118 = vmatpush1.xpose.msra.mxu0 0.0
      %1119 = vmatprep.subr.mxu0 0.0
      %1120 = vmatpush1.xpose.msra.mxu0 0.0
      %1121 = vmatprep.subr.mxu0 0.0
      %1122 = vmatpush1.xpose.msra.mxu0 0.0
      %1123 = vmatprep.subr.mxu0 0.0
      %1124 = vmatpush1.xpose.msra.mxu0 0.0
      %1125 = vmatprep.subr.mxu0 0.0
      %1126 = vmatpush1.xpose.msra.mxu0 0.0
      %1127 = vmatprep.subr.mxu0 0.0
      %1128 = vmatpush1.xpose.msra.mxu0 0.0
      %1129 = vmatprep.subr.mxu0 0.0
      %1130 = vmatpush1.xpose.msra.mxu0 0.0
      %1131 = vmatprep.subr.mxu0 0.0
      %1132 = vmatpush1.xpose.msra.mxu0 0.0
      %1133 = vmatprep.subr.mxu0 0.0
      %1134 = vmatpush1.xpose.msra.mxu0 0.0
      %1135 = vmatprep.subr.mxu0 0.0
      %1136 = vmatpush1.xpose.msra.mxu0 0.0
      %1137 = vmatprep.subr.mxu0 0.0
      %1138 = vmatpush1.xpose.msra.mxu0 0.0
      %1139 = vmatprep.subr.mxu0 0.0
      %1140 = vmatpush1.xpose.msra.mxu0 %v1107
      %1141 = vmatprep.subr.mxu0 0.0
      %1142 = vmatpush2.xpose.msra.mxu0 0.0
      %1143 = vmatprep.subr.mxu0 0.0
      %1144 = vmatpush2.xpose.msra.mxu0 0.0
      %1145 = vmatprep.subr.mxu0 0.0
      %1146 = vmatpush2.xpose.msra.mxu0 0.0
      %1147 = vmatprep.subr.mxu0 0.0
      %1148 = vmatpush2.xpose.msra.mxu0 0.0
      %1149 = vmatprep.subr.mxu0 0.0
      %1150 = vmatpush2.xpose.msra.mxu0 0.0
      %1151 = vmatprep.subr.mxu0 0.0
      %1152 = vmatpush2.xpose.msra.mxu0 0.0
      %1153 = vmatprep.subr.mxu0 0.0
      %1154 = vmatpush2.xpose.msra.mxu0 0.0
      %1155 = vmatprep.subr.mxu0 0.0
      %1156 = vmatpush2.xpose.msra.mxu0 0.0
      %1157 = vmatprep.subr.mxu0 0.0
      %1158 = vmatpush2.xpose.msra.mxu0 0.0
      %1159 = vmatprep.subr.mxu0 0.0
      %1160 = vmatpush2.xpose.msra.mxu0 0.0
      %1161 = vmatprep.subr.mxu0 0.0
      %1162 = vmatpush2.xpose.msra.mxu0 0.0
      %1163 = vmatprep.subr.mxu0 0.0
      %1164 = vmatpush2.xpose.msra.mxu0 0.0
      %1165 = vmatprep.subr.mxu0 0.0
      %1166 = vmatpush2.xpose.msra.mxu0 0.0
      %1167 = vmatprep.subr.mxu0 0.0
      %1168 = vmatpush2.xpose.msra.mxu0 0.0
      %1169 = vmatprep.subr.mxu0 0.0
      %1170 = vmatpush2.xpose.msra.mxu0 0.0
      %1171 = vmatprep.subr.mxu0 0.0
      %1172 = vmatpush2.xpose.msra.mxu0 0.0
      %1173 = vmatprep.mubr.f32.mxu0 0.0
      %1174 = vmatmul.mubr.f32.gmra.mxu0 %v1105
      %v1175 = vpop.f32.mrf.mxu0
      %v1176 = vadd.f32 0.0, %v1175
      %v1177 = vpop.f32.mrf.mxu0
      %1178 = vdwg.mxu0
      %v1179 = vmul.f32 %v1176, 0.35355338
      %v1180 = vsel %vm843, %v1179, -inf
      %1181 = vmax.xlane.f32.xlu0 %v1180
      %v1182 = vpop.xlane.xlu0 %1181
      %v1183 = vsub.f32 %v1179, %v1182
      %v1184 = vmul.f32 %v1183, 1.442695
      %v1185 = vpow.pop %v1184
      %v1186 = vsel %vm843, %v1185, 0.0
      %1187 = vadd.xlane.f32.xlu0 %v1186
      %v1188 = vpop.xlane.xlu0 %1187
      %v1189 = vrcp.pop %v1188
      %v1190 = vmul.f32 %v1185, %v1189
      %1191 = vrot.lane.b32.xlu0 %v761, 48
      %v1192 = vpop.permute.xlu0 %1191
      %v1194 = vsel %vm857, %v1190, 0
      %v1196 = vsel %vm861, %v1192, 0
      %1198 = vmatprep.subr.mxu0 0.0
      %1199 = vmatpush1.msra.mxu0 0.0
      %1200 = vmatprep.subr.mxu0 0.0
      %1201 = vmatpush1.msra.mxu0 0.0
      %1202 = vmatprep.subr.mxu0 0.0
      %1203 = vmatpush1.msra.mxu0 0.0
      %1204 = vmatprep.subr.mxu0 0.0
      %1205 = vmatpush1.msra.mxu0 0.0
      %1206 = vmatprep.subr.mxu0 0.0
      %1207 = vmatpush1.msra.mxu0 0.0
      %1208 = vmatprep.subr.mxu0 0.0
      %1209 = vmatpush1.msra.mxu0 0.0
      %1210 = vmatprep.subr.mxu0 0.0
      %1211 = vmatpush1.msra.mxu0 0.0
      %1212 = vmatprep.subr.mxu0 0.0
      %1213 = vmatpush1.msra.mxu0 0.0
      %1214 = vmatprep.subr.mxu0 0.0
      %1215 = vmatpush1.msra.mxu0 0.0
      %1216 = vmatprep.subr.mxu0 0.0
      %1217 = vmatpush1.msra.mxu0 0.0
      %1218 = vmatprep.subr.mxu0 0.0
      %1219 = vmatpush1.msra.mxu0 0.0
      %1220 = vmatprep.subr.mxu0 0.0
      %1221 = vmatpush1.msra.mxu0 0.0
      %1222 = vmatprep.subr.mxu0 0.0
      %1223 = vmatpush1.msra.mxu0 0.0
      %1224 = vmatprep.subr.mxu0 0.0
      %1225 = vmatpush1.msra.mxu0 0.0
      %1226 = vmatprep.subr.mxu0 0.0
      %1227 = vmatpush1.msra.mxu0 0.0
      %1228 = vmatprep.subr.mxu0 0.0
      %1229 = vmatpush1.msra.mxu0 %v1196
      %1230 = vmatprep.subr.mxu0 0.0
      %1231 = vmatpush2.msra.mxu0 0.0
      %1232 = vmatprep.subr.mxu0 0.0
      %1233 = vmatpush2.msra.mxu0 0.0
      %1234 = vmatprep.subr.mxu0 0.0
      %1235 = vmatpush2.msra.mxu0 0.0
      %1236 = vmatprep.subr.mxu0 0.0
      %1237 = vmatpush2.msra.mxu0 0.0
      %1238 = vmatprep.subr.mxu0 0.0
      %1239 = vmatpush2.msra.mxu0 0.0
      %1240 = vmatprep.subr.mxu0 0.0
      %1241 = vmatpush2.msra.mxu0 0.0
      %1242 = vmatprep.subr.mxu0 0.0
      %1243 = vmatpush2.msra.mxu0 0.0
      %1244 = vmatprep.subr.mxu0 0.0
      %1245 = vmatpush2.msra.mxu0 0.0
      %1246 = vmatprep.subr.mxu0 0.0
      %1247 = vmatpush2.msra.mxu0 0.0
      %1248 = vmatprep.subr.mxu0 0.0
      %1249 = vmatpush2.msra.mxu0 0.0
      %1250 = vmatprep.subr.mxu0 0.0
      %1251 = vmatpush2.msra.mxu0 0.0
      %1252 = vmatprep.subr.mxu0 0.0
      %1253 = vmatpush2.msra.mxu0 0.0
      %1254 = vmatprep.subr.mxu0 0.0
      %1255 = vmatpush2.msra.mxu0 0.0
      %1256 = vmatprep.subr.mxu0 0.0
      %1257 = vmatpush2.msra.mxu0 0.0
      %1258 = vmatprep.subr.mxu0 0.0
      %1259 = vmatpush2.msra.mxu0 0.0
      %1260 = vmatprep.subr.mxu0 0.0
      %1261 = vmatpush2.msra.mxu0 0.0
      %1262 = vmatprep.mubr.f32.mxu0 0.0
      %1263 = vmatmul.mubr.f32.gmra.mxu0 %v1194
      %v1264 = vpop.f32.mrf.mxu0
      %v1265 = vadd.f32 0.0, %v1264
      %v1266 = vpop.f32.mrf.mxu0
      %1267 = vdwg.mxu0
      %1268 = vrot.lane.b32.xlu0 %v761, 104
      %v1269 = vpop.permute.xlu0 %1268
      %1270 = vrot.lane.b32.xlu0 %v761, 72
      %v1271 = vpop.permute.xlu0 %1270
      %v1272 = vsel %vm767, %v1269, 0
      %v1274 = vsel %vm767, %v1271, 0
      %1276 = vmatprep.subr.mxu0 0.0
      %1277 = vmatpush1.xpose.msra.mxu0 0.0
      %1278 = vmatprep.subr.mxu0 0.0
      %1279 = vmatpush1.xpose.msra.mxu0 0.0
      %1280 = vmatprep.subr.mxu0 0.0
      %1281 = vmatpush1.xpose.msra.mxu0 0.0
      %1282 = vmatprep.subr.mxu0 0.0
      %1283 = vmatpush1.xpose.msra.mxu0 0.0
      %1284 = vmatprep.subr.mxu0 0.0
      %1285 = vmatpush1.xpose.msra.mxu0 0.0
      %1286 = vmatprep.subr.mxu0 0.0
      %1287 = vmatpush1.xpose.msra.mxu0 0.0
      %1288 = vmatprep.subr.mxu0 0.0
      %1289 = vmatpush1.xpose.msra.mxu0 0.0
      %1290 = vmatprep.subr.mxu0 0.0
      %1291 = vmatpush1.xpose.msra.mxu0 0.0
      %1292 = vmatprep.subr.mxu0 0.0
      %1293 = vmatpush1.xpose.msra.mxu0 0.0
      %1294 = vmatprep.subr.mxu0 0.0
      %1295 = vmatpush1.xpose.msra.mxu0 0.0
      %1296 = vmatprep.subr.mxu0 0.0
      %1297 = vmatpush1.xpose.msra.mxu0 0.0
      %1298 = vmatprep.subr.mxu0 0.0
      %1299 = vmatpush1.xpose.msra.mxu0 0.0
      %1300 = vmatprep.subr.mxu0 0.0
      %1301 = vmatpush1.xpose.msra.mxu0 0.0
      %1302 = vmatprep.subr.mxu0 0.0
      %1303 = vmatpush1.xpose.msra.mxu0 0.0
      %1304 = vmatprep.subr.mxu0 0.0
      %1305 = vmatpush1.xpose.msra.mxu0 0.0
      %1306 = vmatprep.subr.mxu0 0.0
      %1307 = vmatpush1.xpose.msra.mxu0 %v1274
      %1308 = vmatprep.subr.mxu0 0.0
      %1309 = vmatpush2.xpose.msra.mxu0 0.0
      %1310 = vmatprep.subr.mxu0 0.0
      %1311 = vmatpush2.xpose.msra.mxu0 0.0
      %1312 = vmatprep.subr.mxu0 0.0
      %1313 = vmatpush2.xpose.msra.mxu0 0.0
      %1314 = vmatprep.subr.mxu0 0.0
      %1315 = vmatpush2.xpose.msra.mxu0 0.0
      %1316 = vmatprep.subr.mxu0 0.0
      %1317 = vmatpush2.xpose.msra.mxu0 0.0
      %1318 = vmatprep.subr.mxu0 0.0
      %1319 = vmatpush2.xpose.msra.mxu0 0.0
      %1320 = vmatprep.subr.mxu0 0.0
      %1321 = vmatpush2.xpose.msra.mxu0 0.0
      %1322 = vmatprep.subr.mxu0 0.0
      %1323 = vmatpush2.xpose.msra.mxu0 0.0
      %1324 = vmatprep.subr.mxu0 0.0
      %1325 = vmatpush2.xpose.msra.mxu0 0.0
      %1326 = vmatprep.subr.mxu0 0.0
      %1327 = vmatpush2.xpose.msra.mxu0 0.0
      %1328 = vmatprep.subr.mxu0 0.0
      %1329 = vmatpush2.xpose.msra.mxu0 0.0
      %1330 = vmatprep.subr.mxu0 0.0
      %1331 = vmatpush2.xpose.msra.mxu0 0.0
      %1332 = vmatprep.subr.mxu0 0.0
      %1333 = vmatpush2.xpose.msra.mxu0 0.0
      %1334 = vmatprep.subr.mxu0 0.0
      %1335 = vmatpush2.xpose.msra.mxu0 0.0
      %1336 = vmatprep.subr.mxu0 0.0
      %1337 = vmatpush2.xpose.msra.mxu0 0.0
      %1338 = vmatprep.subr.mxu0 0.0
      %1339 = vmatpush2.xpose.msra.mxu0 0.0
      %1340 = vmatprep.mubr.f32.mxu0 0.0
      %1341 = vmatmul.mubr.f32.gmra.mxu0 %v1272
      %v1342 = vpop.f32.mrf.mxu0
      %v1343 = vadd.f32 0.0, %v1342
      %v1344 = vpop.f32.mrf.mxu0
      %1345 = vdwg.mxu0
      %v1346 = vmul.f32 %v1343, 0.35355338
      %v1347 = vsel %vm843, %v1346, -inf
      %1348 = vmax.xlane.f32.xlu0 %v1347
      %v1349 = vpop.xlane.xlu0 %1348
      %v1350 = vsub.f32 %v1346, %v1349
      %v1351 = vmul.f32 %v1350, 1.442695
      %v1352 = vpow.pop %v1351
      %v1353 = vsel %vm843, %v1352, 0.0
      %1354 = vadd.xlane.f32.xlu0 %v1353
      %v1355 = vpop.xlane.xlu0 %1354
      %v1356 = vrcp.pop %v1355
      %v1357 = vmul.f32 %v1352, %v1356
      %1358 = vrot.lane.b32.xlu0 %v761, 40
      %v1359 = vpop.permute.xlu0 %1358
      %v1361 = vsel %vm857, %v1357, 0
      %v1363 = vsel %vm861, %v1359, 0
      %1365 = vmatprep.subr.mxu0 0.0
      %1366 = vmatpush1.msra.mxu0 0.0
      %1367 = vmatprep.subr.mxu0 0.0
      %1368 = vmatpush1.msra.mxu0 0.0
      %1369 = vmatprep.subr.mxu0 0.0
      %1370 = vmatpush1.msra.mxu0 0.0
      %1371 = vmatprep.subr.mxu0 0.0
      %1372 = vmatpush1.msra.mxu0 0.0
      %1373 = vmatprep.subr.mxu0 0.0
      %1374 = vmatpush1.msra.mxu0 0.0
      %1375 = vmatprep.subr.mxu0 0.0
      %1376 = vmatpush1.msra.mxu0 0.0
      %1377 = vmatprep.subr.mxu0 0.0
      %1378 = vmatpush1.msra.mxu0 0.0
      %1379 = vmatprep.subr.mxu0 0.0
      %1380 = vmatpush1.msra.mxu0 0.0
      %1381 = vmatprep.subr.mxu0 0.0
      %1382 = vmatpush1.msra.mxu0 0.0
      %1383 = vmatprep.subr.mxu0 0.0
      %1384 = vmatpush1.msra.mxu0 0.0
      %1385 = vmatprep.subr.mxu0 0.0
      %1386 = vmatpush1.msra.mxu0 0.0
      %1387 = vmatprep.subr.mxu0 0.0
      %1388 = vmatpush1.msra.mxu0 0.0
      %1389 = vmatprep.subr.mxu0 0.0
      %1390 = vmatpush1.msra.mxu0 0.0
      %1391 = vmatprep.subr.mxu0 0.0
      %1392 = vmatpush1.msra.mxu0 0.0
      %1393 = vmatprep.subr.mxu0 0.0
      %1394 = vmatpush1.msra.mxu0 0.0
      %1395 = vmatprep.subr.mxu0 0.0
      %1396 = vmatpush1.msra.mxu0 %v1363
      %1397 = vmatprep.subr.mxu0 0.0
      %1398 = vmatpush2.msra.mxu0 0.0
      %1399 = vmatprep.subr.mxu0 0.0
      %1400 = vmatpush2.msra.mxu0 0.0
      %1401 = vmatprep.subr.mxu0 0.0
      %1402 = vmatpush2.msra.mxu0 0.0
      %1403 = vmatprep.subr.mxu0 0.0
      %1404 = vmatpush2.msra.mxu0 0.0
      %1405 = vmatprep.subr.mxu0 0.0
      %1406 = vmatpush2.msra.mxu0 0.0
      %1407 = vmatprep.subr.mxu0 0.0
      %1408 = vmatpush2.msra.mxu0 0.0
      %1409 = vmatprep.subr.mxu0 0.0
      %1410 = vmatpush2.msra.mxu0 0.0
      %1411 = vmatprep.subr.mxu0 0.0
      %1412 = vmatpush2.msra.mxu0 0.0
      %1413 = vmatprep.subr.mxu0 0.0
      %1414 = vmatpush2.msra.mxu0 0.0
      %1415 = vmatprep.subr.mxu0 0.0
      %1416 = vmatpush2.msra.mxu0 0.0
      %1417 = vmatprep.subr.mxu0 0.0
      %1418 = vmatpush2.msra.mxu0 0.0
      %1419 = vmatprep.subr.mxu0 0.0
      %1420 = vmatpush2.msra.mxu0 0.0
      %1421 = vmatprep.subr.mxu0 0.0
      %1422 = vmatpush2.msra.mxu0 0.0
      %1423 = vmatprep.subr.mxu0 0.0
      %1424 = vmatpush2.msra.mxu0 0.0
      %1425 = vmatprep.subr.mxu0 0.0
      %1426 = vmatpush2.msra.mxu0 0.0
      %1427 = vmatprep.subr.mxu0 0.0
      %1428 = vmatpush2.msra.mxu0 0.0
      %1429 = vmatprep.mubr.f32.mxu0 0.0
      %1430 = vmatmul.mubr.f32.gmra.mxu0 %v1361
      %v1431 = vpop.f32.mrf.mxu0
      %v1432 = vadd.f32 0.0, %v1431
      %v1433 = vpop.f32.mrf.mxu0
      %1434 = vdwg.mxu0
      %1436 = vrot.lane.b32.xlu0 %v1098, 8
      %v1437 = vpop.permute.xlu0 %1436
      %1440 = vrot.lane.b32.xlu0 %v1265, 16
      %v1441 = vpop.permute.xlu0 %1440
      %1444 = vrot.lane.b32.xlu0 %v1432, 24
      %v1445 = vpop.permute.xlu0 %1444
      %v1447 = vsel %vm767, %v931, %v1437
      %vm1448 = vcmask 130048
      %v1449 = vsel %vm1448, %v1447, %v1441
      %vm1450 = vcmask 195584
      %v1451 = vsel %vm1450, %v1449, %v1445
      %v1452 = vld [vmem:[%s7] sm:$0xff]
      %v1453 = vld [vmem:[%s7 + $0x8] sm:$0xff]
      %v1454 = vld [vmem:[%s7 + $0x10] sm:$0xff]
      %v1455 = vld [vmem:[%s7 + $0x18] sm:$0xff]
      %v1456 = vld [vmem:[%s8] sm:$0x1]
      %v1458 = vlaneseq
      %v1459 = vshrl.u32 %v1458, 7
      %v1460 = vsub.s32 0, %v1459
      %v1461 = vrot.slane %v1456, %v1460
      %v1464 = vsel %vm690, %v1451, 0
      %1466 = vmatprep.subr.mxu0 0.0
      %1467 = vmatpush1.msra.mxu0 0.0
      %1468 = vmatprep.subr.mxu0 0.0
      %1469 = vmatpush1.msra.mxu0 0.0
      %1470 = vmatprep.subr.mxu0 0.0
      %1471 = vmatpush1.msra.mxu0 0.0
      %1472 = vmatprep.subr.mxu0 0.0
      %1473 = vmatpush1.msra.mxu0 0.0
      %1474 = vmatprep.subr.mxu0 0.0
      %1475 = vmatpush1.msra.mxu0 0.0
      %1476 = vmatprep.subr.mxu0 0.0
      %1477 = vmatpush1.msra.mxu0 0.0
      %1478 = vmatprep.subr.mxu0 0.0
      %1479 = vmatpush1.msra.mxu0 0.0
      %1480 = vmatprep.subr.mxu0 0.0
      %1481 = vmatpush1.msra.mxu0 0.0
      %1482 = vmatprep.subr.mxu0 0.0
      %1483 = vmatpush1.msra.mxu0 0.0
      %1484 = vmatprep.subr.mxu0 0.0
      %1485 = vmatpush1.msra.mxu0 0.0
      %1486 = vmatprep.subr.mxu0 0.0
      %1487 = vmatpush1.msra.mxu0 0.0
      %1488 = vmatprep.subr.mxu0 0.0
      %1489 = vmatpush1.msra.mxu0 0.0
      %1490 = vmatprep.subr.mxu0 0.0
      %1491 = vmatpush1.msra.mxu0 %v1455
      %1492 = vmatprep.subr.mxu0 0.0
      %1493 = vmatpush1.msra.mxu0 %v1454
      %1494 = vmatprep.subr.mxu0 0.0
      %1495 = vmatpush1.msra.mxu0 %v1453
      %1496 = vmatprep.subr.mxu0 0.0
      %1497 = vmatpush1.msra.mxu0 %v1452
      %1498 = vmatprep.subr.mxu0 0.0
      %1499 = vmatpush2.msra.mxu0 0.0
      %1500 = vmatprep.subr.mxu0 0.0
      %1501 = vmatpush2.msra.mxu0 0.0
      %1502 = vmatprep.subr.mxu0 0.0
      %1503 = vmatpush2.msra.mxu0 0.0
      %1504 = vmatprep.subr.mxu0 0.0
      %1505 = vmatpush2.msra.mxu0 0.0
      %1506 = vmatprep.subr.mxu0 0.0
      %1507 = vmatpush2.msra.mxu0 0.0
      %1508 = vmatprep.subr.mxu0 0.0
      %1509 = vmatpush2.msra.mxu0 0.0
      %1510 = vmatprep.subr.mxu0 0.0
      %1511 = vmatpush2.msra.mxu0 0.0
      %1512 = vmatprep.subr.mxu0 0.0
      %1513 = vmatpush2.msra.mxu0 0.0
      %1514 = vmatprep.subr.mxu0 0.0
      %1515 = vmatpush2.msra.mxu0 0.0
      %1516 = vmatprep.subr.mxu0 0.0
      %1517 = vmatpush2.msra.mxu0 0.0
      %1518 = vmatprep.subr.mxu0 0.0
      %1519 = vmatpush2.msra.mxu0 0.0
      %1520 = vmatprep.subr.mxu0 0.0
      %1521 = vmatpush2.msra.mxu0 0.0
      %1522 = vmatprep.subr.mxu0 0.0
      %1523 = vmatpush2.msra.mxu0 0.0
      %1524 = vmatprep.subr.mxu0 0.0
      %1525 = vmatpush2.msra.mxu0 0.0
      %1526 = vmatprep.subr.mxu0 0.0
      %1527 = vmatpush2.msra.mxu0 0.0
      %1528 = vmatprep.subr.mxu0 0.0
      %1529 = vmatpush2.msra.mxu0 0.0
      %1530 = vmatprep.mubr.f32.mxu0 0.0
      %1531 = vmatmul.mubr.f32.gmra.mxu0 %v1464
      %v1532 = vpop.f32.mrf.mxu0
      %v1533 = vadd.f32 %v1461, %v1532
      %v1534 = vpop.f32.mrf.mxu0
      %1535 = vdwg.mxu0
      %v1536 = vadd.f32 %v645, %v1533
      %v1537 = vld [vmem:[%s9] sm:$0x1]
      %v1538 = vld [vmem:[%s10] sm:$0x1]
      %v1539 = vsel %vm650, %v1536, 0.0
      %1540 = vadd.xlane.f32.xlu0 %v1539
      %v1541 = vpop.xlane.xlu0 %1540
      %v1542 = vmul.f32 %v1541, %v654
      %v1543 = vsub.f32 %v1536, %v1542
      %v1544 = vmul.f32 %v1543, %v1543
      %v1545 = vsel %vm650, %v1544, 0.0
      %1546 = vadd.xlane.f32.xlu0 %v1545
      %v1547 = vpop.xlane.xlu0 %1546
      %v1548 = vmul.f32 %v1547, %v654
      %v1549 = vadd.f32 %v1548, 1e-06
      %v1550 = vrsqrt.pop %v1549
      %v1551 = vmul.f32 %v1543, %v1550
      %v1553 = vlaneseq
      %v1554 = vshrl.u32 %v1553, 7
      %v1555 = vsub.s32 0, %v1554
      %v1556 = vrot.slane %v1537, %v1555
      %v1558 = vmul.f32 %v1551, %v1556
      %v1560 = vlaneseq
      %v1561 = vshrl.u32 %v1560, 7
      %v1562 = vsub.s32 0, %v1561
      %v1563 = vrot.slane %v1538, %v1562
      %v1565 = vadd.f32 %v1558, %v1563
      %v1566 = vld [vmem:[%s11] sm:$0xff]
      %v1567 = vld [vmem:[%s11 + $0x8] sm:$0xff]
      %v1568 = vld [vmem:[%s11 + $0x10] sm:$0xff]
      %v1569 = vld [vmem:[%s11 + $0x18] sm:$0xff]
      %v1570 = vld [vmem:[%s12] sm:$0x1]
      %v1572 = vlaneseq
      %v1573 = vshrl.u32 %v1572, 7
      %v1574 = vsub.s32 0, %v1573
      %v1575 = vrot.slane %v1570, %v1574
      %v1578 = vsel %vm690, %v1565, 0
      %1580 = vmatprep.subr.mxu0 0.0
      %1581 = vmatpush1.msra.mxu0 0.0
      %1582 = vmatprep.subr.mxu0 0.0
      %1583 = vmatpush1.msra.mxu0 0.0
      %1584 = vmatprep.subr.mxu0 0.0
      %1585 = vmatpush1.msra.mxu0 0.0
      %1586 = vmatprep.subr.mxu0 0.0
      %1587 = vmatpush1.msra.mxu0 0.0
      %1588 = vmatprep.subr.mxu0 0.0
      %1589 = vmatpush1.msra.mxu0 0.0
      %1590 = vmatprep.subr.mxu0 0.0
      %1591 = vmatpush1.msra.mxu0 0.0
      %1592 = vmatprep.subr.mxu0 0.0
      %1593 = vmatpush1.msra.mxu0 0.0
      %1594 = vmatprep.subr.mxu0 0.0
      %1595 = vmatpush1.msra.mxu0 0.0
      %1596 = vmatprep.subr.mxu0 0.0
      %1597 = vmatpush1.msra.mxu0 0.0
      %1598 = vmatprep.subr.mxu0 0.0
      %1599 = vmatpush1.msra.mxu0 0.0
      %1600 = vmatprep.subr.mxu0 0.0
      %1601 = vmatpush1.msra.mxu0 0.0
      %1602 = vmatprep.subr.mxu0 0.0
      %1603 = vmatpush1.msra.mxu0 0.0
      %1604 = vmatprep.subr.mxu0 0.0
      %1605 = vmatpush1.msra.mxu0 %v1569
      %1606 = vmatprep.subr.mxu0 0.0
      %1607 = vmatpush1.msra.mxu0 %v1568
      %1608 = vmatprep.subr.mxu0 0.0
      %1609 = vmatpush1.msra.mxu0 %v1567
      %1610 = vmatprep.subr.mxu0 0.0
      %1611 = vmatpush1.msra.mxu0 %v1566
      %1612 = vmatprep.subr.mxu0 0.0
      %1613 = vmatpush2.msra.mxu0 0.0
      %1614 = vmatprep.subr.mxu0 0.0
      %1615 = vmatpush2.msra.mxu0 0.0
      %1616 = vmatprep.subr.mxu0 0.0
      %1617 = vmatpush2.msra.mxu0 0.0
      %1618 = vmatprep.subr.mxu0 0.0
      %1619 = vmatpush2.msra.mxu0 0.0
      %1620 = vmatprep.subr.mxu0 0.0
      %1621 = vmatpush2.msra.mxu0 0.0
      %1622 = vmatprep.subr.mxu0 0.0
      %1623 = vmatpush2.msra.mxu0 0.0
      %1624 = vmatprep.subr.mxu0 0.0
      %1625 = vmatpush2.msra.mxu0 0.0
      %1626 = vmatprep.subr.mxu0 0.0
      %1627 = vmatpush2.msra.mxu0 0.0
      %1628 = vmatprep.subr.mxu0 0.0
      %1629 = vmatpush2.msra.mxu0 0.0
      %1630 = vmatprep.subr.mxu0 0.0
      %1631 = vmatpush2.msra.mxu0 0.0
      %1632 = vmatprep.subr.mxu0 0.0
      %1633 = vmatpush2.msra.mxu0 0.0
      %1634 = vmatprep.subr.mxu0 0.0
      %1635 = vmatpush2.msra.mxu0 0.0
      %1636 = vmatprep.subr.mxu0 0.0
      %1637 = vmatpush2.msra.mxu0 0.0
      %1638 = vmatprep.subr.mxu0 0.0
      %1639 = vmatpush2.msra.mxu0 0.0
      %1640 = vmatprep.subr.mxu0 0.0
      %1641 = vmatpush2.msra.mxu0 0.0
      %1642 = vmatprep.subr.mxu0 0.0
      %1643 = vmatpush2.msra.mxu0 0.0
      %1644 = vmatprep.mubr.f32.mxu0 0.0
      %1645 = vmatmul.mubr.f32.gmra.mxu0 %v1578
      %v1646 = vpop.f32.mrf.mxu0
      %v1647 = vadd.f32 %v1575, %v1646
      %v1648 = vpop.f32.mrf.mxu0
      %1649 = vdwg.mxu0
      %v1650 = vmul.f32 %v1647, 0.5
      %v1651 = vmul.f32 %v1647, 0.70710677
      %v1652 = verf.f32.pop %v1651
      %v1653 = vadd.f32 %v1652, 1.0
      %v1654 = vmul.f32 %v1650, %v1653
      %v1655 = vld [vmem:[%s13] sm:$0xff]
      %v1656 = vld [vmem:[%s13 + $0x8] sm:$0xff]
      %v1657 = vld [vmem:[%s13 + $0x10] sm:$0xff]
      %v1658 = vld [vmem:[%s13 + $0x18] sm:$0xff]
      %v1659 = vld [vmem:[%s13 + $0x20] sm:$0xff]
      %v1660 = vld [vmem:[%s13 + $0x28] sm:$0xff]
      %v1661 = vld [vmem:[%s13 + $0x30] sm:$0xff]
      %v1662 = vld [vmem:[%s13 + $0x38] sm:$0xff]
      %v1663 = vld [vmem:[%s13 + $0x40] sm:$0xff]
      %v1664 = vld [vmem:[%s13 + $0x48] sm:$0xff]
      %v1665 = vld [vmem:[%s13 + $0x50] sm:$0xff]
      %v1666 = vld [vmem:[%s13 + $0x58] sm:$0xff]
      %v1667 = vld [vmem:[%s13 + $0x60] sm:$0xff]
      %v1668 = vld [vmem:[%s13 + $0x68] sm:$0xff]
      %v1669 = vld [vmem:[%s13 + $0x70] sm:$0xff]
      %v1670 = vld [vmem:[%s13 + $0x78] sm:$0xff]
      %v1671 = vld [vmem:[%s14] sm:$0x1]
      %v1673 = vlaneseq
      %v1674 = vshrl.u32 %v1673, 7
      %v1675 = vsub.s32 0, %v1674
      %v1676 = vrot.slane %v1671, %v1675
      %1678 = vmatprep.subr.mxu0 0.0
      %1679 = vmatpush1.msra.mxu0 %v1670
      %1680 = vmatprep.subr.mxu0 0.0
      %1681 = vmatpush1.msra.mxu0 %v1669
      %1682 = vmatprep.subr.mxu0 0.0
      %1683 = vmatpush1.msra.mxu0 %v1668
      %1684 = vmatprep.subr.mxu0 0.0
      %1685 = vmatpush1.msra.mxu0 %v1667
      %1686 = vmatprep.subr.mxu0 0.0
      %1687 = vmatpush1.msra.mxu0 %v1666
      %1688 = vmatprep.subr.mxu0 0.0
      %1689 = vmatpush1.msra.mxu0 %v1665
      %1690 = vmatprep.subr.mxu0 0.0
      %1691 = vmatpush1.msra.mxu0 %v1664
      %1692 = vmatprep.subr.mxu0 0.0
      %1693 = vmatpush1.msra.mxu0 %v1663
      %1694 = vmatprep.subr.mxu0 0.0
      %1695 = vmatpush1.msra.mxu0 %v1662
      %1696 = vmatprep.subr.mxu0 0.0
      %1697 = vmatpush1.msra.mxu0 %v1661
      %1698 = vmatprep.subr.mxu0 0.0
      %1699 = vmatpush1.msra.mxu0 %v1660
      %1700 = vmatprep.subr.mxu0 0.0
      %1701 = vmatpush1.msra.mxu0 %v1659
      %1702 = vmatprep.subr.mxu0 0.0
      %1703 = vmatpush1.msra.mxu0 %v1658
      %1704 = vmatprep.subr.mxu0 0.0
      %1705 = vmatpush1.msra.mxu0 %v1657
      %1706 = vmatprep.subr.mxu0 0.0
      %1707 = vmatpush1.msra.mxu0 %v1656
      %1708 = vmatprep.subr.mxu0 0.0
      %1709 = vmatpush1.msra.mxu0 %v1655
      %1710 = vmatprep.subr.mxu0 0.0
      %1711 = vmatpush2.msra.mxu0 0.0
      %1712 = vmatprep.subr.mxu0 0.0
      %1713 = vmatpush2.msra.mxu0 0.0
      %1714 = vmatprep.subr.mxu0 0.0
      %1715 = vmatpush2.msra.mxu0 0.0
      %1716 = vmatprep.subr.mxu0 0.0
      %1717 = vmatpush2.msra.mxu0 0.0
      %1718 = vmatprep.subr.mxu0 0.0
      %1719 = vmatpush2.msra.mxu0 0.0
      %1720 = vmatprep.subr.mxu0 0.0
      %1721 = vmatpush2.msra.mxu0 0.0
      %1722 = vmatprep.subr.mxu0 0.0
      %1723 = vmatpush2.msra.mxu0 0.0
      %1724 = vmatprep.subr.mxu0 0.0
      %1725 = vmatpush2.msra.mxu0 0.0
      %1726 = vmatprep.subr.mxu0 0.0
      %1727 = vmatpush2.msra.mxu0 0.0
      %1728 = vmatprep.subr.mxu0 0.0
      %1729 = vmatpush2.msra.mxu0 0.0
      %1730 = vmatprep.subr.mxu0 0.0
      %1731 = vmatpush2.msra.mxu0 0.0
      %1732 = vmatprep.subr.mxu0 0.0
      %1733 = vmatpush2.msra.mxu0 0.0
      %1734 = vmatprep.subr.mxu0 0.0
      %1735 = vmatpush2.msra.mxu0 0.0
      %1736 = vmatprep.subr.mxu0 0.0
      %1737 = vmatpush2.msra.mxu0 0.0
      %1738 = vmatprep.subr.mxu0 0.0
      %1739 = vmatpush2.msra.mxu0 0.0
      %1740 = vmatprep.subr.mxu0 0.0
      %1741 = vmatpush2.msra.mxu0 0.0
      %1742 = vmatprep.mubr.f32.mxu0 0.0
      %1743 = vmatmul.mubr.f32.gmra.mxu0 %v1654
      %v1744 = vpop.f32.mrf.mxu0
      %v1745 = vadd.f32 %v1676, %v1744
      %v1746 = vpop.f32.mrf.mxu0
      %1747 = vdwg.mxu0
      %v1748 = vadd.f32 %v1536, %v1745
      %s1749 = scalar_lea.vmem %s3, 1
      %v1750 = vld [vmem:[%s1749] sm:$0x1]
      %s1751 = scalar_lea.vmem %s4, 1
      %v1752 = vld [vmem:[%s1751] sm:$0x1]
      %v1753 = vsel %vm650, %v1748, 0.0
      %1754 = vadd.xlane.f32.xlu0 %v1753
      %v1755 = vpop.xlane.xlu0 %1754
      %v1756 = vmul.f32 %v1755, %v654
      %v1757 = vsub.f32 %v1748, %v1756
      %v1758 = vmul.f32 %v1757, %v1757
      %v1759 = vsel %vm650, %v1758, 0.0
      %1760 = vadd.xlane.f32.xlu0 %v1759
      %v1761 = vpop.xlane.xlu0 %1760
      %v1762 = vmul.f32 %v1761, %v654
      %v1763 = vadd.f32 %v1762, 1e-06
      %v1764 = vrsqrt.pop %v1763
      %v1765 = vmul.f32 %v1757, %v1764
      %v1767 = vlaneseq
      %v1768 = vshrl.u32 %v1767, 7
      %v1769 = vsub.s32 0, %v1768
      %v1770 = vrot.slane %v1750, %v1769
      %v1772 = vmul.f32 %v1765, %v1770
      %v1774 = vlaneseq
      %v1775 = vshrl.u32 %v1774, 7
      %v1776 = vsub.s32 0, %v1775
      %v1777 = vrot.slane %v1752, %v1776
      %v1779 = vadd.f32 %v1772, %v1777
      %s1780 = scalar_lea.vmem %s5, 32
      %v1781 = vld [vmem:[%s1780] sm:$0xff]
      %v1782 = vld [vmem:[%s1780 + $0x8] sm:$0xff]
      %v1783 = vld [vmem:[%s1780 + $0x10] sm:$0xff]
      %v1784 = vld [vmem:[%s1780 + $0x18] sm:$0xff]
      %s1785 = scalar_lea.vmem %s6, 1
      %v1786 = vld [vmem:[%s1785] sm:$0x1]
      %v1788 = vlaneseq
      %v1789 = vshrl.u32 %v1788, 7
      %v1790 = vsub.s32 0, %v1789
      %v1791 = vrot.slane %v1786, %v1790
      %v1794 = vsel %vm690, %v1779, 0
      %1796 = vmatprep.subr.mxu0 0.0
      %1797 = vmatpush1.msra.mxu0 0.0
      %1798 = vmatprep.subr.mxu0 0.0
      %1799 = vmatpush1.msra.mxu0 0.0
      %1800 = vmatprep.subr.mxu0 0.0
      %1801 = vmatpush1.msra.mxu0 0.0
      %1802 = vmatprep.subr.mxu0 0.0
      %1803 = vmatpush1.msra.mxu0 0.0
      %1804 = vmatprep.subr.mxu0 0.0
      %1805 = vmatpush1.msra.mxu0 0.0
      %1806 = vmatprep.subr.mxu0 0.0
      %1807 = vmatpush1.msra.mxu0 0.0
      %1808 = vmatprep.subr.mxu0 0.0
      %1809 = vmatpush1.msra.mxu0 0.0
      %1810 = vmatprep.subr.mxu0 0.0
      %1811 = vmatpush1.msra.mxu0 0.0
      %1812 = vmatprep.subr.mxu0 0.0
      %1813 = vmatpush1.msra.mxu0 0.0
      %1814 = vmatprep.subr.mxu0 0.0
      %1815 = vmatpush1.msra.mxu0 0.0
      %1816 = vmatprep.subr.mxu0 0.0
      %1817 = vmatpush1.msra.mxu0 0.0
      %1818 = vmatprep.subr.mxu0 0.0
      %1819 = vmatpush1.msra.mxu0 0.0
      %1820 = vmatprep.subr.mxu0 0.0
      %1821 = vmatpush1.msra.mxu0 %v1784
      %1822 = vmatprep.subr.mxu0 0.0
      %1823 = vmatpush1.msra.mxu0 %v1783
      %1824 = vmatprep.subr.mxu0 0.0
      %1825 = vmatpush1.msra.mxu0 %v1782
      %1826 = vmatprep.subr.mxu0 0.0
      %1827 = vmatpush1.msra.mxu0 %v1781
      %1828 = vmatprep.subr.mxu0 0.0
      %1829 = vmatpush2.msra.mxu0 0.0
      %1830 = vmatprep.subr.mxu0 0.0
      %1831 = vmatpush2.msra.mxu0 0.0
      %1832 = vmatprep.subr.mxu0 0.0
      %1833 = vmatpush2.msra.mxu0 0.0
      %1834 = vmatprep.subr.mxu0 0.0
      %1835 = vmatpush2.msra.mxu0 0.0
      %1836 = vmatprep.subr.mxu0 0.0
      %1837 = vmatpush2.msra.mxu0 0.0
      %1838 = vmatprep.subr.mxu0 0.0
      %1839 = vmatpush2.msra.mxu0 0.0
      %1840 = vmatprep.subr.mxu0 0.0
      %1841 = vmatpush2.msra.mxu0 0.0
      %1842 = vmatprep.subr.mxu0 0.0
      %1843 = vmatpush2.msra.mxu0 0.0
      %1844 = vmatprep.subr.mxu0 0.0
      %1845 = vmatpush2.msra.mxu0 0.0
      %1846 = vmatprep.subr.mxu0 0.0
      %1847 = vmatpush2.msra.mxu0 0.0
      %1848 = vmatprep.subr.mxu0 0.0
      %1849 = vmatpush2.msra.mxu0 0.0
      %1850 = vmatprep.subr.mxu0 0.0
      %1851 = vmatpush2.msra.mxu0 0.0
      %1852 = vmatprep.subr.mxu0 0.0
      %1853 = vmatpush2.msra.mxu0 0.0
      %1854 = vmatprep.subr.mxu0 0.0
      %1855 = vmatpush2.msra.mxu0 0.0
      %1856 = vmatprep.subr.mxu0 0.0
      %1857 = vmatpush2.msra.mxu0 0.0
      %1858 = vmatprep.subr.mxu0 0.0
      %1859 = vmatpush2.msra.mxu0 0.0
      %1860 = vmatprep.mubr.f32.mxu0 0.0
      %1861 = vmatmul.mubr.f32.gmra.mxu0 %v1794
      %v1862 = vpop.f32.mrf.mxu0
      %v1863 = vadd.f32 %v1791, %v1862
      %v1864 = vpop.f32.mrf.mxu0
      %1865 = vdwg.mxu0
      %1867 = vrot.lane.b32.xlu0 %v1863, 96
      %v1868 = vpop.permute.xlu0 %1867
      %v1869 = vsel %vm767, %v1863, 0
      %v1871 = vsel %vm767, %v1868, 0
      %1873 = vmatprep.subr.mxu0 0.0
      %1874 = vmatpush1.xpose.msra.mxu0 0.0
      %1875 = vmatprep.subr.mxu0 0.0
      %1876 = vmatpush1.xpose.msra.mxu0 0.0
      %1877 = vmatprep.subr.mxu0 0.0
      %1878 = vmatpush1.xpose.msra.mxu0 0.0
      %1879 = vmatprep.subr.mxu0 0.0
      %1880 = vmatpush1.xpose.msra.mxu0 0.0
      %1881 = vmatprep.subr.mxu0 0.0
      %1882 = vmatpush1.xpose.msra.mxu0 0.0
      %1883 = vmatprep.subr.mxu0 0.0
      %1884 = vmatpush1.xpose.msra.mxu0 0.0
      %1885 = vmatprep.subr.mxu0 0.0
      %1886 = vmatpush1.xpose.msra.mxu0 0.0
      %1887 = vmatprep.subr.mxu0 0.0
      %1888 = vmatpush1.xpose.msra.mxu0 0.0
      %1889 = vmatprep.subr.mxu0 0.0
      %1890 = vmatpush1.xpose.msra.mxu0 0.0
      %1891 = vmatprep.subr.mxu0 0.0
      %1892 = vmatpush1.xpose.msra.mxu0 0.0
      %1893 = vmatprep.subr.mxu0 0.0
      %1894 = vmatpush1.xpose.msra.mxu0 0.0
      %1895 = vmatprep.subr.mxu0 0.0
      %1896 = vmatpush1.xpose.msra.mxu0 0.0
      %1897 = vmatprep.subr.mxu0 0.0
      %1898 = vmatpush1.xpose.msra.mxu0 0.0
      %1899 = vmatprep.subr.mxu0 0.0
      %1900 = vmatpush1.xpose.msra.mxu0 0.0
      %1901 = vmatprep.subr.mxu0 0.0
      %1902 = vmatpush1.xpose.msra.mxu0 0.0
      %1903 = vmatprep.subr.mxu0 0.0
      %1904 = vmatpush1.xpose.msra.mxu0 %v1871
      %1905 = vmatprep.subr.mxu0 0.0
      %1906 = vmatpush2.xpose.msra.mxu0 0.0
      %1907 = vmatprep.subr.mxu0 0.0
      %1908 = vmatpush2.xpose.msra.mxu0 0.0
      %1909 = vmatprep.subr.mxu0 0.0
      %1910 = vmatpush2.xpose.msra.mxu0 0.0
      %1911 = vmatprep.subr.mxu0 0.0
      %1912 = vmatpush2.xpose.msra.mxu0 0.0
      %1913 = vmatprep.subr.mxu0 0.0
      %1914 = vmatpush2.xpose.msra.mxu0 0.0
      %1915 = vmatprep.subr.mxu0 0.0
      %1916 = vmatpush2.xpose.msra.mxu0 0.0
      %1917 = vmatprep.subr.mxu0 0.0
      %1918 = vmatpush2.xpose.msra.mxu0 0.0
      %1919 = vmatprep.subr.mxu0 0.0
      %1920 = vmatpush2.xpose.msra.mxu0 0.0
      %1921 = vmatprep.subr.mxu0 0.0
      %1922 = vmatpush2.xpose.msra.mxu0 0.0
      %1923 = vmatprep.subr.mxu0 0.0
      %1924 = vmatpush2.xpose.msra.mxu0 0.0
      %1925 = vmatprep.subr.mxu0 0.0
      %1926 = vmatpush2.xpose.msra.mxu0 0.0
      %1927 = vmatprep.subr.mxu0 0.0
      %1928 = vmatpush2.xpose.msra.mxu0 0.0
      %1929 = vmatprep.subr.mxu0 0.0
      %1930 = vmatpush2.xpose.msra.mxu0 0.0
      %1931 = vmatprep.subr.mxu0 0.0
      %1932 = vmatpush2.xpose.msra.mxu0 0.0
      %1933 = vmatprep.subr.mxu0 0.0
      %1934 = vmatpush2.xpose.msra.mxu0 0.0
      %1935 = vmatprep.subr.mxu0 0.0
      %1936 = vmatpush2.xpose.msra.mxu0 0.0
      %1937 = vmatprep.mubr.f32.mxu0 0.0
      %1938 = vmatmul.mubr.f32.gmra.mxu0 %v1869
      %v1939 = vpop.f32.mrf.mxu0
      %v1940 = vadd.f32 0.0, %v1939
      %v1941 = vpop.f32.mrf.mxu0
      %1942 = vdwg.mxu0
      %v1943 = vmul.f32 %v1940, 0.35355338
      %v1944 = vsel %vm843, %v1943, -inf
      %1945 = vmax.xlane.f32.xlu0 %v1944
      %v1946 = vpop.xlane.xlu0 %1945
      %v1947 = vsub.f32 %v1943, %v1946
      %v1948 = vmul.f32 %v1947, 1.442695
      %v1949 = vpow.pop %v1948
      %v1950 = vsel %vm843, %v1949, 0.0
      %1951 = vadd.xlane.f32.xlu0 %v1950
      %v1952 = vpop.xlane.xlu0 %1951
      %v1953 = vrcp.pop %v1952
      %v1954 = vmul.f32 %v1949, %v1953
      %1955 = vrot.lane.b32.xlu0 %v1863, 64
      %v1956 = vpop.permute.xlu0 %1955
      %v1958 = vsel %vm857, %v1954, 0
      %v1960 = vsel %vm861, %v1956, 0
      %1962 = vmatprep.subr.mxu0 0.0
      %1963 = vmatpush1.msra.mxu0 0.0
      %1964 = vmatprep.subr.mxu0 0.0
      %1965 = vmatpush1.msra.mxu0 0.0
      %1966 = vmatprep.subr.mxu0 0.0
      %1967 = vmatpush1.msra.mxu0 0.0
      %1968 = vmatprep.subr.mxu0 0.0
      %1969 = vmatpush1.msra.mxu0 0.0
      %1970 = vmatprep.subr.mxu0 0.0
      %1971 = vmatpush1.msra.mxu0 0.0
      %1972 = vmatprep.subr.mxu0 0.0
      %1973 = vmatpush1.msra.mxu0 0.0
      %1974 = vmatprep.subr.mxu0 0.0
      %1975 = vmatpush1.msra.mxu0 0.0
      %1976 = vmatprep.subr.mxu0 0.0
      %1977 = vmatpush1.msra.mxu0 0.0
      %1978 = vmatprep.subr.mxu0 0.0
      %1979 = vmatpush1.msra.mxu0 0.0
      %1980 = vmatprep.subr.mxu0 0.0
      %1981 = vmatpush1.msra.mxu0 0.0
      %1982 = vmatprep.subr.mxu0 0.0
      %1983 = vmatpush1.msra.mxu0 0.0
      %1984 = vmatprep.subr.mxu0 0.0
      %1985 = vmatpush1.msra.mxu0 0.0
      %1986 = vmatprep.subr.mxu0 0.0
      %1987 = vmatpush1.msra.mxu0 0.0
      %1988 = vmatprep.subr.mxu0 0.0
      %1989 = vmatpush1.msra.mxu0 0.0
      %1990 = vmatprep.subr.mxu0 0.0
      %1991 = vmatpush1.msra.mxu0 0.0
      %1992 = vmatprep.subr.mxu0 0.0
      %1993 = vmatpush1.msra.mxu0 %v1960
      %1994 = vmatprep.subr.mxu0 0.0
      %1995 = vmatpush2.msra.mxu0 0.0
      %1996 = vmatprep.subr.mxu0 0.0
      %1997 = vmatpush2.msra.mxu0 0.0
      %1998 = vmatprep.subr.mxu0 0.0
      %1999 = vmatpush2.msra.mxu0 0.0
      %2000 = vmatprep.subr.mxu0 0.0
      %2001 = vmatpush2.msra.mxu0 0.0
      %2002 = vmatprep.subr.mxu0 0.0
      %2003 = vmatpush2.msra.mxu0 0.0
      %2004 = vmatprep.subr.mxu0 0.0
      %2005 = vmatpush2.msra.mxu0 0.0
      %2006 = vmatprep.subr.mxu0 0.0
      %2007 = vmatpush2.msra.mxu0 0.0
      %2008 = vmatprep.subr.mxu0 0.0
      %2009 = vmatpush2.msra.mxu0 0.0
      %2010 = vmatprep.subr.mxu0 0.0
      %2011 = vmatpush2.msra.mxu0 0.0
      %2012 = vmatprep.subr.mxu0 0.0
      %2013 = vmatpush2.msra.mxu0 0.0
      %2014 = vmatprep.subr.mxu0 0.0
      %2015 = vmatpush2.msra.mxu0 0.0
      %2016 = vmatprep.subr.mxu0 0.0
      %2017 = vmatpush2.msra.mxu0 0.0
      %2018 = vmatprep.subr.mxu0 0.0
      %2019 = vmatpush2.msra.mxu0 0.0
      %2020 = vmatprep.subr.mxu0 0.0
      %2021 = vmatpush2.msra.mxu0 0.0
      %2022 = vmatprep.subr.mxu0 0.0
      %2023 = vmatpush2.msra.mxu0 0.0
      %2024 = vmatprep.subr.mxu0 0.0
      %2025 = vmatpush2.msra.mxu0 0.0
      %2026 = vmatprep.mubr.f32.mxu0 0.0
      %2027 = vmatmul.mubr.f32.gmra.mxu0 %v1958
      %v2028 = vpop.f32.mrf.mxu0
      %v2029 = vadd.f32 0.0, %v2028
      %v2030 = vpop.f32.mrf.mxu0
      %2031 = vdwg.mxu0
      %2032 = vrot.lane.b32.xlu0 %v1863, 120
      %v2033 = vpop.permute.xlu0 %2032
      %2034 = vrot.lane.b32.xlu0 %v1863, 88
      %v2035 = vpop.permute.xlu0 %2034
      %v2036 = vsel %vm767, %v2033, 0
      %v2038 = vsel %vm767, %v2035, 0
      %2040 = vmatprep.subr.mxu0 0.0
      %2041 = vmatpush1.xpose.msra.mxu0 0.0
      %2042 = vmatprep.subr.mxu0 0.0
      %2043 = vmatpush1.xpose.msra.mxu0 0.0
      %2044 = vmatprep.subr.mxu0 0.0
      %2045 = vmatpush1.xpose.msra.mxu0 0.0
      %2046 = vmatprep.subr.mxu0 0.0
      %2047 = vmatpush1.xpose.msra.mxu0 0.0
      %2048 = vmatprep.subr.mxu0 0.0
      %2049 = vmatpush1.xpose.msra.mxu0 0.0
      %2050 = vmatprep.subr.mxu0 0.0
      %2051 = vmatpush1.xpose.msra.mxu0 0.0
      %2052 = vmatprep.subr.mxu0 0.0
      %2053 = vmatpush1.xpose.msra.mxu0 0.0
      %2054 = vmatprep.subr.mxu0 0.0
      %2055 = vmatpush1.xpose.msra.mxu0 0.0
      %2056 = vmatprep.subr.mxu0 0.0
      %2057 = vmatpush1.xpose.msra.mxu0 0.0
      %2058 = vmatprep.subr.mxu0 0.0
      %2059 = vmatpush1.xpose.msra.mxu0 0.0
      %2060 = vmatprep.subr.mxu0 0.0
      %2061 = vmatpush1.xpose.msra.mxu0 0.0
      %2062 = vmatprep.subr.mxu0 0.0
      %2063 = vmatpush1.xpose.msra.mxu0 0.0
      %2064 = vmatprep.subr.mxu0 0.0
      %2065 = vmatpush1.xpose.msra.mxu0 0.0
      %2066 = vmatprep.subr.mxu0 0.0
      %2067 = vmatpush1.xpose.msra.mxu0 0.0
      %2068 = vmatprep.subr.mxu0 0.0
      %2069 = vmatpush1.xpose.msra.mxu0 0.0
      %2070 = vmatprep.subr.mxu0 0.0
      %2071 = vmatpush1.xpose.msra.mxu0 %v2038
      %2072 = vmatprep.subr.mxu0 0.0
      %2073 = vmatpush2.xpose.msra.mxu0 0.0
      %2074 = vmatprep.subr.mxu0 0.0
      %2075 = vmatpush2.xpose.msra.mxu0 0.0
      %2076 = vmatprep.subr.mxu0 0.0
      %2077 = vmatpush2.xpose.msra.mxu0 0.0
      %2078 = vmatprep.subr.mxu0 0.0
      %2079 = vmatpush2.xpose.msra.mxu0 0.0
      %2080 = vmatprep.subr.mxu0 0.0
      %2081 = vmatpush2.xpose.msra.mxu0 0.0
      %2082 = vmatprep.subr.mxu0 0.0
      %2083 = vmatpush2.xpose.msra.mxu0 0.0
      %2084 = vmatprep.subr.mxu0 0.0
      %2085 = vmatpush2.xpose.msra.mxu0 0.0
      %2086 = vmatprep.subr.mxu0 0.0
      %2087 = vmatpush2.xpose.msra.mxu0 0.0
      %2088 = vmatprep.subr.mxu0 0.0
      %2089 = vmatpush2.xpose.msra.mxu0 0.0
      %2090 = vmatprep.subr.mxu0 0.0
      %2091 = vmatpush2.xpose.msra.mxu0 0.0
      %2092 = vmatprep.subr.mxu0 0.0
      %2093 = vmatpush2.xpose.msra.mxu0 0.0
      %2094 = vmatprep.subr.mxu0 0.0
      %2095 = vmatpush2.xpose.msra.mxu0 0.0
      %2096 = vmatprep.subr.mxu0 0.0
      %2097 = vmatpush2.xpose.msra.mxu0 0.0
      %2098 = vmatprep.subr.mxu0 0.0
      %2099 = vmatpush2.xpose.msra.mxu0 0.0
      %2100 = vmatprep.subr.mxu0 0.0
      %2101 = vmatpush2.xpose.msra.mxu0 0.0
      %2102 = vmatprep.subr.mxu0 0.0
      %2103 = vmatpush2.xpose.msra.mxu0 0.0
      %2104 = vmatprep.mubr.f32.mxu0 0.0
      %2105 = vmatmul.mubr.f32.gmra.mxu0 %v2036
      %v2106 = vpop.f32.mrf.mxu0
      %v2107 = vadd.f32 0.0, %v2106
      %v2108 = vpop.f32.mrf.mxu0
      %2109 = vdwg.mxu0
      %v2110 = vmul.f32 %v2107, 0.35355338
      %v2111 = vsel %vm843, %v2110, -inf
      %2112 = vmax.xlane.f32.xlu0 %v2111
      %v2113 = vpop.xlane.xlu0 %2112
      %v2114 = vsub.f32 %v2110, %v2113
      %v2115 = vmul.f32 %v2114, 1.442695
      %v2116 = vpow.pop %v2115
      %v2117 = vsel %vm843, %v2116, 0.0
      %2118 = vadd.xlane.f32.xlu0 %v2117
      %v2119 = vpop.xlane.xlu0 %2118
      %v2120 = vrcp.pop %v2119
      %v2121 = vmul.f32 %v2116, %v2120
      %2122 = vrot.lane.b32.xlu0 %v1863, 56
      %v2123 = vpop.permute.xlu0 %2122
      %v2125 = vsel %vm857, %v2121, 0
      %v2127 = vsel %vm861, %v2123, 0
      %2129 = vmatprep.subr.mxu0 0.0
      %2130 = vmatpush1.msra.mxu0 0.0
      %2131 = vmatprep.subr.mxu0 0.0
      %2132 = vmatpush1.msra.mxu0 0.0
      %2133 = vmatprep.subr.mxu0 0.0
      %2134 = vmatpush1.msra.mxu0 0.0
      %2135 = vmatprep.subr.mxu0 0.0
      %2136 = vmatpush1.msra.mxu0 0.0
      %2137 = vmatprep.subr.mxu0 0.0
      %2138 = vmatpush1.msra.mxu0 0.0
      %2139 = vmatprep.subr.mxu0 0.0
      %2140 = vmatpush1.msra.mxu0 0.0
      %2141 = vmatprep.subr.mxu0 0.0
      %2142 = vmatpush1.msra.mxu0 0.0
      %2143 = vmatprep.subr.mxu0 0.0
      %2144 = vmatpush1.msra.mxu0 0.0
      %2145 = vmatprep.subr.mxu0 0.0
      %2146 = vmatpush1.msra.mxu0 0.0
      %2147 = vmatprep.subr.mxu0 0.0
      %2148 = vmatpush1.msra.mxu0 0.0
      %2149 = vmatprep.subr.mxu0 0.0
      %2150 = vmatpush1.msra.mxu0 0.0
      %2151 = vmatprep.subr.mxu0 0.0
      %2152 = vmatpush1.msra.mxu0 0.0
      %2153 = vmatprep.subr.mxu0 0.0
      %2154 = vmatpush1.msra.mxu0 0.0
      %2155 = vmatprep.subr.mxu0 0.0
      %2156 = vmatpush1.msra.mxu0 0.0
      %2157 = vmatprep.subr.mxu0 0.0
      %2158 = vmatpush1.msra.mxu0 0.0
      %2159 = vmatprep.subr.mxu0 0.0
      %2160 = vmatpush1.msra.mxu0 %v2127
      %2161 = vmatprep.subr.mxu0 0.0
      %2162 = vmatpush2.msra.mxu0 0.0
      %2163 = vmatprep.subr.mxu0 0.0
      %2164 = vmatpush2.msra.mxu0 0.0
      %2165 = vmatprep.subr.mxu0 0.0
      %2166 = vmatpush2.msra.mxu0 0.0
      %2167 = vmatprep.subr.mxu0 0.0
      %2168 = vmatpush2.msra.mxu0 0.0
      %2169 = vmatprep.subr.mxu0 0.0
      %2170 = vmatpush2.msra.mxu0 0.0
      %2171 = vmatprep.subr.mxu0 0.0
      %2172 = vmatpush2.msra.mxu0 0.0
      %2173 = vmatprep.subr.mxu0 0.0
      %2174 = vmatpush2.msra.mxu0 0.0
      %2175 = vmatprep.subr.mxu0 0.0
      %2176 = vmatpush2.msra.mxu0 0.0
      %2177 = vmatprep.subr.mxu0 0.0
      %2178 = vmatpush2.msra.mxu0 0.0
      %2179 = vmatprep.subr.mxu0 0.0
      %2180 = vmatpush2.msra.mxu0 0.0
      %2181 = vmatprep.subr.mxu0 0.0
      %2182 = vmatpush2.msra.mxu0 0.0
      %2183 = vmatprep.subr.mxu0 0.0
      %2184 = vmatpush2.msra.mxu0 0.0
      %2185 = vmatprep.subr.mxu0 0.0
      %2186 = vmatpush2.msra.mxu0 0.0
      %2187 = vmatprep.subr.mxu0 0.0
      %2188 = vmatpush2.msra.mxu0 0.0
      %2189 = vmatprep.subr.mxu0 0.0
      %2190 = vmatpush2.msra.mxu0 0.0
      %2191 = vmatprep.subr.mxu0 0.0
      %2192 = vmatpush2.msra.mxu0 0.0
      %2193 = vmatprep.mubr.f32.mxu0 0.0
      %2194 = vmatmul.mubr.f32.gmra.mxu0 %v2125
      %v2195 = vpop.f32.mrf.mxu0
      %v2196 = vadd.f32 0.0, %v2195
      %v2197 = vpop.f32.mrf.mxu0
      %2198 = vdwg.mxu0
      %2199 = vrot.lane.b32.xlu0 %v1863, 112
      %v2200 = vpop.permute.xlu0 %2199
      %2201 = vrot.lane.b32.xlu0 %v1863, 80
      %v2202 = vpop.permute.xlu0 %2201
      %v2203 = vsel %vm767, %v2200, 0
      %v2205 = vsel %vm767, %v2202, 0
      %2207 = vmatprep.subr.mxu0 0.0
      %2208 = vmatpush1.xpose.msra.mxu0 0.0
      %2209 = vmatprep.subr.mxu0 0.0
      %2210 = vmatpush1.xpose.msra.mxu0 0.0
      %2211 = vmatprep.subr.mxu0 0.0
      %2212 = vmatpush1.xpose.msra.mxu0 0.0
      %2213 = vmatprep.subr.mxu0 0.0
      %2214 = vmatpush1.xpose.msra.mxu0 0.0
      %2215 = vmatprep.subr.mxu0 0.0
      %2216 = vmatpush1.xpose.msra.mxu0 0.0
      %2217 = vmatprep.subr.mxu0 0.0
      %2218 = vmatpush1.xpose.msra.mxu0 0.0
      %2219 = vmatprep.subr.mxu0 0.0
      %2220 = vmatpush1.xpose.msra.mxu0 0.0
      %2221 = vmatprep.subr.mxu0 0.0
      %2222 = vmatpush1.xpose.msra.mxu0 0.0
      %2223 = vmatprep.subr.mxu0 0.0
      %2224 = vmatpush1.xpose.msra.mxu0 0.0
      %2225 = vmatprep.subr.mxu0 0.0
      %2226 = vmatpush1.xpose.msra.mxu0 0.0
      %2227 = vmatprep.subr.mxu0 0.0
      %2228 = vmatpush1.xpose.msra.mxu0 0.0
      %2229 = vmatprep.subr.mxu0 0.0
      %2230 = vmatpush1.xpose.msra.mxu0 0.0
      %2231 = vmatprep.subr.mxu0 0.0
      %2232 = vmatpush1.xpose.msra.mxu0 0.0
      %2233 = vmatprep.subr.mxu0 0.0
      %2234 = vmatpush1.xpose.msra.mxu0 0.0
      %2235 = vmatprep.subr.mxu0 0.0
      %2236 = vmatpush1.xpose.msra.mxu0 0.0
      %2237 = vmatprep.subr.mxu0 0.0
      %2238 = vmatpush1.xpose.msra.mxu0 %v2205
      %2239 = vmatprep.subr.mxu0 0.0
      %2240 = vmatpush2.xpose.msra.mxu0 0.0
      %2241 = vmatprep.subr.mxu0 0.0
      %2242 = vmatpush2.xpose.msra.mxu0 0.0
      %2243 = vmatprep.subr.mxu0 0.0
      %2244 = vmatpush2.xpose.msra.mxu0 0.0
      %2245 = vmatprep.subr.mxu0 0.0
      %2246 = vmatpush2.xpose.msra.mxu0 0.0
      %2247 = vmatprep.subr.mxu0 0.0
      %2248 = vmatpush2.xpose.msra.mxu0 0.0
      %2249 = vmatprep.subr.mxu0 0.0
      %2250 = vmatpush2.xpose.msra.mxu0 0.0
      %2251 = vmatprep.subr.mxu0 0.0
      %2252 = vmatpush2.xpose.msra.mxu0 0.0
      %2253 = vmatprep.subr.mxu0 0.0
      %2254 = vmatpush2.xpose.msra.mxu0 0.0
      %2255 = vmatprep.subr.mxu0 0.0
      %2256 = vmatpush2.xpose.msra.mxu0 0.0
      %2257 = vmatprep.subr.mxu0 0.0
      %2258 = vmatpush2.xpose.msra.mxu0 0.0
      %2259 = vmatprep.subr.mxu0 0.0
      %2260 = vmatpush2.xpose.msra.mxu0 0.0
      %2261 = vmatprep.subr.mxu0 0.0
      %2262 = vmatpush2.xpose.msra.mxu0 0.0
      %2263 = vmatprep.subr.mxu0 0.0
      %2264 = vmatpush2.xpose.msra.mxu0 0.0
      %2265 = vmatprep.subr.mxu0 0.0
      %2266 = vmatpush2.xpose.msra.mxu0 0.0
      %2267 = vmatprep.subr.mxu0 0.0
      %2268 = vmatpush2.xpose.msra.mxu0 0.0
      %2269 = vmatprep.subr.mxu0 0.0
      %2270 = vmatpush2.xpose.msra.mxu0 0.0
      %2271 = vmatprep.mubr.f32.mxu0 0.0
      %2272 = vmatmul.mubr.f32.gmra.mxu0 %v2203
      %v2273 = vpop.f32.mrf.mxu0
      %v2274 = vadd.f32 0.0, %v2273
      %v2275 = vpop.f32.mrf.mxu0
      %2276 = vdwg.mxu0
      %v2277 = vmul.f32 %v2274, 0.35355338
      %v2278 = vsel %vm843, %v2277, -inf
      %2279 = vmax.xlane.f32.xlu0 %v2278
      %v2280 = vpop.xlane.xlu0 %2279
      %v2281 = vsub.f32 %v2277, %v2280
      %v2282 = vmul.f32 %v2281, 1.442695
      %v2283 = vpow.pop %v2282
      %v2284 = vsel %vm843, %v2283, 0.0
      %2285 = vadd.xlane.f32.xlu0 %v2284
      %v2286 = vpop.xlane.xlu0 %2285
      %v2287 = vrcp.pop %v2286
      %v2288 = vmul.f32 %v2283, %v2287
      %2289 = vrot.lane.b32.xlu0 %v1863, 48
      %v2290 = vpop.permute.xlu0 %2289
      %v2292 = vsel %vm857, %v2288, 0
      %v2294 = vsel %vm861, %v2290, 0
      %2296 = vmatprep.subr.mxu0 0.0
      %2297 = vmatpush1.msra.mxu0 0.0
      %2298 = vmatprep.subr.mxu0 0.0
      %2299 = vmatpush1.msra.mxu0 0.0
      %2300 = vmatprep.subr.mxu0 0.0
      %2301 = vmatpush1.msra.mxu0 0.0
      %2302 = vmatprep.subr.mxu0 0.0
      %2303 = vmatpush1.msra.mxu0 0.0
      %2304 = vmatprep.subr.mxu0 0.0
      %2305 = vmatpush1.msra.mxu0 0.0
      %2306 = vmatprep.subr.mxu0 0.0
      %2307 = vmatpush1.msra.mxu0 0.0
      %2308 = vmatprep.subr.mxu0 0.0
      %2309 = vmatpush1.msra.mxu0 0.0
      %2310 = vmatprep.subr.mxu0 0.0
      %2311 = vmatpush1.msra.mxu0 0.0
      %2312 = vmatprep.subr.mxu0 0.0
      %2313 = vmatpush1.msra.mxu0 0.0
      %2314 = vmatprep.subr.mxu0 0.0
      %2315 = vmatpush1.msra.mxu0 0.0
      %2316 = vmatprep.subr.mxu0 0.0
      %2317 = vmatpush1.msra.mxu0 0.0
      %2318 = vmatprep.subr.mxu0 0.0
      %2319 = vmatpush1.msra.mxu0 0.0
      %2320 = vmatprep.subr.mxu0 0.0
      %2321 = vmatpush1.msra.mxu0 0.0
      %2322 = vmatprep.subr.mxu0 0.0
      %2323 = vmatpush1.msra.mxu0 0.0
      %2324 = vmatprep.subr.mxu0 0.0
      %2325 = vmatpush1.msra.mxu0 0.0
      %2326 = vmatprep.subr.mxu0 0.0
      %2327 = vmatpush1.msra.mxu0 %v2294
      %2328 = vmatprep.subr.mxu0 0.0
      %2329 = vmatpush2.msra.mxu0 0.0
      %2330 = vmatprep.subr.mxu0 0.0
      %2331 = vmatpush2.msra.mxu0 0.0
      %2332 = vmatprep.subr.mxu0 0.0
      %2333 = vmatpush2.msra.mxu0 0.0
      %2334 = vmatprep.subr.mxu0 0.0
      %2335 = vmatpush2.msra.mxu0 0.0
      %2336 = vmatprep.subr.mxu0 0.0
      %2337 = vmatpush2.msra.mxu0 0.0
      %2338 = vmatprep.subr.mxu0 0.0
      %2339 = vmatpush2.msra.mxu0 0.0
      %2340 = vmatprep.subr.mxu0 0.0
      %2341 = vmatpush2.msra.mxu0 0.0
      %2342 = vmatprep.subr.mxu0 0.0
      %2343 = vmatpush2.msra.mxu0 0.0
      %2344 = vmatprep.subr.mxu0 0.0
      %2345 = vmatpush2.msra.mxu0 0.0
      %2346 = vmatprep.subr.mxu0 0.0
      %2347 = vmatpush2.msra.mxu0 0.0
      %2348 = vmatprep.subr.mxu0 0.0
      %2349 = vmatpush2.msra.mxu0 0.0
      %2350 = vmatprep.subr.mxu0 0.0
      %2351 = vmatpush2.msra.mxu0 0.0
      %2352 = vmatprep.subr.mxu0 0.0
      %2353 = vmatpush2.msra.mxu0 0.0
      %2354 = vmatprep.subr.mxu0 0.0
      %2355 = vmatpush2.msra.mxu0 0.0
      %2356 = vmatprep.subr.mxu0 0.0
      %2357 = vmatpush2.msra.mxu0 0.0
      %2358 = vmatprep.subr.mxu0 0.0
      %2359 = vmatpush2.msra.mxu0 0.0
      %2360 = vmatprep.mubr.f32.mxu0 0.0
      %2361 = vmatmul.mubr.f32.gmra.mxu0 %v2292
      %v2362 = vpop.f32.mrf.mxu0
      %v2363 = vadd.f32 0.0, %v2362
      %v2364 = vpop.f32.mrf.mxu0
      %2365 = vdwg.mxu0
      %2366 = vrot.lane.b32.xlu0 %v1863, 104
      %v2367 = vpop.permute.xlu0 %2366
      %2368 = vrot.lane.b32.xlu0 %v1863, 72
      %v2369 = vpop.permute.xlu0 %2368
      %v2370 = vsel %vm767, %v2367, 0
      %v2372 = vsel %vm767, %v2369, 0
      %2374 = vmatprep.subr.mxu0 0.0
      %2375 = vmatpush1.xpose.msra.mxu0 0.0
      %2376 = vmatprep.subr.mxu0 0.0
      %2377 = vmatpush1.xpose.msra.mxu0 0.0
      %2378 = vmatprep.subr.mxu0 0.0
      %2379 = vmatpush1.xpose.msra.mxu0 0.0
      %2380 = vmatprep.subr.mxu0 0.0
      %2381 = vmatpush1.xpose.msra.mxu0 0.0
      %2382 = vmatprep.subr.mxu0 0.0
      %2383 = vmatpush1.xpose.msra.mxu0 0.0
      %2384 = vmatprep.subr.mxu0 0.0
      %2385 = vmatpush1.xpose.msra.mxu0 0.0
      %2386 = vmatprep.subr.mxu0 0.0
      %2387 = vmatpush1.xpose.msra.mxu0 0.0
      %2388 = vmatprep.subr.mxu0 0.0
      %2389 = vmatpush1.xpose.msra.mxu0 0.0
      %2390 = vmatprep.subr.mxu0 0.0
      %2391 = vmatpush1.xpose.msra.mxu0 0.0
      %2392 = vmatprep.subr.mxu0 0.0
      %2393 = vmatpush1.xpose.msra.mxu0 0.0
      %2394 = vmatprep.subr.mxu0 0.0
      %2395 = vmatpush1.xpose.msra.mxu0 0.0
      %2396 = vmatprep.subr.mxu0 0.0
      %2397 = vmatpush1.xpose.msra.mxu0 0.0
      %2398 = vmatprep.subr.mxu0 0.0
      %2399 = vmatpush1.xpose.msra.mxu0 0.0
      %2400 = vmatprep.subr.mxu0 0.0
      %2401 = vmatpush1.xpose.msra.mxu0 0.0
      %2402 = vmatprep.subr.mxu0 0.0
      %2403 = vmatpush1.xpose.msra.mxu0 0.0
      %2404 = vmatprep.subr.mxu0 0.0
      %2405 = vmatpush1.xpose.msra.mxu0 %v2372
      %2406 = vmatprep.subr.mxu0 0.0
      %2407 = vmatpush2.xpose.msra.mxu0 0.0
      %2408 = vmatprep.subr.mxu0 0.0
      %2409 = vmatpush2.xpose.msra.mxu0 0.0
      %2410 = vmatprep.subr.mxu0 0.0
      %2411 = vmatpush2.xpose.msra.mxu0 0.0
      %2412 = vmatprep.subr.mxu0 0.0
      %2413 = vmatpush2.xpose.msra.mxu0 0.0
      %2414 = vmatprep.subr.mxu0 0.0
      %2415 = vmatpush2.xpose.msra.mxu0 0.0
      %2416 = vmatprep.subr.mxu0 0.0
      %2417 = vmatpush2.xpose.msra.mxu0 0.0
      %2418 = vmatprep.subr.mxu0 0.0
      %2419 = vmatpush2.xpose.msra.mxu0 0.0
      %2420 = vmatprep.subr.mxu0 0.0
      %2421 = vmatpush2.xpose.msra.mxu0 0.0
      %2422 = vmatprep.subr.mxu0 0.0
      %2423 = vmatpush2.xpose.msra.mxu0 0.0
      %2424 = vmatprep.subr.mxu0 0.0
      %2425 = vmatpush2.xpose.msra.mxu0 0.0
      %2426 = vmatprep.subr.mxu0 0.0
      %2427 = vmatpush2.xpose.msra.mxu0 0.0
      %2428 = vmatprep.subr.mxu0 0.0
      %2429 = vmatpush2.xpose.msra.mxu0 0.0
      %2430 = vmatprep.subr.mxu0 0.0
      %2431 = vmatpush2.xpose.msra.mxu0 0.0
      %2432 = vmatprep.subr.mxu0 0.0
      %2433 = vmatpush2.xpose.msra.mxu0 0.0
      %2434 = vmatprep.subr.mxu0 0.0
      %2435 = vmatpush2.xpose.msra.mxu0 0.0
      %2436 = vmatprep.subr.mxu0 0.0
      %2437 = vmatpush2.xpose.msra.mxu0 0.0
      %2438 = vmatprep.mubr.f32.mxu0 0.0
      %2439 = vmatmul.mubr.f32.gmra.mxu0 %v2370
      %v2440 = vpop.f32.mrf.mxu0
      %v2441 = vadd.f32 0.0, %v2440
      %v2442 = vpop.f32.mrf.mxu0
      %2443 = vdwg.mxu0
      %v2444 = vmul.f32 %v2441, 0.35355338
      %v2445 = vsel %vm843, %v2444, -inf
      %2446 = vmax.xlane.f32.xlu0 %v2445
      %v2447 = vpop.xlane.xlu0 %2446
      %v2448 = vsub.f32 %v2444, %v2447
      %v2449 = vmul.f32 %v2448, 1.442695
      %v2450 = vpow.pop %v2449
      %v2451 = vsel %vm843, %v2450, 0.0
      %2452 = vadd.xlane.f32.xlu0 %v2451
      %v2453 = vpop.xlane.xlu0 %2452
      %v2454 = vrcp.pop %v2453
      %v2455 = vmul.f32 %v2450, %v2454
      %2456 = vrot.lane.b32.xlu0 %v1863, 40
      %v2457 = vpop.permute.xlu0 %2456
      %v2459 = vsel %vm857, %v2455, 0
      %v2461 = vsel %vm861, %v2457, 0
      %2463 = vmatprep.subr.mxu0 0.0
      %2464 = vmatpush1.msra.mxu0 0.0
      %2465 = vmatprep.subr.mxu0 0.0
      %2466 = vmatpush1.msra.mxu0 0.0
      %2467 = vmatprep.subr.mxu0 0.0
      %2468 = vmatpush1.msra.mxu0 0.0
      %2469 = vmatprep.subr.mxu0 0.0
      %2470 = vmatpush1.msra.mxu0 0.0
      %2471 = vmatprep.subr.mxu0 0.0
      %2472 = vmatpush1.msra.mxu0 0.0
      %2473 = vmatprep.subr.mxu0 0.0
      %2474 = vmatpush1.msra.mxu0 0.0
      %2475 = vmatprep.subr.mxu0 0.0
      %2476 = vmatpush1.msra.mxu0 0.0
      %2477 = vmatprep.subr.mxu0 0.0
      %2478 = vmatpush1.msra.mxu0 0.0
      %2479 = vmatprep.subr.mxu0 0.0
      %2480 = vmatpush1.msra.mxu0 0.0
      %2481 = vmatprep.subr.mxu0 0.0
      %2482 = vmatpush1.msra.mxu0 0.0
      %2483 = vmatprep.subr.mxu0 0.0
      %2484 = vmatpush1.msra.mxu0 0.0
      %2485 = vmatprep.subr.mxu0 0.0
      %2486 = vmatpush1.msra.mxu0 0.0
      %2487 = vmatprep.subr.mxu0 0.0
      %2488 = vmatpush1.msra.mxu0 0.0
      %2489 = vmatprep.subr.mxu0 0.0
      %2490 = vmatpush1.msra.mxu0 0.0
      %2491 = vmatprep.subr.mxu0 0.0
      %2492 = vmatpush1.msra.mxu0 0.0
      %2493 = vmatprep.subr.mxu0 0.0
      %2494 = vmatpush1.msra.mxu0 %v2461
      %2495 = vmatprep.subr.mxu0 0.0
      %2496 = vmatpush2.msra.mxu0 0.0
      %2497 = vmatprep.subr.mxu0 0.0
      %2498 = vmatpush2.msra.mxu0 0.0
      %2499 = vmatprep.subr.mxu0 0.0
      %2500 = vmatpush2.msra.mxu0 0.0
      %2501 = vmatprep.subr.mxu0 0.0
      %2502 = vmatpush2.msra.mxu0 0.0
      %2503 = vmatprep.subr.mxu0 0.0
      %2504 = vmatpush2.msra.mxu0 0.0
      %2505 = vmatprep.subr.mxu0 0.0
      %2506 = vmatpush2.msra.mxu0 0.0
      %2507 = vmatprep.subr.mxu0 0.0
      %2508 = vmatpush2.msra.mxu0 0.0
      %2509 = vmatprep.subr.mxu0 0.0
      %2510 = vmatpush2.msra.mxu0 0.0
      %2511 = vmatprep.subr.mxu0 0.0
      %2512 = vmatpush2.msra.mxu0 0.0
      %2513 = vmatprep.subr.mxu0 0.0
      %2514 = vmatpush2.msra.mxu0 0.0
      %2515 = vmatprep.subr.mxu0 0.0
      %2516 = vmatpush2.msra.mxu0 0.0
      %2517 = vmatprep.subr.mxu0 0.0
      %2518 = vmatpush2.msra.mxu0 0.0
      %2519 = vmatprep.subr.mxu0 0.0
      %2520 = vmatpush2.msra.mxu0 0.0
      %2521 = vmatprep.subr.mxu0 0.0
      %2522 = vmatpush2.msra.mxu0 0.0
      %2523 = vmatprep.subr.mxu0 0.0
      %2524 = vmatpush2.msra.mxu0 0.0
      %2525 = vmatprep.subr.mxu0 0.0
      %2526 = vmatpush2.msra.mxu0 0.0
      %2527 = vmatprep.mubr.f32.mxu0 0.0
      %2528 = vmatmul.mubr.f32.gmra.mxu0 %v2459
      %v2529 = vpop.f32.mrf.mxu0
      %v2530 = vadd.f32 0.0, %v2529
      %v2531 = vpop.f32.mrf.mxu0
      %2532 = vdwg.mxu0
      %2534 = vrot.lane.b32.xlu0 %v2196, 8
      %v2535 = vpop.permute.xlu0 %2534
      %2538 = vrot.lane.b32.xlu0 %v2363, 16
      %v2539 = vpop.permute.xlu0 %2538
      %2542 = vrot.lane.b32.xlu0 %v2530, 24
      %v2543 = vpop.permute.xlu0 %2542
      %v2545 = vsel %vm767, %v2029, %v2535
      %v2546 = vsel %vm1448, %v2545, %v2539
      %v2547 = vsel %vm1450, %v2546, %v2543
      %s2548 = scalar_lea.vmem %s7, 32
      %v2549 = vld [vmem:[%s2548] sm:$0xff]
      %v2550 = vld [vmem:[%s2548 + $0x8] sm:$0xff]
      %v2551 = vld [vmem:[%s2548 + $0x10] sm:$0xff]
      %v2552 = vld [vmem:[%s2548 + $0x18] sm:$0xff]
      %s2553 = scalar_lea.vmem %s8, 1
      %v2554 = vld [vmem:[%s2553] sm:$0x1]
      %v2556 = vlaneseq
      %v2557 = vshrl.u32 %v2556, 7
      %v2558 = vsub.s32 0, %v2557
      %v2559 = vrot.slane %v2554, %v2558
      %v2562 = vsel %vm690, %v2547, 0
      %2564 = vmatprep.subr.mxu0 0.0
      %2565 = vmatpush1.msra.mxu0 0.0
      %2566 = vmatprep.subr.mxu0 0.0
      %2567 = vmatpush1.msra.mxu0 0.0
      %2568 = vmatprep.subr.mxu0 0.0
      %2569 = vmatpush1.msra.mxu0 0.0
      %2570 = vmatprep.subr.mxu0 0.0
      %2571 = vmatpush1.msra.mxu0 0.0
      %2572 = vmatprep.subr.mxu0 0.0
      %2573 = vmatpush1.msra.mxu0 0.0
      %2574 = vmatprep.subr.mxu0 0.0
      %2575 = vmatpush1.msra.mxu0 0.0
      %2576 = vmatprep.subr.mxu0 0.0
      %2577 = vmatpush1.msra.mxu0 0.0
      %2578 = vmatprep.subr.mxu0 0.0
      %2579 = vmatpush1.msra.mxu0 0.0
      %2580 = vmatprep.subr.mxu0 0.0
      %2581 = vmatpush1.msra.mxu0 0.0
      %2582 = vmatprep.subr.mxu0 0.0
      %2583 = vmatpush1.msra.mxu0 0.0
      %2584 = vmatprep.subr.mxu0 0.0
      %2585 = vmatpush1.msra.mxu0 0.0
      %2586 = vmatprep.subr.mxu0 0.0
      %2587 = vmatpush1.msra.mxu0 0.0
      %2588 = vmatprep.subr.mxu0 0.0
      %2589 = vmatpush1.msra.mxu0 %v2552
      %2590 = vmatprep.subr.mxu0 0.0
      %2591 = vmatpush1.msra.mxu0 %v2551
      %2592 = vmatprep.subr.mxu0 0.0
      %2593 = vmatpush1.msra.mxu0 %v2550
      %2594 = vmatprep.subr.mxu0 0.0
      %2595 = vmatpush1.msra.mxu0 %v2549
      %2596 = vmatprep.subr.mxu0 0.0
      %2597 = vmatpush2.msra.mxu0 0.0
      %2598 = vmatprep.subr.mxu0 0.0
      %2599 = vmatpush2.msra.mxu0 0.0
      %2600 = vmatprep.subr.mxu0 0.0
      %2601 = vmatpush2.msra.mxu0 0.0
      %2602 = vmatprep.subr.mxu0 0.0
      %2603 = vmatpush2.msra.mxu0 0.0
      %2604 = vmatprep.subr.mxu0 0.0
      %2605 = vmatpush2.msra.mxu0 0.0
      %2606 = vmatprep.subr.mxu0 0.0
      %2607 = vmatpush2.msra.mxu0 0.0
      %2608 = vmatprep.subr.mxu0 0.0
      %2609 = vmatpush2.msra.mxu0 0.0
      %2610 = vmatprep.subr.mxu0 0.0
      %2611 = vmatpush2.msra.mxu0 0.0
      %2612 = vmatprep.subr.mxu0 0.0
      %2613 = vmatpush2.msra.mxu0 0.0
      %2614 = vmatprep.subr.mxu0 0.0
      %2615 = vmatpush2.msra.mxu0 0.0
      %2616 = vmatprep.subr.mxu0 0.0
      %2617 = vmatpush2.msra.mxu0 0.0
      %2618 = vmatprep.subr.mxu0 0.0
      %2619 = vmatpush2.msra.mxu0 0.0
      %2620 = vmatprep.subr.mxu0 0.0
      %2621 = vmatpush2.msra.mxu0 0.0
      %2622 = vmatprep.subr.mxu0 0.0
      %2623 = vmatpush2.msra.mxu0 0.0
      %2624 = vmatprep.subr.mxu0 0.0
      %2625 = vmatpush2.msra.mxu0 0.0
      %2626 = vmatprep.subr.mxu0 0.0
      %2627 = vmatpush2.msra.mxu0 0.0
      %2628 = vmatprep.mubr.f32.mxu0 0.0
      %2629 = vmatmul.mubr.f32.gmra.mxu0 %v2562
      %v2630 = vpop.f32.mrf.mxu0
      %v2631 = vadd.f32 %v2559, %v2630
      %v2632 = vpop.f32.mrf.mxu0
      %2633 = vdwg.mxu0
      %v2634 = vadd.f32 %v1748, %v2631
      %s2635 = scalar_lea.vmem %s9, 1
      %v2636 = vld [vmem:[%s2635] sm:$0x1]
      %s2637 = scalar_lea.vmem %s10, 1
      %v2638 = vld [vmem:[%s2637] sm:$0x1]
      %v2639 = vsel %vm650, %v2634, 0.0
      %2640 = vadd.xlane.f32.xlu0 %v2639
      %v2641 = vpop.xlane.xlu0 %2640
      %v2642 = vmul.f32 %v2641, %v654
      %v2643 = vsub.f32 %v2634, %v2642
      %v2644 = vmul.f32 %v2643, %v2643
      %v2645 = vsel %vm650, %v2644, 0.0
      %2646 = vadd.xlane.f32.xlu0 %v2645
      %v2647 = vpop.xlane.xlu0 %2646
      %v2648 = vmul.f32 %v2647, %v654
      %v2649 = vadd.f32 %v2648, 1e-06
      %v2650 = vrsqrt.pop %v2649
      %v2651 = vmul.f32 %v2643, %v2650
      %v2653 = vlaneseq
      %v2654 = vshrl.u32 %v2653, 7
      %v2655 = vsub.s32 0, %v2654
      %v2656 = vrot.slane %v2636, %v2655
      %v2658 = vmul.f32 %v2651, %v2656
      %v2660 = vlaneseq
      %v2661 = vshrl.u32 %v2660, 7
      %v2662 = vsub.s32 0, %v2661
      %v2663 = vrot.slane %v2638, %v2662
      %v2665 = vadd.f32 %v2658, %v2663
      %s2666 = scalar_lea.vmem %s11, 32
      %v2667 = vld [vmem:[%s2666] sm:$0xff]
      %v2668 = vld [vmem:[%s2666 + $0x8] sm:$0xff]
      %v2669 = vld [vmem:[%s2666 + $0x10] sm:$0xff]
      %v2670 = vld [vmem:[%s2666 + $0x18] sm:$0xff]
      %s2671 = scalar_lea.vmem %s12, 1
      %v2672 = vld [vmem:[%s2671] sm:$0x1]
      %v2674 = vlaneseq
      %v2675 = vshrl.u32 %v2674, 7
      %v2676 = vsub.s32 0, %v2675
      %v2677 = vrot.slane %v2672, %v2676
      %v2680 = vsel %vm690, %v2665, 0
      %2682 = vmatprep.subr.mxu0 0.0
      %2683 = vmatpush1.msra.mxu0 0.0
      %2684 = vmatprep.subr.mxu0 0.0
      %2685 = vmatpush1.msra.mxu0 0.0
      %2686 = vmatprep.subr.mxu0 0.0
      %2687 = vmatpush1.msra.mxu0 0.0
      %2688 = vmatprep.subr.mxu0 0.0
      %2689 = vmatpush1.msra.mxu0 0.0
      %2690 = vmatprep.subr.mxu0 0.0
      %2691 = vmatpush1.msra.mxu0 0.0
      %2692 = vmatprep.subr.mxu0 0.0
      %2693 = vmatpush1.msra.mxu0 0.0
      %2694 = vmatprep.subr.mxu0 0.0
      %2695 = vmatpush1.msra.mxu0 0.0
      %2696 = vmatprep.subr.mxu0 0.0
      %2697 = vmatpush1.msra.mxu0 0.0
      %2698 = vmatprep.subr.mxu0 0.0
      %2699 = vmatpush1.msra.mxu0 0.0
      %2700 = vmatprep.subr.mxu0 0.0
      %2701 = vmatpush1.msra.mxu0 0.0
      %2702 = vmatprep.subr.mxu0 0.0
      %2703 = vmatpush1.msra.mxu0 0.0
      %2704 = vmatprep.subr.mxu0 0.0
      %2705 = vmatpush1.msra.mxu0 0.0
      %2706 = vmatprep.subr.mxu0 0.0
      %2707 = vmatpush1.msra.mxu0 %v2670
      %2708 = vmatprep.subr.mxu0 0.0
      %2709 = vmatpush1.msra.mxu0 %v2669
      %2710 = vmatprep.subr.mxu0 0.0
      %2711 = vmatpush1.msra.mxu0 %v2668
      %2712 = vmatprep.subr.mxu0 0.0
      %2713 = vmatpush1.msra.mxu0 %v2667
      %2714 = vmatprep.subr.mxu0 0.0
      %2715 = vmatpush2.msra.mxu0 0.0
      %2716 = vmatprep.subr.mxu0 0.0
      %2717 = vmatpush2.msra.mxu0 0.0
      %2718 = vmatprep.subr.mxu0 0.0
      %2719 = vmatpush2.msra.mxu0 0.0
      %2720 = vmatprep.subr.mxu0 0.0
      %2721 = vmatpush2.msra.mxu0 0.0
      %2722 = vmatprep.subr.mxu0 0.0
      %2723 = vmatpush2.msra.mxu0 0.0
      %2724 = vmatprep.subr.mxu0 0.0
      %2725 = vmatpush2.msra.mxu0 0.0
      %2726 = vmatprep.subr.mxu0 0.0
      %2727 = vmatpush2.msra.mxu0 0.0
      %2728 = vmatprep.subr.mxu0 0.0
      %2729 = vmatpush2.msra.mxu0 0.0
      %2730 = vmatprep.subr.mxu0 0.0
      %2731 = vmatpush2.msra.mxu0 0.0
      %2732 = vmatprep.subr.mxu0 0.0
      %2733 = vmatpush2.msra.mxu0 0.0
      %2734 = vmatprep.subr.mxu0 0.0
      %2735 = vmatpush2.msra.mxu0 0.0
      %2736 = vmatprep.subr.mxu0 0.0
      %2737 = vmatpush2.msra.mxu0 0.0
      %2738 = vmatprep.subr.mxu0 0.0
      %2739 = vmatpush2.msra.mxu0 0.0
      %2740 = vmatprep.subr.mxu0 0.0
      %2741 = vmatpush2.msra.mxu0 0.0
      %2742 = vmatprep.subr.mxu0 0.0
      %2743 = vmatpush2.msra.mxu0 0.0
      %2744 = vmatprep.subr.mxu0 0.0
      %2745 = vmatpush2.msra.mxu0 0.0
      %2746 = vmatprep.mubr.f32.mxu0 0.0
      %2747 = vmatmul.mubr.f32.gmra.mxu0 %v2680
      %v2748 = vpop.f32.mrf.mxu0
      %v2749 = vadd.f32 %v2677, %v2748
      %v2750 = vpop.f32.mrf.mxu0
      %2751 = vdwg.mxu0
      %v2752 = vmul.f32 %v2749, 0.5
      %v2753 = vmul.f32 %v2749, 0.70710677
      %v2754 = verf.f32.pop %v2753
      %v2755 = vadd.f32 %v2754, 1.0
      %v2756 = vmul.f32 %v2752, %v2755
      %s2757 = scalar_lea.vmem %s13, 128
      %v2758 = vld [vmem:[%s2757] sm:$0xff]
      %v2759 = vld [vmem:[%s2757 + $0x8] sm:$0xff]
      %v2760 = vld [vmem:[%s2757 + $0x10] sm:$0xff]
      %v2761 = vld [vmem:[%s2757 + $0x18] sm:$0xff]
      %v2762 = vld [vmem:[%s2757 + $0x20] sm:$0xff]
      %v2763 = vld [vmem:[%s2757 + $0x28] sm:$0xff]
      %v2764 = vld [vmem:[%s2757 + $0x30] sm:$0xff]
      %v2765 = vld [vmem:[%s2757 + $0x38] sm:$0xff]
      %v2766 = vld [vmem:[%s2757 + $0x40] sm:$0xff]
      %v2767 = vld [vmem:[%s2757 + $0x48] sm:$0xff]
      %v2768 = vld [vmem:[%s2757 + $0x50] sm:$0xff]
      %v2769 = vld [vmem:[%s2757 + $0x58] sm:$0xff]
      %v2770 = vld [vmem:[%s2757 + $0x60] sm:$0xff]
      %v2771 = vld [vmem:[%s2757 + $0x68] sm:$0xff]
      %v2772 = vld [vmem:[%s2757 + $0x70] sm:$0xff]
      %v2773 = vld [vmem:[%s2757 + $0x78] sm:$0xff]
      %s2774 = scalar_lea.vmem %s14, 1
      %v2775 = vld [vmem:[%s2774] sm:$0x1]
      %v2777 = vlaneseq
      %v2778 = vshrl.u32 %v2777, 7
      %v2779 = vsub.s32 0, %v2778
      %v2780 = vrot.slane %v2775, %v2779
      %2782 = vmatprep.subr.mxu0 0.0
      %2783 = vmatpush1.msra.mxu0 %v2773
      %2784 = vmatprep.subr.mxu0 0.0
      %2785 = vmatpush1.msra.mxu0 %v2772
      %2786 = vmatprep.subr.mxu0 0.0
      %2787 = vmatpush1.msra.mxu0 %v2771
      %2788 = vmatprep.subr.mxu0 0.0
      %2789 = vmatpush1.msra.mxu0 %v2770
      %2790 = vmatprep.subr.mxu0 0.0
      %2791 = vmatpush1.msra.mxu0 %v2769
      %2792 = vmatprep.subr.mxu0 0.0
      %2793 = vmatpush1.msra.mxu0 %v2768
      %2794 = vmatprep.subr.mxu0 0.0
      %2795 = vmatpush1.msra.mxu0 %v2767
      %2796 = vmatprep.subr.mxu0 0.0
      %2797 = vmatpush1.msra.mxu0 %v2766
      %2798 = vmatprep.subr.mxu0 0.0
      %2799 = vmatpush1.msra.mxu0 %v2765
      %2800 = vmatprep.subr.mxu0 0.0
      %2801 = vmatpush1.msra.mxu0 %v2764
      %2802 = vmatprep.subr.mxu0 0.0
      %2803 = vmatpush1.msra.mxu0 %v2763
      %2804 = vmatprep.subr.mxu0 0.0
      %2805 = vmatpush1.msra.mxu0 %v2762
      %2806 = vmatprep.subr.mxu0 0.0
      %2807 = vmatpush1.msra.mxu0 %v2761
      %2808 = vmatprep.subr.mxu0 0.0
      %2809 = vmatpush1.msra.mxu0 %v2760
      %2810 = vmatprep.subr.mxu0 0.0
      %2811 = vmatpush1.msra.mxu0 %v2759
      %2812 = vmatprep.subr.mxu0 0.0
      %2813 = vmatpush1.msra.mxu0 %v2758
      %2814 = vmatprep.subr.mxu0 0.0
      %2815 = vmatpush2.msra.mxu0 0.0
      %2816 = vmatprep.subr.mxu0 0.0
      %2817 = vmatpush2.msra.mxu0 0.0
      %2818 = vmatprep.subr.mxu0 0.0
      %2819 = vmatpush2.msra.mxu0 0.0
      %2820 = vmatprep.subr.mxu0 0.0
      %2821 = vmatpush2.msra.mxu0 0.0
      %2822 = vmatprep.subr.mxu0 0.0
      %2823 = vmatpush2.msra.mxu0 0.0
      %2824 = vmatprep.subr.mxu0 0.0
      %2825 = vmatpush2.msra.mxu0 0.0
      %2826 = vmatprep.subr.mxu0 0.0
      %2827 = vmatpush2.msra.mxu0 0.0
      %2828 = vmatprep.subr.mxu0 0.0
      %2829 = vmatpush2.msra.mxu0 0.0
      %2830 = vmatprep.subr.mxu0 0.0
      %2831 = vmatpush2.msra.mxu0 0.0
      %2832 = vmatprep.subr.mxu0 0.0
      %2833 = vmatpush2.msra.mxu0 0.0
      %2834 = vmatprep.subr.mxu0 0.0
      %2835 = vmatpush2.msra.mxu0 0.0
      %2836 = vmatprep.subr.mxu0 0.0
      %2837 = vmatpush2.msra.mxu0 0.0
      %2838 = vmatprep.subr.mxu0 0.0
      %2839 = vmatpush2.msra.mxu0 0.0
      %2840 = vmatprep.subr.mxu0 0.0
      %2841 = vmatpush2.msra.mxu0 0.0
      %2842 = vmatprep.subr.mxu0 0.0
      %2843 = vmatpush2.msra.mxu0 0.0
      %2844 = vmatprep.subr.mxu0 0.0
      %2845 = vmatpush2.msra.mxu0 0.0
      %2846 = vmatprep.mubr.f32.mxu0 0.0
      %2847 = vmatmul.mubr.f32.gmra.mxu0 %v2756
      %v2848 = vpop.f32.mrf.mxu0
      %v2849 = vadd.f32 %v2780, %v2848
      %v2850 = vpop.f32.mrf.mxu0
      %2851 = vdwg.mxu0
      %v2852 = vadd.f32 %v2634, %v2849
      %v2853 = vld [vmem:[%s15] sm:$0x1]
      %v2854 = vld [vmem:[%s16] sm:$0x1]
      %v2855 = vsel %vm650, %v2852, 0.0
      %2856 = vadd.xlane.f32.xlu0 %v2855
      %v2857 = vpop.xlane.xlu0 %2856
      %v2858 = vmul.f32 %v2857, %v654
      %v2859 = vsub.f32 %v2852, %v2858
      %v2860 = vmul.f32 %v2859, %v2859
      %v2861 = vsel %vm650, %v2860, 0.0
      %2862 = vadd.xlane.f32.xlu0 %v2861
      %v2863 = vpop.xlane.xlu0 %2862
      %v2864 = vmul.f32 %v2863, %v654
      %v2865 = vadd.f32 %v2864, 1e-06
      %v2866 = vrsqrt.pop %v2865
      %v2867 = vmul.f32 %v2859, %v2866
      %v2869 = vlaneseq
      %v2870 = vshrl.u32 %v2869, 7
      %v2871 = vsub.s32 0, %v2870
      %v2872 = vrot.slane %v2853, %v2871
      %v2874 = vmul.f32 %v2867, %v2872
      %v2876 = vlaneseq
      %v2877 = vshrl.u32 %v2876, 7
      %v2878 = vsub.s32 0, %v2877
      %v2879 = vrot.slane %v2854, %v2878
      %v2881 = vadd.f32 %v2874, %v2879
      %2882 = vst.msk [vmem:[%s546] sm:$0x1f] %vm650, %v2881
      %p2883 = scmp.lt.s32.totalorder %s28, 1
      %s2884 = scalar_select %p2883, %s28, 1
      %s2885 = smul.addr %s2884, 8
      %s2886 = scalar_lea.vmem %s17, %s2885
      // Predicated region
      $region89: #{vit_encoder_forward.1} parent=87 // pred_check
        %p2887 = pneg %p408
      $region90: #{vit_encoder_forward.1} parent=87 // pred_check_branch
        %2889 = sbr.rel (%p2887) target = $region92
      $region91: #{vit_encoder_forward.1} parent=87 // pred_region
        _
      $region92: #{vit_encoder_forward.1} parent=87 // pred_fallthru
        _
    $region88: #{vit_encoder_forward.1} parent=5 // pred_fallthru
      _
    %p2890 = scmp.le.s32.totalorder 2, %s23
    // Predicated region
    $region93: #{vit_encoder_forward.1} parent=5 // pred_check
      %p2891 = pneg %p2890
    $region94: #{vit_encoder_forward.1} parent=5 // pred_check_branch
      %2893 = sbr.rel (%p2891) target = $region96
    $region95: #{vit_encoder_forward.1} parent=5 // pred_region
      %s2894 = ssub.s32 %s23, 2
      // Predicated region
      $region97: #{vit_encoder_forward.1} parent=95 // pred_check
        %p2895 = pneg %p414
      $region98: #{vit_encoder_forward.1} parent=95 // pred_check_branch
        %2897 = sbr.rel (%p2895) target = $region100
      $region99: #{vit_encoder_forward.1} parent=95 // pred_region
        %p2898 = scmp.lt.s32.totalorder %s29, 1
        %s2899 = scalar_select %p2898, %s29, 1
        %s2900 = smul.addr %s2899, 8
        %s2901 = scalar_lea.vmem %s17, %s2900
      $region100: #{vit_encoder_forward.1} parent=95 // pred_fallthru
        _
    $region96: #{vit_encoder_forward.1} parent=5 // pred_fallthru
      _
  $region6: #{vit_encoder_forward.1} parent=0 // loop_footer
    %s27 = sadd.s32 1, %s23
  $region7: #{vit_encoder_forward.1} parent=0 // loop_footer_branch
    %22 = sbr.rel target = $region3
  $region8: #{vit_encoder_forward.1} parent=0 // loop_exit
    _

</llo_original>
